<compile_context>
chip_gen: v5e
topology: v5e:2x2
jax: 0.10.0
libtpu: 0.0.40
codegen_flags: <defaults>
</compile_context>

<pallas_src>
import functools

import jax
import jax.numpy as jnp
from jax.experimental import pallas as pl
from jax.experimental.pallas import tpu as pltpu

LANES = 128                      # lane width: pad all channel dims to this
VMEM_LIMIT = 32 * 1024 * 1024    # safe on v5e/v6e/v7x; raise at realistic VGG sizes


def _round_up(x, m):
    return (x + m - 1) // m * m


def _pad_last(a, size):
    pad = size - a.shape[-1]
    if pad == 0:
        return a
    widths = [(0, 0)] * (a.ndim - 1) + [(0, pad)]
    return jnp.pad(a, widths)


def _prep_weight(w, cin_p, cout_p):
    """PyTorch conv weight (Cout, Cin, 3, 3) -> (9, Cin_p, Cout_p) bf16, (dy,dx)-major."""
    cout, cin, kh, kw = w.shape
    wm = jnp.transpose(w, (2, 3, 1, 0)).reshape(kh * kw, cin, cout)
    wm = jnp.pad(wm, ((0, 0), (0, cin_p - cin), (0, cout_p - cout)))
    return wm.astype(jnp.bfloat16)


# ---------------------------------------------------------------------------
# Kernel 1: (optional fused BN+ReLU on the input) -> 3x3 conv -> per-channel
#           sum / sum-of-squares accumulation.  Grid = (N,), one image per step.
# ---------------------------------------------------------------------------
def _conv3x3_stats_kernel(*refs, H, W, fuse_bn_relu):
    if fuse_bn_relu:
        x_ref, w_ref, scale_ref, shift_ref, y_ref, stats_ref, xpad_ref = refs
    else:
        x_ref, w_ref, y_ref, stats_ref, xpad_ref = refs
        scale_ref = shift_ref = None

    n = pl.program_id(0)

    @pl.when(n == 0)
    def _init():
        # Zero halo (borders stay zero for every grid step) + zero stats accumulator.
        xpad_ref[...] = jnp.zeros(xpad_ref.shape, xpad_ref.dtype)
        stats_ref[...] = jnp.zeros(stats_ref.shape, stats_ref.dtype)

    x = x_ref[0].astype(jnp.float32)                      # (H, W, Cin_p)
    if fuse_bn_relu:
        # Fused BN-apply + ReLU of the previous stage, in f32.
        x = jnp.maximum(x * scale_ref[...] + shift_ref[...], 0.0)
    xpad_ref[1:H + 1, 1:W + 1, :] = x                     # interior only; halo is 0

    cout_p = y_ref.shape[-1]
    acc = jnp.zeros((H * W, cout_p), jnp.float32)
    for dy in range(3):                                   # 9 shifted bf16 MXU matmuls
        for dx in range(3):
            patch = xpad_ref[dy:dy + H, dx:dx + W, :]
            patch = patch.reshape(H * W, patch.shape[-1]).astype(jnp.bfloat16)
            acc = acc + jnp.dot(patch, w_ref[dy * 3 + dx],
                                preferred_element_type=jnp.float32)

    y_ref[...] = acc.reshape(1, H, W, cout_p)

    # Single-pass BN statistics (f32): per-channel sum and sum of squares.
    stats_ref[0:1, :] += jnp.sum(acc, axis=0, keepdims=True)
    stats_ref[1:2, :] += jnp.sum(acc * acc, axis=0, keepdims=True)


def _conv3x3_stats(x_nhwc, wmat, scale, shift, *, H, W):
    """x_nhwc: (N, H, W, Cin_p); wmat: (9, Cin_p, Cout_p) bf16.

    Returns (pre-BN conv output (N, H, W, Cout_p) f32, stats (2, Cout_p) f32).
    If scale/shift are given, BN-apply + ReLU of the previous stage is fused on the
    input before the convolution.
    """
    N = x_nhwc.shape[0]
    cin_p = x_nhwc.shape[-1]
    cout_p = wmat.shape[-1]
    fuse = scale is not None

    kernel = functools.partial(_conv3x3_stats_kernel, H=H, W=W, fuse_bn_relu=fuse)

    in_specs = [
        pl.BlockSpec((1, H, W, cin_p), lambda n: (n, 0, 0, 0)),
        pl.BlockSpec((9, cin_p, cout_p), lambda n: (0, 0, 0)),   # resident weights
    ]
    args = [x_nhwc, wmat]
    if fuse:
        in_specs += [pl.BlockSpec((1, cin_p), lambda n: (0, 0)),
                     pl.BlockSpec((1, cin_p), lambda n: (0, 0))]
        args += [scale, shift]

    grid_spec = pltpu.PrefetchScalarGridSpec(
        num_scalar_prefetch=0,
        grid=(N,),
        in_specs=in_specs,
        out_specs=[
            pl.BlockSpec((1, H, W, cout_p), lambda n: (n, 0, 0, 0)),
            pl.BlockSpec((2, cout_p), lambda n: (0, 0)),          # resident stats acc
        ],
        scratch_shapes=[pltpu.VMEM((H + 2, W + 2, cin_p), jnp.float32)],
    )

    y, stats = pl.pallas_call(
        kernel,
        grid_spec=grid_spec,
        out_shape=(
            jax.ShapeDtypeStruct((N, H, W, cout_p), jnp.float32),
            jax.ShapeDtypeStruct((2, cout_p), jnp.float32),
        ),
        compiler_params=pltpu.CompilerParams(
            dimension_semantics=("arbitrary",),    # stats accumulate across the grid
            vmem_limit_bytes=VMEM_LIMIT,
        ),
    )(*args)
    return y, stats


# ---------------------------------------------------------------------------
# Kernel 2: final BN-apply + ReLU, tiled lane-dense elementwise kernel.
# ---------------------------------------------------------------------------
def _bn_relu_apply_kernel(y_ref, scale_ref, shift_ref, o_ref):
    o_ref[...] = jnp.maximum(y_ref[...] * scale_ref[...] + shift_ref[...], 0.0)


def _bn_relu_apply(y2d, scale, shift, preferred_tile_m=256):
    M, cp = y2d.shape
    tm = min(preferred_tile_m, M)
    while M % tm:
        tm //= 2
    if tm % 8:           # fall back to full-extent block (always legal)
        tm = M

    grid_spec = pltpu.PrefetchScalarGridSpec(
        num_scalar_prefetch=0,
        grid=(M // tm,),
        in_specs=[
            pl.BlockSpec((tm, cp), lambda i: (i, 0)),
            pl.BlockSpec((1, cp), lambda i: (0, 0)),
            pl.BlockSpec((1, cp), lambda i: (0, 0)),
        ],
        out_specs=pl.BlockSpec((tm, cp), lambda i: (i, 0)),
    )
    return pl.pallas_call(
        _bn_relu_apply_kernel,
        grid_spec=grid_spec,
        out_shape=jax.ShapeDtypeStruct((M, cp), jnp.float32),
        compiler_params=pltpu.CompilerParams(
            dimension_semantics=("parallel",),
            vmem_limit_bytes=VMEM_LIMIT,
        ),
    )(y2d, scale, shift)


# ---------------------------------------------------------------------------
# BN fold: batch stats -> per-channel (scale, shift) in f32 (tiny, plain JAX).
# ---------------------------------------------------------------------------
def _fold_bn(stats, count, gamma, beta, c_pad):
    mean = stats[0] / count
    var = jnp.maximum(stats[1] / count - mean * mean, 0.0)   # biased variance
    inv_std = jax.lax.rsqrt(var + 1e-5)
    gamma_p = _pad_last(gamma, c_pad)                        # padded channels -> 0
    beta_p = _pad_last(beta, c_pad)
    scale = gamma_p * inv_std
    shift = beta_p - scale * mean
    return scale[None, :].astype(jnp.float32), shift[None, :].astype(jnp.float32)


# ---------------------------------------------------------------------------
# Public forward (NCHW in / NCHW out, matching the PyTorch module in train mode).
# ---------------------------------------------------------------------------
@jax.jit
def vgg_block_forward(x_nchw, params):
    N, Cin, H, W = x_nchw.shape
    Cmid = params["conv1_w"].shape[0]
    Cout = params["conv2_w"].shape[0]
    cin_p, cmid_p, cout_p = (_round_up(c, LANES) for c in (Cin, Cmid, Cout))

    # Boundary layout work, once: NCHW -> NHWC, pad channels to lane width, bf16.
    x = jnp.transpose(x_nchw, (0, 2, 3, 1))
    x = _pad_last(x, cin_p).astype(jnp.bfloat16)

    w1 = _prep_weight(params["conv1_w"], cin_p, cmid_p)
    w2 = _prep_weight(params["conv2_w"], cmid_p, cout_p)
    count = N * H * W

    # Stage 1: conv1 + BN1 statistics.  (Conv bias dropped: cancels in train-mode BN.)
    y1, stats1 = _conv3x3_stats(x, w1, scale=None, shift=None, H=H, W=W)
    scale1, shift1 = _fold_bn(stats1, count, params["bn1_gamma"], params["bn1_beta"], cmid_p)

    # Stage 2: BN1-apply + ReLU fused into conv2's prologue; conv2 + BN2 statistics.
    y2, stats2 = _conv3x3_stats(y1, w2, scale=scale1, shift=shift1, H=H, W=W)
    scale2, shift2 = _fold_bn(stats2, count, params["bn2_gamma"], params["bn2_beta"], cout_p)

    # Final BN2-apply + ReLU (tiled elementwise kernel), then strip padding / go NCHW.
    out = _bn_relu_apply(y2.reshape(count, cout_p), scale2, shift2)
    out = out.reshape(N, H, W, cout_p)[..., :Cout]
    return jnp.transpose(out, (0, 3, 1, 2))


def init_params(key, in_channels, middle_channels, out_channels):
    k1, k2, k3, k4 = jax.random.split(key, 4)
    return {
        "conv1_w": 0.1 * jax.random.normal(k1, (middle_channels, in_channels, 3, 3), jnp.float32),
        "conv1_b": 0.1 * jax.random.normal(k2, (middle_channels,), jnp.float32),
        "bn1_gamma": jnp.ones((middle_channels,), jnp.float32),
        "bn1_beta": jnp.zeros((middle_channels,), jnp.float32),
        "conv2_w": 0.1 * jax.random.normal(k3, (out_channels, middle_channels, 3, 3), jnp.float32),
        "conv2_b": 0.1 * jax.random.normal(k4, (out_channels,), jnp.float32),
        "bn2_gamma": jnp.ones((out_channels,), jnp.float32),
        "bn2_beta": jnp.zeros((out_channels,), jnp.float32),
    }


def _reference_forward(x_nchw, params):
    """Pure-JAX f32 reference (lax.conv WITH bias + training-mode BN + ReLU)."""
    def conv(x, w, b):
        y = jax.lax.conv_general_dilated(
            x, w, window_strides=(1, 1), padding=((1, 1), (1, 1)),
            dimension_numbers=("NCHW", "OIHW", "NCHW"))
        return y + b[None, :, None, None]

    def bn_relu(y, gamma, beta):
        mean = jnp.mean(y, axis=(0, 2, 3), keepdims=True)
        var = jnp.mean((y - mean) ** 2, axis=(0, 2, 3), keepdims=True)
        yhat = (y - mean) * jax.lax.rsqrt(var + 1e-5)
        return jnp.maximum(gamma[None, :, None, None] * yhat + beta[None, :, None, None], 0.0)

    y = bn_relu(conv(x_nchw, params["conv1_w"], params["conv1_b"]),
                params["bn1_gamma"], params["bn1_beta"])
    y = bn_relu(conv(y, params["conv2_w"], params["conv2_b"]),
                params["bn2_gamma"], params["bn2_beta"])
    return y


if __name__ == "__main__":
    key = jax.random.PRNGKey(0)
    kx, kp = jax.random.split(key)

    N, Cin, Cmid, Cout, H, W = 2, 4, 8, 4, 16, 16
    x = jax.random.normal(kx, (N, Cin, H, W), jnp.float32)
    params = init_params(kp, Cin, Cmid, Cout)

    out = jax.block_until_ready(vgg_block_forward(x, params))
    ref = _reference_forward(x, params)

    assert out.shape == (N, Cout, H, W)
    max_diff = float(jnp.max(jnp.abs(out - ref)))
    # bf16 MXU inputs across two chained convs -> bf16-appropriate tolerance.
    assert jnp.allclose(out, ref, rtol=3e-2, atol=3e-2), \
        f"mismatch vs. JAX reference (max|diff|={max_diff})"

    print("KERNEL_OK")
</pallas_src>

<mosaic_0001>
module attributes {stable_mosaic.version = 11 : i64} {
  func.func @_conv3x3_stats_kernel(%arg0: i32, %arg1: memref<1x16x16x128xbf16, #tpu.memory_space<vmem>>, %arg2: memref<9x128x128xbf16, #tpu.memory_space<vmem>>, %arg3: memref<1x16x16x128xf32, #tpu.memory_space<vmem>>, %arg4: memref<2x128xf32, #tpu.memory_space<vmem>>, %arg5: memref<18x18x128xf32, #tpu.memory_space<vmem>>) attributes {dimension_semantics = [#tpu.dimension_semantics<arbitrary>], iteration_bounds = array<i64: 2>, scalar_prefetch = 0 : i64, scratch_operands = 1 : i64, tpu.core_type = #tpu.core_type<tc>, window_params = [{transform_indices = @transform_0, window_bounds = array<i64: 1, 16, 16, 128>}, {pipeline_mode = #tpu.pipeline_mode<synchronous>, transform_indices = @transform_1, window_bounds = array<i64: 9, 128, 128>}, {transform_indices = @transform_2, window_bounds = array<i64: 1, 16, 16, 128>}, {pipeline_mode = #tpu.pipeline_mode<synchronous>, transform_indices = @transform_3, window_bounds = array<i64: 2, 128>}]} {
    %c0_i32 = arith.constant 0 : i32
    %0 = arith.cmpi eq, %arg0, %c0_i32 : i32
    %1 = arith.extui %0 : i1 to i32
    %c0_i32_0 = arith.constant 0 : i32
    %2 = arith.cmpi ne, %1, %c0_i32_0 : i32
    scf.if %2 {
      %cst_76 = arith.constant 0.000000e+00 : f32
      %84 = vector.broadcast %cst_76 : f32 to vector<18x18x128xf32>
      %c0_77 = arith.constant 0 : index
      %c0_78 = arith.constant 0 : index
      %c0_79 = arith.constant 0 : index
      %85 = vector.load %arg5[%c0_77, %c0_78, %c0_79] : memref<18x18x128xf32, #tpu.memory_space<vmem>>, vector<18x18x128xf32>
      tpu.vector_store %arg5[%c0_77, %c0_78, %c0_79], %84 {strides = array<i32>} : memref<18x18x128xf32, #tpu.memory_space<vmem>>, vector<18x18x128xf32>,
      %cst_80 = arith.constant 0.000000e+00 : f32
      %86 = vector.broadcast %cst_80 : f32 to vector<2x128xf32>
      %c0_81 = arith.constant 0 : index
      %c0_82 = arith.constant 0 : index
      %87 = vector.load %arg4[%c0_81, %c0_82] : memref<2x128xf32, #tpu.memory_space<vmem>>, vector<2x128xf32>
      tpu.vector_store %arg4[%c0_81, %c0_82], %86 {strides = array<i32>} : memref<2x128xf32, #tpu.memory_space<vmem>>, vector<2x128xf32>,
    } else {
    }
    %c0 = arith.constant 0 : index
    %c0_1 = arith.constant 0 : index
    %c0_2 = arith.constant 0 : index
    %c0_3 = arith.constant 0 : index
    %3 = vector.load %arg1[%c0, %c0_1, %c0_2, %c0_3] : memref<1x16x16x128xbf16, #tpu.memory_space<vmem>>, vector<1x16x16x128xbf16>
    %4 = vector.shape_cast %3 : vector<1x16x16x128xbf16> to vector<16x16x128xbf16>
    %5 = arith.extf %4 : vector<16x16x128xbf16> to vector<16x16x128xf32>
    %c1 = arith.constant 1 : index
    %c1_4 = arith.constant 1 : index
    %c0_5 = arith.constant 0 : index
    %6 = vector.load %arg5[%c1, %c1_4, %c0_5] : memref<18x18x128xf32, #tpu.memory_space<vmem>>, vector<16x16x128xf32>
    tpu.vector_store %arg5[%c1, %c1_4, %c0_5], %5 {strides = array<i32>} : memref<18x18x128xf32, #tpu.memory_space<vmem>>, vector<16x16x128xf32>,
    %cst = arith.constant 0.000000e+00 : f32
    %7 = vector.broadcast %cst : f32 to vector<256x128xf32>
    %c0_6 = arith.constant 0 : index
    %c0_7 = arith.constant 0 : index
    %c0_8 = arith.constant 0 : index
    %8 = vector.load %arg5[%c0_6, %c0_7, %c0_8] : memref<18x18x128xf32, #tpu.memory_space<vmem>>, vector<16x16x128xf32>
    %9 = vector.shape_cast %8 : vector<16x16x128xf32> to vector<256x128xf32>
    %10 = arith.truncf %9 : vector<256x128xf32> to vector<256x128xbf16>
    %c0_9 = arith.constant 0 : index
    %c0_10 = arith.constant 0 : index
    %c0_11 = arith.constant 0 : index
    %11 = vector.load %arg2[%c0_9, %c0_10, %c0_11] : memref<9x128x128xbf16, #tpu.memory_space<vmem>>, vector<1x128x128xbf16>
    %12 = vector.shape_cast %11 : vector<1x128x128xbf16> to vector<128x128xbf16>
    %cst_12 = arith.constant dense<0.000000e+00> : vector<256x128xf32>
    %13 = tpu.matmul %10, %12, %cst_12 {dimension_numbers = #tpu.dot_dimension_numbers<[1], [0], [0], [1], [0, 0, 1, 1], [], []>} : vector<256x128xbf16>, vector<128x128xbf16>, vector<256x128xf32> -> vector<256x128xf32>
    %14 = arith.addf %7, %13 : vector<256x128xf32>
    %c0_13 = arith.constant 0 : index
    %c1_14 = arith.constant 1 : index
    %c0_15 = arith.constant 0 : index
    %15 = vector.load %arg5[%c0_13, %c1_14, %c0_15] : memref<18x18x128xf32, #tpu.memory_space<vmem>>, vector<16x16x128xf32>
    %16 = vector.shape_cast %15 : vector<16x16x128xf32> to vector<256x128xf32>
    %17 = arith.truncf %16 : vector<256x128xf32> to vector<256x128xbf16>
    %c1_16 = arith.constant 1 : index
    %c0_17 = arith.constant 0 : index
    %c0_18 = arith.constant 0 : index
    %18 = vector.load %arg2[%c1_16, %c0_17, %c0_18] : memref<9x128x128xbf16, #tpu.memory_space<vmem>>, vector<1x128x128xbf16>
    %19 = vector.shape_cast %18 : vector<1x128x128xbf16> to vector<128x128xbf16>
    %cst_19 = arith.constant dense<0.000000e+00> : vector<256x128xf32>
    %20 = tpu.matmul %17, %19, %cst_19 {dimension_numbers = #tpu.dot_dimension_numbers<[1], [0], [0], [1], [0, 0, 1, 1], [], []>} : vector<256x128xbf16>, vector<128x128xbf16>, vector<256x128xf32> -> vector<256x128xf32>
    %21 = arith.addf %14, %20 : vector<256x128xf32>
    %c0_20 = arith.constant 0 : index
    %c2 = arith.constant 2 : index
    %c0_21 = arith.constant 0 : index
    %22 = vector.load %arg5[%c0_20, %c2, %c0_21] : memref<18x18x128xf32, #tpu.memory_space<vmem>>, vector<16x16x128xf32>
    %23 = vector.shape_cast %22 : vector<16x16x128xf32> to vector<256x128xf32>
    %24 = arith.truncf %23 : vector<256x128xf32> to vector<256x128xbf16>
    %c2_22 = arith.constant 2 : index
    %c0_23 = arith.constant 0 : index
    %c0_24 = arith.constant 0 : index
    %25 = vector.load %arg2[%c2_22, %c0_23, %c0_24] : memref<9x128x128xbf16, #tpu.memory_space<vmem>>, vector<1x128x128xbf16>
    %26 = vector.shape_cast %25 : vector<1x128x128xbf16> to vector<128x128xbf16>
    %cst_25 = arith.constant dense<0.000000e+00> : vector<256x128xf32>
    %27 = tpu.matmul %24, %26, %cst_25 {dimension_numbers = #tpu.dot_dimension_numbers<[1], [0], [0], [1], [0, 0, 1, 1], [], []>} : vector<256x128xbf16>, vector<128x128xbf16>, vector<256x128xf32> -> vector<256x128xf32>
    %28 = arith.addf %21, %27 : vector<256x128xf32>
    %c1_26 = arith.constant 1 : index
    %c0_27 = arith.constant 0 : index
    %c0_28 = arith.constant 0 : index
    %29 = vector.load %arg5[%c1_26, %c0_27, %c0_28] : memref<18x18x128xf32, #tpu.memory_space<vmem>>, vector<16x16x128xf32>
    %30 = vector.shape_cast %29 : vector<16x16x128xf32> to vector<256x128xf32>
    %31 = arith.truncf %30 : vector<256x128xf32> to vector<256x128xbf16>
    %c3 = arith.constant 3 : index
    %c0_29 = arith.constant 0 : index
    %c0_30 = arith.constant 0 : index
    %32 = vector.load %arg2[%c3, %c0_29, %c0_30] : memref<9x128x128xbf16, #tpu.memory_space<vmem>>, vector<1x128x128xbf16>
    %33 = vector.shape_cast %32 : vector<1x128x128xbf16> to vector<128x128xbf16>
    %cst_31 = arith.constant dense<0.000000e+00> : vector<256x128xf32>
    %34 = tpu.matmul %31, %33, %cst_31 {dimension_numbers = #tpu.dot_dimension_numbers<[1], [0], [0], [1], [0, 0, 1, 1], [], []>} : vector<256x128xbf16>, vector<128x128xbf16>, vector<256x128xf32> -> vector<256x128xf32>
    %35 = arith.addf %28, %34 : vector<256x128xf32>
    %c1_32 = arith.constant 1 : index
    %c1_33 = arith.constant 1 : index
    %c0_34 = arith.constant 0 : index
    %36 = vector.load %arg5[%c1_32, %c1_33, %c0_34] : memref<18x18x128xf32, #tpu.memory_space<vmem>>, vector<16x16x128xf32>
    %37 = vector.shape_cast %36 : vector<16x16x128xf32> to vector<256x128xf32>
    %38 = arith.truncf %37 : vector<256x128xf32> to vector<256x128xbf16>
    %c4 = arith.constant 4 : index
    %c0_35 = arith.constant 0 : index
    %c0_36 = arith.constant 0 : index
    %39 = vector.load %arg2[%c4, %c0_35, %c0_36] : memref<9x128x128xbf16, #tpu.memory_space<vmem>>, vector<1x128x128xbf16>
    %40 = vector.shape_cast %39 : vector<1x128x128xbf16> to vector<128x128xbf16>
    %cst_37 = arith.constant dense<0.000000e+00> : vector<256x128xf32>
    %41 = tpu.matmul %38, %40, %cst_37 {dimension_numbers = #tpu.dot_dimension_numbers<[1], [0], [0], [1], [0, 0, 1, 1], [], []>} : vector<256x128xbf16>, vector<128x128xbf16>, vector<256x128xf32> -> vector<256x128xf32>
    %42 = arith.addf %35, %41 : vector<256x128xf32>
    %c1_38 = arith.constant 1 : index
    %c2_39 = arith.constant 2 : index
    %c0_40 = arith.constant 0 : index
    %43 = vector.load %arg5[%c1_38, %c2_39, %c0_40] : memref<18x18x128xf32, #tpu.memory_space<vmem>>, vector<16x16x128xf32>
    %44 = vector.shape_cast %43 : vector<16x16x128xf32> to vector<256x128xf32>
    %45 = arith.truncf %44 : vector<256x128xf32> to vector<256x128xbf16>
    %c5 = arith.constant 5 : index
    %c0_41 = arith.constant 0 : index
    %c0_42 = arith.constant 0 : index
    %46 = vector.load %arg2[%c5, %c0_41, %c0_42] : memref<9x128x128xbf16, #tpu.memory_space<vmem>>, vector<1x128x128xbf16>
    %47 = vector.shape_cast %46 : vector<1x128x128xbf16> to vector<128x128xbf16>
    %cst_43 = arith.constant dense<0.000000e+00> : vector<256x128xf32>
    %48 = tpu.matmul %45, %47, %cst_43 {dimension_numbers = #tpu.dot_dimension_numbers<[1], [0], [0], [1], [0, 0, 1, 1], [], []>} : vector<256x128xbf16>, vector<128x128xbf16>, vector<256x128xf32> -> vector<256x128xf32>
    %49 = arith.addf %42, %48 : vector<256x128xf32>
    %c2_44 = arith.constant 2 : index
    %c0_45 = arith.constant 0 : index
    %c0_46 = arith.constant 0 : index
    %50 = vector.load %arg5[%c2_44, %c0_45, %c0_46] : memref<18x18x128xf32, #tpu.memory_space<vmem>>, vector<16x16x128xf32>
    %51 = vector.shape_cast %50 : vector<16x16x128xf32> to vector<256x128xf32>
    %52 = arith.truncf %51 : vector<256x128xf32> to vector<256x128xbf16>
    %c6 = arith.constant 6 : index
    %c0_47 = arith.constant 0 : index
    %c0_48 = arith.constant 0 : index
    %53 = vector.load %arg2[%c6, %c0_47, %c0_48] : memref<9x128x128xbf16, #tpu.memory_space<vmem>>, vector<1x128x128xbf16>
    %54 = vector.shape_cast %53 : vector<1x128x128xbf16> to vector<128x128xbf16>
    %cst_49 = arith.constant dense<0.000000e+00> : vector<256x128xf32>
    %55 = tpu.matmul %52, %54, %cst_49 {dimension_numbers = #tpu.dot_dimension_numbers<[1], [0], [0], [1], [0, 0, 1, 1], [], []>} : vector<256x128xbf16>, vector<128x128xbf16>, vector<256x128xf32> -> vector<256x128xf32>
    %56 = arith.addf %49, %55 : vector<256x128xf32>
    %c2_50 = arith.constant 2 : index
    %c1_51 = arith.constant 1 : index
    %c0_52 = arith.constant 0 : index
    %57 = vector.load %arg5[%c2_50, %c1_51, %c0_52] : memref<18x18x128xf32, #tpu.memory_space<vmem>>, vector<16x16x128xf32>
    %58 = vector.shape_cast %57 : vector<16x16x128xf32> to vector<256x128xf32>
    %59 = arith.truncf %58 : vector<256x128xf32> to vector<256x128xbf16>
    %c7 = arith.constant 7 : index
    %c0_53 = arith.constant 0 : index
    %c0_54 = arith.constant 0 : index
    %60 = vector.load %arg2[%c7, %c0_53, %c0_54] : memref<9x128x128xbf16, #tpu.memory_space<vmem>>, vector<1x128x128xbf16>
    %61 = vector.shape_cast %60 : vector<1x128x128xbf16> to vector<128x128xbf16>
    %cst_55 = arith.constant dense<0.000000e+00> : vector<256x128xf32>
    %62 = tpu.matmul %59, %61, %cst_55 {dimension_numbers = #tpu.dot_dimension_numbers<[1], [0], [0], [1], [0, 0, 1, 1], [], []>} : vector<256x128xbf16>, vector<128x128xbf16>, vector<256x128xf32> -> vector<256x128xf32>
    %63 = arith.addf %56, %62 : vector<256x128xf32>
    %c2_56 = arith.constant 2 : index
    %c2_57 = arith.constant 2 : index
    %c0_58 = arith.constant 0 : index
    %64 = vector.load %arg5[%c2_56, %c2_57, %c0_58] : memref<18x18x128xf32, #tpu.memory_space<vmem>>, vector<16x16x128xf32>
    %65 = vector.shape_cast %64 : vector<16x16x128xf32> to vector<256x128xf32>
    %66 = arith.truncf %65 : vector<256x128xf32> to vector<256x128xbf16>
    %c8 = arith.constant 8 : index
    %c0_59 = arith.constant 0 : index
    %c0_60 = arith.constant 0 : index
    %67 = vector.load %arg2[%c8, %c0_59, %c0_60] : memref<9x128x128xbf16, #tpu.memory_space<vmem>>, vector<1x128x128xbf16>
    %68 = vector.shape_cast %67 : vector<1x128x128xbf16> to vector<128x128xbf16>
    %cst_61 = arith.constant dense<0.000000e+00> : vector<256x128xf32>
    %69 = tpu.matmul %66, %68, %cst_61 {dimension_numbers = #tpu.dot_dimension_numbers<[1], [0], [0], [1], [0, 0, 1, 1], [], []>} : vector<256x128xbf16>, vector<128x128xbf16>, vector<256x128xf32> -> vector<256x128xf32>
    %70 = arith.addf %63, %69 : vector<256x128xf32>
    %71 = vector.shape_cast %70 : vector<256x128xf32> to vector<1x16x16x128xf32>
    %c0_62 = arith.constant 0 : index
    %c0_63 = arith.constant 0 : index
    %c0_64 = arith.constant 0 : index
    %c0_65 = arith.constant 0 : index
    %72 = vector.load %arg3[%c0_62, %c0_63, %c0_64, %c0_65] : memref<1x16x16x128xf32, #tpu.memory_space<vmem>>, vector<1x16x16x128xf32>
    tpu.vector_store %arg3[%c0_62, %c0_63, %c0_64, %c0_65], %71 {strides = array<i32>} : memref<1x16x16x128xf32, #tpu.memory_space<vmem>>, vector<1x16x16x128xf32>,
    %c0_66 = arith.constant 0 : index
    %c0_67 = arith.constant 0 : index
    %73 = vector.load %arg4[%c0_66, %c0_67] : memref<2x128xf32, #tpu.memory_space<vmem>>, vector<1x128xf32>
    %cst_68 = arith.constant dense<0.000000e+00> : vector<128xf32>
    %74 = vector.multi_reduction <add>, %70, %cst_68 [0] : vector<256x128xf32> to vector<128xf32>
    %75 = vector.shape_cast %74 : vector<128xf32> to vector<1x128xf32>
    %76 = arith.addf %73, %75 : vector<1x128xf32>
    %c0_69 = arith.constant 0 : index
    %c0_70 = arith.constant 0 : index
    %77 = vector.load %arg4[%c0_69, %c0_70] : memref<2x128xf32, #tpu.memory_space<vmem>>, vector<1x128xf32>
    tpu.vector_store %arg4[%c0_69, %c0_70], %76 {strides = array<i32>} : memref<2x128xf32, #tpu.memory_space<vmem>>, vector<1x128xf32>,
    %c1_71 = arith.constant 1 : index
    %c0_72 = arith.constant 0 : index
    %78 = vector.load %arg4[%c1_71, %c0_72] : memref<2x128xf32, #tpu.memory_space<vmem>>, vector<1x128xf32>
    %79 = arith.mulf %70, %70 : vector<256x128xf32>
    %cst_73 = arith.constant dense<0.000000e+00> : vector<128xf32>
    %80 = vector.multi_reduction <add>, %79, %cst_73 [0] : vector<256x128xf32> to vector<128xf32>
    %81 = vector.shape_cast %80 : vector<128xf32> to vector<1x128xf32>
    %82 = arith.addf %78, %81 : vector<1x128xf32>
    %c1_74 = arith.constant 1 : index
    %c0_75 = arith.constant 0 : index
    %83 = vector.load %arg4[%c1_74, %c0_75] : memref<2x128xf32, #tpu.memory_space<vmem>>, vector<1x128xf32>
    tpu.vector_store %arg4[%c1_74, %c0_75], %82 {strides = array<i32>} : memref<2x128xf32, #tpu.memory_space<vmem>>, vector<1x128xf32>,
    return
  }
  func.func @transform_0(%arg0: i32) -> (i32, i32, i32, i32) {
    %c0_i32 = arith.constant 0 : i32
    %c0_i32_0 = arith.constant 0 : i32
    %c0_i32_1 = arith.constant 0 : i32
    %c0_i32_2 = arith.constant 0 : i32
    return %arg0, %c0_i32, %c0_i32_0, %c0_i32_1 : i32, i32, i32, i32
  }
  func.func @transform_1(%arg0: i32) -> (i32, i32, i32) {
    %c0_i32 = arith.constant 0 : i32
    %c0_i32_0 = arith.constant 0 : i32
    %c0_i32_1 = arith.constant 0 : i32
    %c0_i32_2 = arith.constant 0 : i32
    return %c0_i32, %c0_i32_0, %c0_i32_1 : i32, i32, i32
  }
  func.func @transform_2(%arg0: i32) -> (i32, i32, i32, i32) {
    %c0_i32 = arith.constant 0 : i32
    %c0_i32_0 = arith.constant 0 : i32
    %c0_i32_1 = arith.constant 0 : i32
    %c0_i32_2 = arith.constant 0 : i32
    return %arg0, %c0_i32, %c0_i32_0, %c0_i32_1 : i32, i32, i32, i32
  }
  func.func @transform_3(%arg0: i32) -> (i32, i32) {
    %c0_i32 = arith.constant 0 : i32
    %c0_i32_0 = arith.constant 0 : i32
    %c0_i32_1 = arith.constant 0 : i32
    return %c0_i32, %c0_i32_0 : i32, i32
  }
}

module attributes {stable_mosaic.version = 11 : i64} {
  func.func @_conv3x3_stats_kernel(%arg0: i32, %arg1: memref<1x16x16x128xf32, #tpu.memory_space<vmem>>, %arg2: memref<9x128x128xbf16, #tpu.memory_space<vmem>>, %arg3: memref<1x128xf32, #tpu.memory_space<vmem>>, %arg4: memref<1x128xf32, #tpu.memory_space<vmem>>, %arg5: memref<1x16x16x128xf32, #tpu.memory_space<vmem>>, %arg6: memref<2x128xf32, #tpu.memory_space<vmem>>, %arg7: memref<18x18x128xf32, #tpu.memory_space<vmem>>) attributes {dimension_semantics = [#tpu.dimension_semantics<arbitrary>], iteration_bounds = array<i64: 2>, scalar_prefetch = 0 : i64, scratch_operands = 1 : i64, tpu.core_type = #tpu.core_type<tc>, window_params = [{transform_indices = @transform_0, window_bounds = array<i64: 1, 16, 16, 128>}, {pipeline_mode = #tpu.pipeline_mode<synchronous>, transform_indices = @transform_1, window_bounds = array<i64: 9, 128, 128>}, {pipeline_mode = #tpu.pipeline_mode<synchronous>, transform_indices = @transform_2, window_bounds = array<i64: 1, 128>}, {pipeline_mode = #tpu.pipeline_mode<synchronous>, transform_indices = @transform_3, window_bounds = array<i64: 1, 128>}, {transform_indices = @transform_4, window_bounds = array<i64: 1, 16, 16, 128>}, {pipeline_mode = #tpu.pipeline_mode<synchronous>, transform_indices = @transform_5, window_bounds = array<i64: 2, 128>}]} {
    %c0_i32 = arith.constant 0 : i32
    %0 = arith.cmpi eq, %arg0, %c0_i32 : i32
    %1 = arith.extui %0 : i1 to i32
    %c0_i32_0 = arith.constant 0 : i32
    %2 = arith.cmpi ne, %1, %c0_i32_0 : i32
    scf.if %2 {
      %cst_81 = arith.constant 0.000000e+00 : f32
      %93 = vector.broadcast %cst_81 : f32 to vector<18x18x128xf32>
      %c0_82 = arith.constant 0 : index
      %c0_83 = arith.constant 0 : index
      %c0_84 = arith.constant 0 : index
      %94 = vector.load %arg7[%c0_82, %c0_83, %c0_84] : memref<18x18x128xf32, #tpu.memory_space<vmem>>, vector<18x18x128xf32>
      tpu.vector_store %arg7[%c0_82, %c0_83, %c0_84], %93 {strides = array<i32>} : memref<18x18x128xf32, #tpu.memory_space<vmem>>, vector<18x18x128xf32>,
      %cst_85 = arith.constant 0.000000e+00 : f32
      %95 = vector.broadcast %cst_85 : f32 to vector<2x128xf32>
      %c0_86 = arith.constant 0 : index
      %c0_87 = arith.constant 0 : index
      %96 = vector.load %arg6[%c0_86, %c0_87] : memref<2x128xf32, #tpu.memory_space<vmem>>, vector<2x128xf32>
      tpu.vector_store %arg6[%c0_86, %c0_87], %95 {strides = array<i32>} : memref<2x128xf32, #tpu.memory_space<vmem>>, vector<2x128xf32>,
    } else {
    }
    %c0 = arith.constant 0 : index
    %c0_1 = arith.constant 0 : index
    %c0_2 = arith.constant 0 : index
    %c0_3 = arith.constant 0 : index
    %3 = vector.load %arg1[%c0, %c0_1, %c0_2, %c0_3] : memref<1x16x16x128xf32, #tpu.memory_space<vmem>>, vector<1x16x16x128xf32>
    %4 = vector.shape_cast %3 : vector<1x16x16x128xf32> to vector<16x16x128xf32>
    %c0_4 = arith.constant 0 : index
    %c0_5 = arith.constant 0 : index
    %5 = vector.load %arg3[%c0_4, %c0_5] : memref<1x128xf32, #tpu.memory_space<vmem>>, vector<1x128xf32>
    %6 = vector.shape_cast %5 : vector<1x128xf32> to vector<1x1x128xf32>
    %7 = vector.broadcast %6 : vector<1x1x128xf32> to vector<16x16x128xf32>
    %8 = arith.mulf %4, %7 : vector<16x16x128xf32>
    %c0_6 = arith.constant 0 : index
    %c0_7 = arith.constant 0 : index
    %9 = vector.load %arg4[%c0_6, %c0_7] : memref<1x128xf32, #tpu.memory_space<vmem>>, vector<1x128xf32>
    %10 = vector.shape_cast %9 : vector<1x128xf32> to vector<1x1x128xf32>
    %11 = vector.broadcast %10 : vector<1x1x128xf32> to vector<16x16x128xf32>
    %12 = arith.addf %8, %11 : vector<16x16x128xf32>
    %cst = arith.constant 0.000000e+00 : f32
    %13 = vector.broadcast %cst : f32 to vector<16x16x128xf32>
    %14 = arith.maximumf %12, %13 : vector<16x16x128xf32>
    %c1 = arith.constant 1 : index
    %c1_8 = arith.constant 1 : index
    %c0_9 = arith.constant 0 : index
    %15 = vector.load %arg7[%c1, %c1_8, %c0_9] : memref<18x18x128xf32, #tpu.memory_space<vmem>>, vector<16x16x128xf32>
    tpu.vector_store %arg7[%c1, %c1_8, %c0_9], %14 {strides = array<i32>} : memref<18x18x128xf32, #tpu.memory_space<vmem>>, vector<16x16x128xf32>,
    %cst_10 = arith.constant 0.000000e+00 : f32
    %16 = vector.broadcast %cst_10 : f32 to vector<256x128xf32>
    %c0_11 = arith.constant 0 : index
    %c0_12 = arith.constant 0 : index
    %c0_13 = arith.constant 0 : index
    %17 = vector.load %arg7[%c0_11, %c0_12, %c0_13] : memref<18x18x128xf32, #tpu.memory_space<vmem>>, vector<16x16x128xf32>
    %18 = vector.shape_cast %17 : vector<16x16x128xf32> to vector<256x128xf32>
    %19 = arith.truncf %18 : vector<256x128xf32> to vector<256x128xbf16>
    %c0_14 = arith.constant 0 : index
    %c0_15 = arith.constant 0 : index
    %c0_16 = arith.constant 0 : index
    %20 = vector.load %arg2[%c0_14, %c0_15, %c0_16] : memref<9x128x128xbf16, #tpu.memory_space<vmem>>, vector<1x128x128xbf16>
    %21 = vector.shape_cast %20 : vector<1x128x128xbf16> to vector<128x128xbf16>
    %cst_17 = arith.constant dense<0.000000e+00> : vector<256x128xf32>
    %22 = tpu.matmul %19, %21, %cst_17 {dimension_numbers = #tpu.dot_dimension_numbers<[1], [0], [0], [1], [0, 0, 1, 1], [], []>} : vector<256x128xbf16>, vector<128x128xbf16>, vector<256x128xf32> -> vector<256x128xf32>
    %23 = arith.addf %16, %22 : vector<256x128xf32>
    %c0_18 = arith.constant 0 : index
    %c1_19 = arith.constant 1 : index
    %c0_20 = arith.constant 0 : index
    %24 = vector.load %arg7[%c0_18, %c1_19, %c0_20] : memref<18x18x128xf32, #tpu.memory_space<vmem>>, vector<16x16x128xf32>
    %25 = vector.shape_cast %24 : vector<16x16x128xf32> to vector<256x128xf32>
    %26 = arith.truncf %25 : vector<256x128xf32> to vector<256x128xbf16>
    %c1_21 = arith.constant 1 : index
    %c0_22 = arith.constant 0 : index
    %c0_23 = arith.constant 0 : index
    %27 = vector.load %arg2[%c1_21, %c0_22, %c0_23] : memref<9x128x128xbf16, #tpu.memory_space<vmem>>, vector<1x128x128xbf16>
    %28 = vector.shape_cast %27 : vector<1x128x128xbf16> to vector<128x128xbf16>
    %cst_24 = arith.constant dense<0.000000e+00> : vector<256x128xf32>
    %29 = tpu.matmul %26, %28, %cst_24 {dimension_numbers = #tpu.dot_dimension_numbers<[1], [0], [0], [1], [0, 0, 1, 1], [], []>} : vector<256x128xbf16>, vector<128x128xbf16>, vector<256x128xf32> -> vector<256x128xf32>
    %30 = arith.addf %23, %29 : vector<256x128xf32>
    %c0_25 = arith.constant 0 : index
    %c2 = arith.constant 2 : index
    %c0_26 = arith.constant 0 : index
    %31 = vector.load %arg7[%c0_25, %c2, %c0_26] : memref<18x18x128xf32, #tpu.memory_space<vmem>>, vector<16x16x128xf32>
    %32 = vector.shape_cast %31 : vector<16x16x128xf32> to vector<256x128xf32>
    %33 = arith.truncf %32 : vector<256x128xf32> to vector<256x128xbf16>
    %c2_27 = arith.constant 2 : index
    %c0_28 = arith.constant 0 : index
    %c0_29 = arith.constant 0 : index
    %34 = vector.load %arg2[%c2_27, %c0_28, %c0_29] : memref<9x128x128xbf16, #tpu.memory_space<vmem>>, vector<1x128x128xbf16>
    %35 = vector.shape_cast %34 : vector<1x128x128xbf16> to vector<128x128xbf16>
    %cst_30 = arith.constant dense<0.000000e+00> : vector<256x128xf32>
    %36 = tpu.matmul %33, %35, %cst_30 {dimension_numbers = #tpu.dot_dimension_numbers<[1], [0], [0], [1], [0, 0, 1, 1], [], []>} : vector<256x128xbf16>, vector<128x128xbf16>, vector<256x128xf32> -> vector<256x128xf32>
    %37 = arith.addf %30, %36 : vector<256x128xf32>
    %c1_31 = arith.constant 1 : index
    %c0_32 = arith.constant 0 : index
    %c0_33 = arith.constant 0 : index
    %38 = vector.load %arg7[%c1_31, %c0_32, %c0_33] : memref<18x18x128xf32, #tpu.memory_space<vmem>>, vector<16x16x128xf32>
    %39 = vector.shape_cast %38 : vector<16x16x128xf32> to vector<256x128xf32>
    %40 = arith.truncf %39 : vector<256x128xf32> to vector<256x128xbf16>
    %c3 = arith.constant 3 : index
    %c0_34 = arith.constant 0 : index
    %c0_35 = arith.constant 0 : index
    %41 = vector.load %arg2[%c3, %c0_34, %c0_35] : memref<9x128x128xbf16, #tpu.memory_space<vmem>>, vector<1x128x128xbf16>
    %42 = vector.shape_cast %41 : vector<1x128x128xbf16> to vector<128x128xbf16>
    %cst_36 = arith.constant dense<0.000000e+00> : vector<256x128xf32>
    %43 = tpu.matmul %40, %42, %cst_36 {dimension_numbers = #tpu.dot_dimension_numbers<[1], [0], [0], [1], [0, 0, 1, 1], [], []>} : vector<256x128xbf16>, vector<128x128xbf16>, vector<256x128xf32> -> vector<256x128xf32>
    %44 = arith.addf %37, %43 : vector<256x128xf32>
    %c1_37 = arith.constant 1 : index
    %c1_38 = arith.constant 1 : index
    %c0_39 = arith.constant 0 : index
    %45 = vector.load %arg7[%c1_37, %c1_38, %c0_39] : memref<18x18x128xf32, #tpu.memory_space<vmem>>, vector<16x16x128xf32>
    %46 = vector.shape_cast %45 : vector<16x16x128xf32> to vector<256x128xf32>
    %47 = arith.truncf %46 : vector<256x128xf32> to vector<256x128xbf16>
    %c4 = arith.constant 4 : index
    %c0_40 = arith.constant 0 : index
    %c0_41 = arith.constant 0 : index
    %48 = vector.load %arg2[%c4, %c0_40, %c0_41] : memref<9x128x128xbf16, #tpu.memory_space<vmem>>, vector<1x128x128xbf16>
    %49 = vector.shape_cast %48 : vector<1x128x128xbf16> to vector<128x128xbf16>
    %cst_42 = arith.constant dense<0.000000e+00> : vector<256x128xf32>
    %50 = tpu.matmul %47, %49, %cst_42 {dimension_numbers = #tpu.dot_dimension_numbers<[1], [0], [0], [1], [0, 0, 1, 1], [], []>} : vector<256x128xbf16>, vector<128x128xbf16>, vector<256x128xf32> -> vector<256x128xf32>
    %51 = arith.addf %44, %50 : vector<256x128xf32>
    %c1_43 = arith.constant 1 : index
    %c2_44 = arith.constant 2 : index
    %c0_45 = arith.constant 0 : index
    %52 = vector.load %arg7[%c1_43, %c2_44, %c0_45] : memref<18x18x128xf32, #tpu.memory_space<vmem>>, vector<16x16x128xf32>
    %53 = vector.shape_cast %52 : vector<16x16x128xf32> to vector<256x128xf32>
    %54 = arith.truncf %53 : vector<256x128xf32> to vector<256x128xbf16>
    %c5 = arith.constant 5 : index
    %c0_46 = arith.constant 0 : index
    %c0_47 = arith.constant 0 : index
    %55 = vector.load %arg2[%c5, %c0_46, %c0_47] : memref<9x128x128xbf16, #tpu.memory_space<vmem>>, vector<1x128x128xbf16>
    %56 = vector.shape_cast %55 : vector<1x128x128xbf16> to vector<128x128xbf16>
    %cst_48 = arith.constant dense<0.000000e+00> : vector<256x128xf32>
    %57 = tpu.matmul %54, %56, %cst_48 {dimension_numbers = #tpu.dot_dimension_numbers<[1], [0], [0], [1], [0, 0, 1, 1], [], []>} : vector<256x128xbf16>, vector<128x128xbf16>, vector<256x128xf32> -> vector<256x128xf32>
    %58 = arith.addf %51, %57 : vector<256x128xf32>
    %c2_49 = arith.constant 2 : index
    %c0_50 = arith.constant 0 : index
    %c0_51 = arith.constant 0 : index
    %59 = vector.load %arg7[%c2_49, %c0_50, %c0_51] : memref<18x18x128xf32, #tpu.memory_space<vmem>>, vector<16x16x128xf32>
    %60 = vector.shape_cast %59 : vector<16x16x128xf32> to vector<256x128xf32>
    %61 = arith.truncf %60 : vector<256x128xf32> to vector<256x128xbf16>
    %c6 = arith.constant 6 : index
    %c0_52 = arith.constant 0 : index
    %c0_53 = arith.constant 0 : index
    %62 = vector.load %arg2[%c6, %c0_52, %c0_53] : memref<9x128x128xbf16, #tpu.memory_space<vmem>>, vector<1x128x128xbf16>
    %63 = vector.shape_cast %62 : vector<1x128x128xbf16> to vector<128x128xbf16>
    %cst_54 = arith.constant dense<0.000000e+00> : vector<256x128xf32>
    %64 = tpu.matmul %61, %63, %cst_54 {dimension_numbers = #tpu.dot_dimension_numbers<[1], [0], [0], [1], [0, 0, 1, 1], [], []>} : vector<256x128xbf16>, vector<128x128xbf16>, vector<256x128xf32> -> vector<256x128xf32>
    %65 = arith.addf %58, %64 : vector<256x128xf32>
    %c2_55 = arith.constant 2 : index
    %c1_56 = arith.constant 1 : index
    %c0_57 = arith.constant 0 : index
    %66 = vector.load %arg7[%c2_55, %c1_56, %c0_57] : memref<18x18x128xf32, #tpu.memory_space<vmem>>, vector<16x16x128xf32>
    %67 = vector.shape_cast %66 : vector<16x16x128xf32> to vector<256x128xf32>
    %68 = arith.truncf %67 : vector<256x128xf32> to vector<256x128xbf16>
    %c7 = arith.constant 7 : index
    %c0_58 = arith.constant 0 : index
    %c0_59 = arith.constant 0 : index
    %69 = vector.load %arg2[%c7, %c0_58, %c0_59] : memref<9x128x128xbf16, #tpu.memory_space<vmem>>, vector<1x128x128xbf16>
    %70 = vector.shape_cast %69 : vector<1x128x128xbf16> to vector<128x128xbf16>
    %cst_60 = arith.constant dense<0.000000e+00> : vector<256x128xf32>
    %71 = tpu.matmul %68, %70, %cst_60 {dimension_numbers = #tpu.dot_dimension_numbers<[1], [0], [0], [1], [0, 0, 1, 1], [], []>} : vector<256x128xbf16>, vector<128x128xbf16>, vector<256x128xf32> -> vector<256x128xf32>
    %72 = arith.addf %65, %71 : vector<256x128xf32>
    %c2_61 = arith.constant 2 : index
    %c2_62 = arith.constant 2 : index
    %c0_63 = arith.constant 0 : index
    %73 = vector.load %arg7[%c2_61, %c2_62, %c0_63] : memref<18x18x128xf32, #tpu.memory_space<vmem>>, vector<16x16x128xf32>
    %74 = vector.shape_cast %73 : vector<16x16x128xf32> to vector<256x128xf32>
    %75 = arith.truncf %74 : vector<256x128xf32> to vector<256x128xbf16>
    %c8 = arith.constant 8 : index
    %c0_64 = arith.constant 0 : index
    %c0_65 = arith.constant 0 : index
    %76 = vector.load %arg2[%c8, %c0_64, %c0_65] : memref<9x128x128xbf16, #tpu.memory_space<vmem>>, vector<1x128x128xbf16>
    %77 = vector.shape_cast %76 : vector<1x128x128xbf16> to vector<128x128xbf16>
    %cst_66 = arith.constant dense<0.000000e+00> : vector<256x128xf32>
    %78 = tpu.matmul %75, %77, %cst_66 {dimension_numbers = #tpu.dot_dimension_numbers<[1], [0], [0], [1], [0, 0, 1, 1], [], []>} : vector<256x128xbf16>, vector<128x128xbf16>, vector<256x128xf32> -> vector<256x128xf32>
    %79 = arith.addf %72, %78 : vector<256x128xf32>
    %80 = vector.shape_cast %79 : vector<256x128xf32> to vector<1x16x16x128xf32>
    %c0_67 = arith.constant 0 : index
    %c0_68 = arith.constant 0 : index
    %c0_69 = arith.constant 0 : index
    %c0_70 = arith.constant 0 : index
    %81 = vector.load %arg5[%c0_67, %c0_68, %c0_69, %c0_70] : memref<1x16x16x128xf32, #tpu.memory_space<vmem>>, vector<1x16x16x128xf32>
    tpu.vector_store %arg5[%c0_67, %c0_68, %c0_69, %c0_70], %80 {strides = array<i32>} : memref<1x16x16x128xf32, #tpu.memory_space<vmem>>, vector<1x16x16x128xf32>,
    %c0_71 = arith.constant 0 : index
    %c0_72 = arith.constant 0 : index
    %82 = vector.load %arg6[%c0_71, %c0_72] : memref<2x128xf32, #tpu.memory_space<vmem>>, vector<1x128xf32>
    %cst_73 = arith.constant dense<0.000000e+00> : vector<128xf32>
    %83 = vector.multi_reduction <add>, %79, %cst_73 [0] : vector<256x128xf32> to vector<128xf32>
    %84 = vector.shape_cast %83 : vector<128xf32> to vector<1x128xf32>
    %85 = arith.addf %82, %84 : vector<1x128xf32>
    %c0_74 = arith.constant 0 : index
    %c0_75 = arith.constant 0 : index
    %86 = vector.load %arg6[%c0_74, %c0_75] : memref<2x128xf32, #tpu.memory_space<vmem>>, vector<1x128xf32>
    tpu.vector_store %arg6[%c0_74, %c0_75], %85 {strides = array<i32>} : memref<2x128xf32, #tpu.memory_space<vmem>>, vector<1x128xf32>,
    %c1_76 = arith.constant 1 : index
    %c0_77 = arith.constant 0 : index
    %87 = vector.load %arg6[%c1_76, %c0_77] : memref<2x128xf32, #tpu.memory_space<vmem>>, vector<1x128xf32>
    %88 = arith.mulf %79, %79 : vector<256x128xf32>
    %cst_78 = arith.constant dense<0.000000e+00> : vector<128xf32>
    %89 = vector.multi_reduction <add>, %88, %cst_78 [0] : vector<256x128xf32> to vector<128xf32>
    %90 = vector.shape_cast %89 : vector<128xf32> to vector<1x128xf32>
    %91 = arith.addf %87, %90 : vector<1x128xf32>
    %c1_79 = arith.constant 1 : index
    %c0_80 = arith.constant 0 : index
    %92 = vector.load %arg6[%c1_79, %c0_80] : memref<2x128xf32, #tpu.memory_space<vmem>>, vector<1x128xf32>
    tpu.vector_store %arg6[%c1_79, %c0_80], %91 {strides = array<i32>} : memref<2x128xf32, #tpu.memory_space<vmem>>, vector<1x128xf32>,
    return
  }
  func.func @transform_0(%arg0: i32) -> (i32, i32, i32, i32) {
    %c0_i32 = arith.constant 0 : i32
    %c0_i32_0 = arith.constant 0 : i32
    %c0_i32_1 = arith.constant 0 : i32
    %c0_i32_2 = arith.constant 0 : i32
    return %arg0, %c0_i32, %c0_i32_0, %c0_i32_1 : i32, i32, i32, i32
  }
  func.func @transform_1(%arg0: i32) -> (i32, i32, i32) {
    %c0_i32 = arith.constant 0 : i32
    %c0_i32_0 = arith.constant 0 : i32
    %c0_i32_1 = arith.constant 0 : i32
    %c0_i32_2 = arith.constant 0 : i32
    return %c0_i32, %c0_i32_0, %c0_i32_1 : i32, i32, i32
  }
  func.func @transform_2(%arg0: i32) -> (i32, i32) {
    %c0_i32 = arith.constant 0 : i32
    %c0_i32_0 = arith.constant 0 : i32
    %c0_i32_1 = arith.constant 0 : i32
    return %c0_i32, %c0_i32_0 : i32, i32
  }
  func.func @transform_3(%arg0: i32) -> (i32, i32) {
    %c0_i32 = arith.constant 0 : i32
    %c0_i32_0 = arith.constant 0 : i32
    %c0_i32_1 = arith.constant 0 : i32
    return %c0_i32, %c0_i32_0 : i32, i32
  }
  func.func @transform_4(%arg0: i32) -> (i32, i32, i32, i32) {
    %c0_i32 = arith.constant 0 : i32
    %c0_i32_0 = arith.constant 0 : i32
    %c0_i32_1 = arith.constant 0 : i32
    %c0_i32_2 = arith.constant 0 : i32
    return %arg0, %c0_i32, %c0_i32_0, %c0_i32_1 : i32, i32, i32, i32
  }
  func.func @transform_5(%arg0: i32) -> (i32, i32) {
    %c0_i32 = arith.constant 0 : i32
    %c0_i32_0 = arith.constant 0 : i32
    %c0_i32_1 = arith.constant 0 : i32
    return %c0_i32, %c0_i32_0 : i32, i32
  }
}

module attributes {stable_mosaic.version = 11 : i64} {
  func.func @_bn_relu_apply_kernel(%arg0: i32, %arg1: memref<256x128xf32, #tpu.memory_space<vmem>>, %arg2: memref<1x128xf32, #tpu.memory_space<vmem>>, %arg3: memref<1x128xf32, #tpu.memory_space<vmem>>, %arg4: memref<256x128xf32, #tpu.memory_space<vmem>>) attributes {dimension_semantics = [#tpu.dimension_semantics<parallel>], iteration_bounds = array<i64: 2>, scalar_prefetch = 0 : i64, scratch_operands = 0 : i64, tpu.core_type = #tpu.core_type<tc>, window_params = [{transform_indices = @transform_0, window_bounds = array<i64: 256, 128>}, {pipeline_mode = #tpu.pipeline_mode<synchronous>, transform_indices = @transform_1, window_bounds = array<i64: 1, 128>}, {pipeline_mode = #tpu.pipeline_mode<synchronous>, transform_indices = @transform_2, window_bounds = array<i64: 1, 128>}, {transform_indices = @transform_3, window_bounds = array<i64: 256, 128>}]} {
    %c0 = arith.constant 0 : index
    %c0_0 = arith.constant 0 : index
    %0 = vector.load %arg1[%c0, %c0_0] : memref<256x128xf32, #tpu.memory_space<vmem>>, vector<256x128xf32>
    %c0_1 = arith.constant 0 : index
    %c0_2 = arith.constant 0 : index
    %1 = vector.load %arg2[%c0_1, %c0_2] : memref<1x128xf32, #tpu.memory_space<vmem>>, vector<1x128xf32>
    %2 = vector.broadcast %1 : vector<1x128xf32> to vector<256x128xf32>
    %3 = arith.mulf %0, %2 : vector<256x128xf32>
    %c0_3 = arith.constant 0 : index
    %c0_4 = arith.constant 0 : index
    %4 = vector.load %arg3[%c0_3, %c0_4] : memref<1x128xf32, #tpu.memory_space<vmem>>, vector<1x128xf32>
    %5 = vector.broadcast %4 : vector<1x128xf32> to vector<256x128xf32>
    %6 = arith.addf %3, %5 : vector<256x128xf32>
    %cst = arith.constant 0.000000e+00 : f32
    %7 = vector.broadcast %cst : f32 to vector<256x128xf32>
    %8 = arith.maximumf %6, %7 : vector<256x128xf32>
    %c0_5 = arith.constant 0 : index
    %c0_6 = arith.constant 0 : index
    %9 = vector.load %arg4[%c0_5, %c0_6] : memref<256x128xf32, #tpu.memory_space<vmem>>, vector<256x128xf32>
    tpu.vector_store %arg4[%c0_5, %c0_6], %8 {strides = array<i32>} : memref<256x128xf32, #tpu.memory_space<vmem>>, vector<256x128xf32>,
    return
  }
  func.func @transform_0(%arg0: i32) -> (i32, i32) {
    %c0_i32 = arith.constant 0 : i32
    %c0_i32_0 = arith.constant 0 : i32
    return %arg0, %c0_i32 : i32, i32
  }
  func.func @transform_1(%arg0: i32) -> (i32, i32) {
    %c0_i32 = arith.constant 0 : i32
    %c0_i32_0 = arith.constant 0 : i32
    %c0_i32_1 = arith.constant 0 : i32
    return %c0_i32, %c0_i32_0 : i32, i32
  }
  func.func @transform_2(%arg0: i32) -> (i32, i32) {
    %c0_i32 = arith.constant 0 : i32
    %c0_i32_0 = arith.constant 0 : i32
    %c0_i32_1 = arith.constant 0 : i32
    return %c0_i32, %c0_i32_0 : i32, i32
  }
  func.func @transform_3(%arg0: i32) -> (i32, i32) {
    %c0_i32 = arith.constant 0 : i32
    %c0_i32_0 = arith.constant 0 : i32
    return %arg0, %c0_i32 : i32, i32
  }
}

</mosaic_0001>

<llo_original>
// kernel: vgg_block_forward.5
$region0: #{vgg_block_forward.5}
  #allocation0 [shape = 'u32[]', space=smem, size = 0x4, offset = 0x4, fixed_abs, tag = 'smem constant byte address 0x4 - core index']
  #allocation1 [shape = 'u32[72,128]{1,0:T(1,128)}', space=vmem, size = 0x9000, scoped, tag = 'internal scratch']
  %s0 = inlined_call_operand.vmem [shape: f32[512,128], index: 0, kind: input, shape index: {}]
  %s1 = inlined_call_operand.vmem [shape: f32[1,128], index: 1, kind: input, shape index: {}]
  %s2 = inlined_call_operand.vmem [shape: f32[1,128], index: 2, kind: input, shape index: {}]
  %s3 = inlined_call_operand.vmem [shape: f32[512,128], index: 3, kind: output, shape index: {}]
  %s4 = sld [smem:[#allocation0]]
  $region45: #{vgg_block_forward.5} parent=0
    _
  %s6 = ssub.s32 1, %s4
  %s7 = scalar_select 0, %s6, %s4
  loop: start=0, step=1, limit=4
  $region2: #{vgg_block_forward.5} parent=0 // loop_pre_header
    _
  $region3: #{vgg_block_forward.5} parent=0 // loop_header
    %s9 = sphi 0, %s13
    %p10 = scmp.ge.s32.totalorder %s9, 4
    %s19 = sphi 0, %s21
    %s22 = sphi 0, %s19
    %s23 = sphi 0, %s22
    %s39 = sphi 0, %s23
    %s43 = sphi 0, %s43
    %s45 = sphi 0, %s43
    %s46 = sphi 0, %s45
    %s60 = sphi 0, %s46
    %s64 = sphi 0, %s64
    %s66 = sphi 0, %s64
    %s67 = sphi 0, %s66
    %s81 = sphi 0, %s67
    %s87 = sphi 0, %s89
    %s90 = sphi 0, %s87
    %s91 = sphi 0, %s90
    %s107 = sphi 0, %s91
  $region4: #{vgg_block_forward.5} parent=0 // loop_header_branch
    %12 = sbr.rel (%p10) target = $region8
  $region5: #{vgg_block_forward.5} parent=0 // loop_body
    %s14 = ssub.s32 %s9, 1
    %s15 = ssub.s32 %s9, 2
    %s16 = sadd.s32 %s9, 1
    %s17 = ssub.s32 %s9, %s16
    %p18 = scmp.eq.s32.totalorder %s17, 0
    %s20 = sadd.s32 %s19, 1
    %s21 = scalar_select %p18, %s19, %s20
    %p24 = pneg %p18
    %p25 = scmp.eq.s32.totalorder %s9, 1
    %p26 = por %p24, %p25
    %p27 = scmp.ne.s32.totalorder %s19, %s22
    %p28 = scmp.eq.s32.totalorder %s9, 0
    %p29 = por %p27, %p28
    %p30 = scmp.ne.s32.totalorder %s19, %s22
    %p31 = scmp.eq.s32.totalorder %s14, 1
    %p32 = por %p30, %p31
    %p33 = scmp.ne.s32.totalorder %s22, %s23
    %p34 = scmp.eq.s32.totalorder %s14, 0
    %p35 = por %p33, %p34
    %p36 = scmp.ne.s32.totalorder %s22, %s23
    %p37 = scmp.eq.s32.totalorder %s15, 1
    %p38 = por %p36, %p37
    %p40 = scmp.ne.s32.totalorder %s23, %s39
    %p41 = scmp.eq.s32.totalorder %s15, 0
    %p42 = por %p40, %p41
    %s44 = sadd.s32 %s43, 1
    %p47 = scmp.eq.s32.totalorder %s9, 1
    %p48 = scmp.ne.s32.totalorder %s43, %s45
    %p49 = scmp.eq.s32.totalorder %s9, 0
    %p50 = por %p48, %p49
    %p51 = scmp.ne.s32.totalorder %s43, %s45
    %p52 = scmp.eq.s32.totalorder %s14, 1
    %p53 = por %p51, %p52
    %p54 = scmp.ne.s32.totalorder %s45, %s46
    %p55 = scmp.eq.s32.totalorder %s14, 0
    %p56 = por %p54, %p55
    %p57 = scmp.ne.s32.totalorder %s45, %s46
    %p58 = scmp.eq.s32.totalorder %s15, 1
    %p59 = por %p57, %p58
    %p61 = scmp.ne.s32.totalorder %s46, %s60
    %p62 = scmp.eq.s32.totalorder %s15, 0
    %p63 = por %p61, %p62
    %s65 = sadd.s32 %s64, 1
    %p68 = scmp.eq.s32.totalorder %s9, 1
    %p69 = scmp.ne.s32.totalorder %s64, %s66
    %p70 = scmp.eq.s32.totalorder %s9, 0
    %p71 = por %p69, %p70
    %p72 = scmp.ne.s32.totalorder %s64, %s66
    %p73 = scmp.eq.s32.totalorder %s14, 1
    %p74 = por %p72, %p73
    %p75 = scmp.ne.s32.totalorder %s66, %s67
    %p76 = scmp.eq.s32.totalorder %s14, 0
    %p77 = por %p75, %p76
    %p78 = scmp.ne.s32.totalorder %s66, %s67
    %p79 = scmp.eq.s32.totalorder %s15, 1
    %p80 = por %p78, %p79
    %p82 = scmp.ne.s32.totalorder %s67, %s81
    %p83 = scmp.eq.s32.totalorder %s15, 0
    %p84 = por %p82, %p83
    %s85 = ssub.s32 %s9, %s16
    %p86 = scmp.eq.s32.totalorder %s85, 0
    %s88 = sadd.s32 %s87, 1
    %s89 = scalar_select %p86, %s87, %s88
    %p92 = pneg %p86
    %p93 = scmp.eq.s32.totalorder %s9, 1
    %p94 = por %p92, %p93
    %p95 = scmp.ne.s32.totalorder %s87, %s90
    %p96 = scmp.eq.s32.totalorder %s9, 0
    %p97 = por %p95, %p96
    %p98 = scmp.ne.s32.totalorder %s87, %s90
    %p99 = scmp.eq.s32.totalorder %s14, 1
    %p100 = por %p98, %p99
    %p101 = scmp.ne.s32.totalorder %s90, %s91
    %p102 = scmp.eq.s32.totalorder %s14, 0
    %p103 = por %p101, %p102
    %p104 = scmp.ne.s32.totalorder %s90, %s91
    %p105 = scmp.eq.s32.totalorder %s15, 1
    %p106 = por %p104, %p105
    %p108 = scmp.ne.s32.totalorder %s91, %s107
    %p109 = scmp.eq.s32.totalorder %s15, 0
    %p110 = por %p108, %p109
    %p111 = scmp.le.s32.totalorder 1, %s9
    %p112 = scmp.lt.s32.totalorder %s9, 3
    %p113 = pnand %p111, %p112
    %p114 = pneg %p113
    // Predicated region
    $region9: #{vgg_block_forward.5} parent=5 // pred_check
      _
    $region10: #{vgg_block_forward.5} parent=5 // pred_check_branch
      %116 = sbr.rel (%p113) target = $region12
    $region11: #{vgg_block_forward.5} parent=5 // pred_region
      %s117 = ssub.s32 %s9, 1
      // Predicated region
      $region13: #{vgg_block_forward.5} parent=11 // pred_check
        %p118 = pneg %p56
      $region14: #{vgg_block_forward.5} parent=11 // pred_check_branch
        %120 = sbr.rel (%p118) target = $region16
      $region15: #{vgg_block_forward.5} parent=11 // pred_region
        _
      $region16: #{vgg_block_forward.5} parent=11 // pred_fallthru
        _
      // Predicated region
      $region17: #{vgg_block_forward.5} parent=11 // pred_check
        %p121 = pneg %p77
      $region18: #{vgg_block_forward.5} parent=11 // pred_check_branch
        %123 = sbr.rel (%p121) target = $region20
      $region19: #{vgg_block_forward.5} parent=11 // pred_region
        _
      $region20: #{vgg_block_forward.5} parent=11 // pred_fallthru
        _
    $region12: #{vgg_block_forward.5} parent=5 // pred_fallthru
      _
    %p124 = scmp.lt.s32.totalorder %s9, 2
    // Predicated region
    $region21: #{vgg_block_forward.5} parent=5 // pred_check
      %p125 = pneg %p124
    $region22: #{vgg_block_forward.5} parent=5 // pred_check_branch
      %127 = sbr.rel (%p125) target = $region24
    $region23: #{vgg_block_forward.5} parent=5 // pred_region
      // Predicated region
      $region25: #{vgg_block_forward.5} parent=23 // pred_check
        %p128 = pneg %p29
      $region26: #{vgg_block_forward.5} parent=23 // pred_check_branch
        %130 = sbr.rel (%p128) target = $region28
      $region27: #{vgg_block_forward.5} parent=23 // pred_region
        %s131 = smul.u32 32, %s9
        %p132 = scmp.lt.s32.totalorder %s131, 63
        %s133 = scalar_select %p132, %s131, 63
        %s134 = smul.addr %s133, 8
        %s135 = scalar_lea.vmem %s0, %s134
        %s136 = smul.u32 32, %s9
      $region28: #{vgg_block_forward.5} parent=23 // pred_fallthru
        _
    $region24: #{vgg_block_forward.5} parent=5 // pred_fallthru
      _
    %p137 = scmp.le.s32.totalorder 1, %s9
    %p138 = scmp.lt.s32.totalorder %s9, 3
    %p139 = pnand %p137, %p138
    %p140 = pneg %p139
    // Predicated region
    $region29: #{vgg_block_forward.5} parent=5 // pred_check
      _
    $region30: #{vgg_block_forward.5} parent=5 // pred_check_branch
      %142 = sbr.rel (%p139) target = $region32
    $region31: #{vgg_block_forward.5} parent=5 // pred_region
      %s143 = ssub.s32 %s9, 1
      %s144 = smul.u32 32, %s14
      %p145 = scmp.lt.s32.totalorder %s144, 63
      %s146 = scalar_select %p145, %s144, 63
      %s147 = smul.addr %s146, 8
      %s148 = scalar_lea.vmem %s0, %s147
      %p149 = pneg %p35
      %p150 = pneg %p32
      %p151 = pneg %p56
      %p152 = pneg %p53
      %p153 = pneg %p77
      %p154 = pneg %p74
      %p155 = pneg %p103
      %p156 = pneg %p100
      %s157 = smul.u32 32, %s14
      %p158 = scmp.lt.s32.totalorder %s157, 63
      %s159 = scalar_select %p158, %s157, 63
      %s160 = smul.addr %s159, 8
      %s161 = scalar_lea.vmem %s3, %s160
      %s162 = smul.u32 32, %s14
      %p163 = scmp.lt.s32.totalorder %s162, 63
      %s164 = scalar_select %p163, %s162, 63
      %s165 = smul.addr %s164, 8
      %s166 = scalar_lea.vmem %s0, %s165
      %s167 = smul.u32 32, %s14
      %s168 = smul.u32 32, %s14
      %p169 = scmp.lt.s32.totalorder %s168, 63
      %s170 = scalar_select %p169, %s168, 63
      %s171 = smul.addr %s170, 8
      %s172 = scalar_lea.vmem %s3, %s171
      %s173 = smul.u32 32, %s14
      %v174 = vld [vmem:[%s166] sm:$0xff]
      %v175 = vld [vmem:[%s166 + $0x8] sm:$0xff]
      %v176 = vld [vmem:[%s166 + $0x10] sm:$0xff]
      %v177 = vld [vmem:[%s166 + $0x18] sm:$0xff]
      %v178 = vld [vmem:[%s166 + $0x20] sm:$0xff]
      %v179 = vld [vmem:[%s166 + $0x28] sm:$0xff]
      %v180 = vld [vmem:[%s166 + $0x30] sm:$0xff]
      %v181 = vld [vmem:[%s166 + $0x38] sm:$0xff]
      %v182 = vld [vmem:[%s166 + $0x40] sm:$0xff]
      %v183 = vld [vmem:[%s166 + $0x48] sm:$0xff]
      %v184 = vld [vmem:[%s166 + $0x50] sm:$0xff]
      %v185 = vld [vmem:[%s166 + $0x58] sm:$0xff]
      %v186 = vld [vmem:[%s166 + $0x60] sm:$0xff]
      %v187 = vld [vmem:[%s166 + $0x68] sm:$0xff]
      %v188 = vld [vmem:[%s166 + $0x70] sm:$0xff]
      %v189 = vld [vmem:[%s166 + $0x78] sm:$0xff]
      %v190 = vld [vmem:[%s166 + $0x80] sm:$0xff]
      %v191 = vld [vmem:[%s166 + $0x88] sm:$0xff]
      %v192 = vld [vmem:[%s166 + $0x90] sm:$0xff]
      %v193 = vld [vmem:[%s166 + $0x98] sm:$0xff]
      %v194 = vld [vmem:[%s166 + $0xa0] sm:$0xff]
      %v195 = vld [vmem:[%s166 + $0xa8] sm:$0xff]
      %v196 = vld [vmem:[%s166 + $0xb0] sm:$0xff]
      %v197 = vld [vmem:[%s166 + $0xb8] sm:$0xff]
      %v198 = vld [vmem:[%s166 + $0xc0] sm:$0xff]
      %v199 = vld [vmem:[%s166 + $0xc8] sm:$0xff]
      %v200 = vld [vmem:[%s166 + $0xd0] sm:$0xff]
      %v201 = vld [vmem:[%s166 + $0xd8] sm:$0xff]
      %v202 = vld [vmem:[%s166 + $0xe0] sm:$0xff]
      %v203 = vld [vmem:[%s166 + $0xe8] sm:$0xff]
      %v204 = vld [vmem:[%s166 + $0xf0] sm:$0xff]
      %v205 = vld [vmem:[%s166 + $0xf8] sm:$0xff]
      %v206 = vld [vmem:[%s1] sm:$0x1]
      %v208 = vperm.slane %v206, 0
      %v210 = vmul.f32 %v174, %v208
      %v211 = vmul.f32 %v175, %v208
      %v212 = vmul.f32 %v176, %v208
      %v213 = vmul.f32 %v177, %v208
      %v214 = vmul.f32 %v178, %v208
      %v215 = vmul.f32 %v179, %v208
      %v216 = vmul.f32 %v180, %v208
      %v217 = vmul.f32 %v181, %v208
      %v218 = vmul.f32 %v182, %v208
      %v219 = vmul.f32 %v183, %v208
      %v220 = vmul.f32 %v184, %v208
      %v221 = vmul.f32 %v185, %v208
      %v222 = vmul.f32 %v186, %v208
      %v223 = vmul.f32 %v187, %v208
      %v224 = vmul.f32 %v188, %v208
      %v225 = vmul.f32 %v189, %v208
      %v226 = vmul.f32 %v190, %v208
      %v227 = vmul.f32 %v191, %v208
      %v228 = vmul.f32 %v192, %v208
      %v229 = vmul.f32 %v193, %v208
      %v230 = vmul.f32 %v194, %v208
      %v231 = vmul.f32 %v195, %v208
      %v232 = vmul.f32 %v196, %v208
      %v233 = vmul.f32 %v197, %v208
      %v234 = vmul.f32 %v198, %v208
      %v235 = vmul.f32 %v199, %v208
      %v236 = vmul.f32 %v200, %v208
      %v237 = vmul.f32 %v201, %v208
      %v238 = vmul.f32 %v202, %v208
      %v239 = vmul.f32 %v203, %v208
      %v240 = vmul.f32 %v204, %v208
      %v241 = vmul.f32 %v205, %v208
      %v242 = vld [vmem:[%s2] sm:$0x1]
      %v244 = vperm.slane %v242, 0
      %v246 = vadd.f32 %v210, %v244
      %v247 = vadd.f32 %v211, %v244
      %v248 = vadd.f32 %v212, %v244
      %v249 = vadd.f32 %v213, %v244
      %v250 = vadd.f32 %v214, %v244
      %v251 = vadd.f32 %v215, %v244
      %v252 = vadd.f32 %v216, %v244
      %v253 = vadd.f32 %v217, %v244
      %v254 = vadd.f32 %v218, %v244
      %v255 = vadd.f32 %v219, %v244
      %v256 = vadd.f32 %v220, %v244
      %v257 = vadd.f32 %v221, %v244
      %v258 = vadd.f32 %v222, %v244
      %v259 = vadd.f32 %v223, %v244
      %v260 = vadd.f32 %v224, %v244
      %v261 = vadd.f32 %v225, %v244
      %v262 = vadd.f32 %v226, %v244
      %v263 = vadd.f32 %v227, %v244
      %v264 = vadd.f32 %v228, %v244
      %v265 = vadd.f32 %v229, %v244
      %v266 = vadd.f32 %v230, %v244
      %v267 = vadd.f32 %v231, %v244
      %v268 = vadd.f32 %v232, %v244
      %v269 = vadd.f32 %v233, %v244
      %v270 = vadd.f32 %v234, %v244
      %v271 = vadd.f32 %v235, %v244
      %v272 = vadd.f32 %v236, %v244
      %v273 = vadd.f32 %v237, %v244
      %v274 = vadd.f32 %v238, %v244
      %v275 = vadd.f32 %v239, %v244
      %v276 = vadd.f32 %v240, %v244
      %v277 = vadd.f32 %v241, %v244
      %v278 = vmax.f32 %v246, 0.0
      %v279 = vmax.f32 %v247, 0.0
      %v280 = vmax.f32 %v248, 0.0
      %v281 = vmax.f32 %v249, 0.0
      %v282 = vmax.f32 %v250, 0.0
      %v283 = vmax.f32 %v251, 0.0
      %v284 = vmax.f32 %v252, 0.0
      %v285 = vmax.f32 %v253, 0.0
      %v286 = vmax.f32 %v254, 0.0
      %v287 = vmax.f32 %v255, 0.0
      %v288 = vmax.f32 %v256, 0.0
      %v289 = vmax.f32 %v257, 0.0
      %v290 = vmax.f32 %v258, 0.0
      %v291 = vmax.f32 %v259, 0.0
      %v292 = vmax.f32 %v260, 0.0
      %v293 = vmax.f32 %v261, 0.0
      %v294 = vmax.f32 %v262, 0.0
      %v295 = vmax.f32 %v263, 0.0
      %v296 = vmax.f32 %v264, 0.0
      %v297 = vmax.f32 %v265, 0.0
      %v298 = vmax.f32 %v266, 0.0
      %v299 = vmax.f32 %v267, 0.0
      %v300 = vmax.f32 %v268, 0.0
      %v301 = vmax.f32 %v269, 0.0
      %v302 = vmax.f32 %v270, 0.0
      %v303 = vmax.f32 %v271, 0.0
      %v304 = vmax.f32 %v272, 0.0
      %v305 = vmax.f32 %v273, 0.0
      %v306 = vmax.f32 %v274, 0.0
      %v307 = vmax.f32 %v275, 0.0
      %v308 = vmax.f32 %v276, 0.0
      %v309 = vmax.f32 %v277, 0.0
      %310 = vst [vmem:[%s172] sm:$0xff] %v278
      %311 = vst [vmem:[%s172 + $0x8] sm:$0xff] %v279
      %312 = vst [vmem:[%s172 + $0x10] sm:$0xff] %v280
      %313 = vst [vmem:[%s172 + $0x18] sm:$0xff] %v281
      %314 = vst [vmem:[%s172 + $0x20] sm:$0xff] %v282
      %315 = vst [vmem:[%s172 + $0x28] sm:$0xff] %v283
      %316 = vst [vmem:[%s172 + $0x30] sm:$0xff] %v284
      %317 = vst [vmem:[%s172 + $0x38] sm:$0xff] %v285
      %318 = vst [vmem:[%s172 + $0x40] sm:$0xff] %v286
      %319 = vst [vmem:[%s172 + $0x48] sm:$0xff] %v287
      %320 = vst [vmem:[%s172 + $0x50] sm:$0xff] %v288
      %321 = vst [vmem:[%s172 + $0x58] sm:$0xff] %v289
      %322 = vst [vmem:[%s172 + $0x60] sm:$0xff] %v290
      %323 = vst [vmem:[%s172 + $0x68] sm:$0xff] %v291
      %324 = vst [vmem:[%s172 + $0x70] sm:$0xff] %v292
      %325 = vst [vmem:[%s172 + $0x78] sm:$0xff] %v293
      %326 = vst [vmem:[%s172 + $0x80] sm:$0xff] %v294
      %327 = vst [vmem:[%s172 + $0x88] sm:$0xff] %v295
      %328 = vst [vmem:[%s172 + $0x90] sm:$0xff] %v296
      %329 = vst [vmem:[%s172 + $0x98] sm:$0xff] %v297
      %330 = vst [vmem:[%s172 + $0xa0] sm:$0xff] %v298
      %331 = vst [vmem:[%s172 + $0xa8] sm:$0xff] %v299
      %332 = vst [vmem:[%s172 + $0xb0] sm:$0xff] %v300
      %333 = vst [vmem:[%s172 + $0xb8] sm:$0xff] %v301
      %334 = vst [vmem:[%s172 + $0xc0] sm:$0xff] %v302
      %335 = vst [vmem:[%s172 + $0xc8] sm:$0xff] %v303
      %336 = vst [vmem:[%s172 + $0xd0] sm:$0xff] %v304
      %337 = vst [vmem:[%s172 + $0xd8] sm:$0xff] %v305
      %338 = vst [vmem:[%s172 + $0xe0] sm:$0xff] %v306
      %339 = vst [vmem:[%s172 + $0xe8] sm:$0xff] %v307
      %340 = vst [vmem:[%s172 + $0xf0] sm:$0xff] %v308
      %341 = vst [vmem:[%s172 + $0xf8] sm:$0xff] %v309
      %s342 = smul.u32 32, %s14
      %p343 = scmp.lt.s32.totalorder %s342, 63
      %s344 = scalar_select %p343, %s342, 63
      %s345 = smul.addr %s344, 8
      %s346 = scalar_lea.vmem %s3, %s345
      // Predicated region
      $region33: #{vgg_block_forward.5} parent=31 // pred_check
        %p347 = pneg %p100
      $region34: #{vgg_block_forward.5} parent=31 // pred_check_branch
        %349 = sbr.rel (%p347) target = $region36
      $region35: #{vgg_block_forward.5} parent=31 // pred_region
        %s350 = smul.u32 32, %s14
      $region36: #{vgg_block_forward.5} parent=31 // pred_fallthru
        _
    $region32: #{vgg_block_forward.5} parent=5 // pred_fallthru
      _
    %p351 = scmp.le.s32.totalorder 2, %s9
    // Predicated region
    $region37: #{vgg_block_forward.5} parent=5 // pred_check
      %p352 = pneg %p351
    $region38: #{vgg_block_forward.5} parent=5 // pred_check_branch
      %354 = sbr.rel (%p352) target = $region40
    $region39: #{vgg_block_forward.5} parent=5 // pred_region
      %s355 = ssub.s32 %s9, 2
      // Predicated region
      $region41: #{vgg_block_forward.5} parent=39 // pred_check
        %p356 = pneg %p106
      $region42: #{vgg_block_forward.5} parent=39 // pred_check_branch
        %358 = sbr.rel (%p356) target = $region44
      $region43: #{vgg_block_forward.5} parent=39 // pred_region
        %s359 = smul.u32 32, %s15
        %p360 = scmp.lt.s32.totalorder %s359, 63
        %s361 = scalar_select %p360, %s359, 63
        %s362 = smul.addr %s361, 8
        %s363 = scalar_lea.vmem %s3, %s362
      $region44: #{vgg_block_forward.5} parent=39 // pred_fallthru
        _
    $region40: #{vgg_block_forward.5} parent=5 // pred_fallthru
      _
  $region6: #{vgg_block_forward.5} parent=0 // loop_footer
    %s13 = sadd.s32 1, %s9
  $region7: #{vgg_block_forward.5} parent=0 // loop_footer_branch
    %8 = sbr.rel target = $region3
  $region8: #{vgg_block_forward.5} parent=0 // loop_exit
    _

// kernel: vgg_block_forward.3
$region0: #{vgg_block_forward.3}
  #allocation0 [shape = 'u32[]', space=smem, size = 0x4, offset = 0x4, fixed_abs, tag = 'smem constant byte address 0x4 - core index']
  #allocation1 [shape = 'u32[72,128]{1,0:T(1,128)}', space=vmem, size = 0x9000, scoped, tag = 'internal scratch']
  #allocation2 [shape = 'f32[18,18,128]{2,1,0:T(8,128)}', space=vmem, size = 0x36000, scoped, tag = 'scratch operand']
  %s0 = inlined_call_operand.vmem [shape: bf16[2,16,16,128], index: 0, kind: input, shape index: {}]
  %s1 = inlined_call_operand.vmem [shape: bf16[9,128,128], index: 1, kind: input, shape index: {}]
  %s2 = inlined_call_operand.vmem [shape: f32[2,16,16,128], index: 2, kind: output, shape index: {0}]
  %s3 = inlined_call_operand.vmem [shape: f32[2,128], index: 3, kind: output, shape index: {1}]
  %4 = xla_tuple %s2, %s3
  %s5 = sld [smem:[#allocation0]]
  $region53: #{vgg_block_forward.3} parent=0
    _
  %s7 = ssub.s32 1, %s5
  %s8 = scalar_select 0, %s7, %s5
  loop: start=0, step=1, limit=4
  $region2: #{vgg_block_forward.3} parent=0 // loop_pre_header
    _
  $region3: #{vgg_block_forward.3} parent=0 // loop_header
    %s10 = sphi 0, %s14
    %p11 = scmp.ge.s32.totalorder %s10, 4
    %s20 = sphi 0, %s22
    %s23 = sphi 0, %s20
    %s24 = sphi 0, %s23
    %s40 = sphi 0, %s24
    %s44 = sphi 0, %s44
    %s46 = sphi 0, %s44
    %s47 = sphi 0, %s46
    %s61 = sphi 0, %s47
    %s67 = sphi 0, %s69
    %s70 = sphi 0, %s67
    %s71 = sphi 0, %s70
    %s87 = sphi 0, %s71
    %s91 = sphi 0, %s91
    %s93 = sphi 0, %s91
    %s94 = sphi 0, %s93
    %s108 = sphi 0, %s94
  $region4: #{vgg_block_forward.3} parent=0 // loop_header_branch
    %13 = sbr.rel (%p11) target = $region8
  $region5: #{vgg_block_forward.3} parent=0 // loop_body
    %s15 = ssub.s32 %s10, 1
    %s16 = ssub.s32 %s10, 2
    %s17 = sadd.s32 %s10, 1
    %s18 = ssub.s32 %s10, %s17
    %p19 = scmp.eq.s32.totalorder %s18, 0
    %s21 = sadd.s32 %s20, 1
    %s22 = scalar_select %p19, %s20, %s21
    %p25 = pneg %p19
    %p26 = scmp.eq.s32.totalorder %s10, 1
    %p27 = por %p25, %p26
    %p28 = scmp.ne.s32.totalorder %s20, %s23
    %p29 = scmp.eq.s32.totalorder %s10, 0
    %p30 = por %p28, %p29
    %p31 = scmp.ne.s32.totalorder %s20, %s23
    %p32 = scmp.eq.s32.totalorder %s15, 1
    %p33 = por %p31, %p32
    %p34 = scmp.ne.s32.totalorder %s23, %s24
    %p35 = scmp.eq.s32.totalorder %s15, 0
    %p36 = por %p34, %p35
    %p37 = scmp.ne.s32.totalorder %s23, %s24
    %p38 = scmp.eq.s32.totalorder %s16, 1
    %p39 = por %p37, %p38
    %p41 = scmp.ne.s32.totalorder %s24, %s40
    %p42 = scmp.eq.s32.totalorder %s16, 0
    %p43 = por %p41, %p42
    %s45 = sadd.s32 %s44, 1
    %p48 = scmp.eq.s32.totalorder %s10, 1
    %p49 = scmp.ne.s32.totalorder %s44, %s46
    %p50 = scmp.eq.s32.totalorder %s10, 0
    %p51 = por %p49, %p50
    %p52 = scmp.ne.s32.totalorder %s44, %s46
    %p53 = scmp.eq.s32.totalorder %s15, 1
    %p54 = por %p52, %p53
    %p55 = scmp.ne.s32.totalorder %s46, %s47
    %p56 = scmp.eq.s32.totalorder %s15, 0
    %p57 = por %p55, %p56
    %p58 = scmp.ne.s32.totalorder %s46, %s47
    %p59 = scmp.eq.s32.totalorder %s16, 1
    %p60 = por %p58, %p59
    %p62 = scmp.ne.s32.totalorder %s47, %s61
    %p63 = scmp.eq.s32.totalorder %s16, 0
    %p64 = por %p62, %p63
    %s65 = ssub.s32 %s10, %s17
    %p66 = scmp.eq.s32.totalorder %s65, 0
    %s68 = sadd.s32 %s67, 1
    %s69 = scalar_select %p66, %s67, %s68
    %p72 = pneg %p66
    %p73 = scmp.eq.s32.totalorder %s10, 1
    %p74 = por %p72, %p73
    %p75 = scmp.ne.s32.totalorder %s67, %s70
    %p76 = scmp.eq.s32.totalorder %s10, 0
    %p77 = por %p75, %p76
    %p78 = scmp.ne.s32.totalorder %s67, %s70
    %p79 = scmp.eq.s32.totalorder %s15, 1
    %p80 = por %p78, %p79
    %p81 = scmp.ne.s32.totalorder %s70, %s71
    %p82 = scmp.eq.s32.totalorder %s15, 0
    %p83 = por %p81, %p82
    %p84 = scmp.ne.s32.totalorder %s70, %s71
    %p85 = scmp.eq.s32.totalorder %s16, 1
    %p86 = por %p84, %p85
    %p88 = scmp.ne.s32.totalorder %s71, %s87
    %p89 = scmp.eq.s32.totalorder %s16, 0
    %p90 = por %p88, %p89
    %s92 = sadd.s32 %s91, 1
    %p95 = scmp.eq.s32.totalorder %s10, 1
    %p96 = scmp.ne.s32.totalorder %s91, %s93
    %p97 = scmp.eq.s32.totalorder %s10, 0
    %p98 = por %p96, %p97
    %p99 = scmp.ne.s32.totalorder %s91, %s93
    %p100 = scmp.eq.s32.totalorder %s15, 1
    %p101 = por %p99, %p100
    %p102 = scmp.ne.s32.totalorder %s93, %s94
    %p103 = scmp.eq.s32.totalorder %s15, 0
    %p104 = por %p102, %p103
    %p105 = scmp.ne.s32.totalorder %s93, %s94
    %p106 = scmp.eq.s32.totalorder %s16, 1
    %p107 = por %p105, %p106
    %p109 = scmp.ne.s32.totalorder %s94, %s108
    %p110 = scmp.eq.s32.totalorder %s16, 0
    %p111 = por %p109, %p110
    %p112 = scmp.le.s32.totalorder 1, %s10
    %p113 = scmp.lt.s32.totalorder %s10, 3
    %p114 = pnand %p112, %p113
    %p115 = pneg %p114
    // Predicated region
    $region9: #{vgg_block_forward.3} parent=5 // pred_check
      _
    $region10: #{vgg_block_forward.3} parent=5 // pred_check_branch
      %117 = sbr.rel (%p114) target = $region12
    $region11: #{vgg_block_forward.3} parent=5 // pred_region
      %s118 = ssub.s32 %s10, 1
      // Predicated region
      $region13: #{vgg_block_forward.3} parent=11 // pred_check
        %p119 = pneg %p57
      $region14: #{vgg_block_forward.3} parent=11 // pred_check_branch
        %121 = sbr.rel (%p119) target = $region16
      $region15: #{vgg_block_forward.3} parent=11 // pred_region
        _
      $region16: #{vgg_block_forward.3} parent=11 // pred_fallthru
        _
    $region12: #{vgg_block_forward.3} parent=5 // pred_fallthru
      _
    %p122 = scmp.lt.s32.totalorder %s10, 2
    // Predicated region
    $region17: #{vgg_block_forward.3} parent=5 // pred_check
      %p123 = pneg %p122
    $region18: #{vgg_block_forward.3} parent=5 // pred_check_branch
      %125 = sbr.rel (%p123) target = $region20
    $region19: #{vgg_block_forward.3} parent=5 // pred_region
      // Predicated region
      $region21: #{vgg_block_forward.3} parent=19 // pred_check
        %p126 = pneg %p30
      $region22: #{vgg_block_forward.3} parent=19 // pred_check_branch
        %128 = sbr.rel (%p126) target = $region24
      $region23: #{vgg_block_forward.3} parent=19 // pred_region
        %p129 = scmp.lt.s32.totalorder %s10, 1
        %s130 = scalar_select %p129, %s10, 1
        %s131 = smul.addr %s130, 32
        %s132 = smul.addr %s131, 4
        %s133 = scalar_lea.vmem %s0, %s132
      $region24: #{vgg_block_forward.3} parent=19 // pred_fallthru
        _
    $region20: #{vgg_block_forward.3} parent=5 // pred_fallthru
      _
    %p134 = scmp.le.s32.totalorder 1, %s10
    %p135 = scmp.lt.s32.totalorder %s10, 3
    %p136 = pnand %p134, %p135
    %p137 = pneg %p136
    // Predicated region
    $region25: #{vgg_block_forward.3} parent=5 // pred_check
      _
    $region26: #{vgg_block_forward.3} parent=5 // pred_check_branch
      %139 = sbr.rel (%p136) target = $region28
    $region27: #{vgg_block_forward.3} parent=5 // pred_region
      %s140 = ssub.s32 %s10, 1
      %p141 = scmp.lt.s32.totalorder %s15, 1
      %s142 = scalar_select %p141, %s15, 1
      %s143 = smul.addr %s142, 32
      %s144 = smul.addr %s143, 4
      %s145 = scalar_lea.vmem %s0, %s144
      %p146 = pneg %p36
      %p147 = pneg %p33
      %p148 = pneg %p57
      %p149 = pneg %p54
      %p150 = pneg %p83
      %p151 = pneg %p80
      %p152 = scmp.lt.s32.totalorder %s15, 1
      %s153 = scalar_select %p152, %s15, 1
      %s154 = smul.addr %s153, 32
      %s155 = smul.addr %s154, 8
      %s156 = scalar_lea.vmem %s2, %s155
      %p157 = pneg %p104
      %p158 = pneg %p101
      %p159 = scmp.lt.s32.totalorder %s15, 1
      %s160 = scalar_select %p159, %s15, 1
      %s161 = smul.addr %s160, 32
      %s162 = smul.addr %s161, 4
      %s163 = scalar_lea.vmem %s0, %s162
      %p164 = scmp.lt.s32.totalorder %s15, 1
      %s165 = scalar_select %p164, %s15, 1
      %s166 = smul.addr %s165, 32
      %s167 = smul.addr %s166, 8
      %s168 = scalar_lea.vmem %s2, %s167
      %p169 = scmp.eq.s32.totalorder %s15, 0
      // Predicated region
      $region29: #{vgg_block_forward.3} parent=27 // pred_check
        %p170 = pneg %p169
      $region30: #{vgg_block_forward.3} parent=27 // pred_check_branch
        %172 = sbr.rel (%p170) target = $region32
      $region31: #{vgg_block_forward.3} parent=27 // pred_region
        %173 = vst [vmem:[#allocation2] sm:$0xff] 0.0
        %174 = vst [vmem:[#allocation2 + $0x8] sm:$0xff] 0.0
        %175 = vst [vmem:[#allocation2 + $0x10] sm:$0x3] 0.0
        %176 = vst [vmem:[#allocation2 + $0x18] sm:$0xff] 0.0
        %177 = vst [vmem:[#allocation2 + $0x20] sm:$0xff] 0.0
        %178 = vst [vmem:[#allocation2 + $0x28] sm:$0x3] 0.0
        %179 = vst [vmem:[#allocation2 + $0x30] sm:$0xff] 0.0
        %180 = vst [vmem:[#allocation2 + $0x38] sm:$0xff] 0.0
        %181 = vst [vmem:[#allocation2 + $0x40] sm:$0x3] 0.0
        %182 = vst [vmem:[#allocation2 + $0x48] sm:$0xff] 0.0
        %183 = vst [vmem:[#allocation2 + $0x50] sm:$0xff] 0.0
        %184 = vst [vmem:[#allocation2 + $0x58] sm:$0x3] 0.0
        %185 = vst [vmem:[#allocation2 + $0x60] sm:$0xff] 0.0
        %186 = vst [vmem:[#allocation2 + $0x68] sm:$0xff] 0.0
        %187 = vst [vmem:[#allocation2 + $0x70] sm:$0x3] 0.0
        %188 = vst [vmem:[#allocation2 + $0x78] sm:$0xff] 0.0
        %189 = vst [vmem:[#allocation2 + $0x80] sm:$0xff] 0.0
        %190 = vst [vmem:[#allocation2 + $0x88] sm:$0x3] 0.0
        %191 = vst [vmem:[#allocation2 + $0x90] sm:$0xff] 0.0
        %192 = vst [vmem:[#allocation2 + $0x98] sm:$0xff] 0.0
        %193 = vst [vmem:[#allocation2 + $0xa0] sm:$0x3] 0.0
        %194 = vst [vmem:[#allocation2 + $0xa8] sm:$0xff] 0.0
        %195 = vst [vmem:[#allocation2 + $0xb0] sm:$0xff] 0.0
        %196 = vst [vmem:[#allocation2 + $0xb8] sm:$0x3] 0.0
        %197 = vst [vmem:[#allocation2 + $0xc0] sm:$0xff] 0.0
        %198 = vst [vmem:[#allocation2 + $0xc8] sm:$0xff] 0.0
        %199 = vst [vmem:[#allocation2 + $0xd0] sm:$0x3] 0.0
        %200 = vst [vmem:[#allocation2 + $0xd8] sm:$0xff] 0.0
        %201 = vst [vmem:[#allocation2 + $0xe0] sm:$0xff] 0.0
        %202 = vst [vmem:[#allocation2 + $0xe8] sm:$0x3] 0.0
        %203 = vst [vmem:[#allocation2 + $0xf0] sm:$0xff] 0.0
        %204 = vst [vmem:[#allocation2 + $0xf8] sm:$0xff] 0.0
        %205 = vst [vmem:[#allocation2 + $0x100] sm:$0x3] 0.0
        %206 = vst [vmem:[#allocation2 + $0x108] sm:$0xff] 0.0
        %207 = vst [vmem:[#allocation2 + $0x110] sm:$0xff] 0.0
        %208 = vst [vmem:[#allocation2 + $0x118] sm:$0x3] 0.0
        %209 = vst [vmem:[#allocation2 + $0x120] sm:$0xff] 0.0
        %210 = vst [vmem:[#allocation2 + $0x128] sm:$0xff] 0.0
        %211 = vst [vmem:[#allocation2 + $0x130] sm:$0x3] 0.0
        %212 = vst [vmem:[#allocation2 + $0x138] sm:$0xff] 0.0
        %213 = vst [vmem:[#allocation2 + $0x140] sm:$0xff] 0.0
        %214 = vst [vmem:[#allocation2 + $0x148] sm:$0x3] 0.0
        %215 = vst [vmem:[#allocation2 + $0x150] sm:$0xff] 0.0
        %216 = vst [vmem:[#allocation2 + $0x158] sm:$0xff] 0.0
        %217 = vst [vmem:[#allocation2 + $0x160] sm:$0x3] 0.0
        %218 = vst [vmem:[#allocation2 + $0x168] sm:$0xff] 0.0
        %219 = vst [vmem:[#allocation2 + $0x170] sm:$0xff] 0.0
        %220 = vst [vmem:[#allocation2 + $0x178] sm:$0x3] 0.0
        %221 = vst [vmem:[#allocation2 + $0x180] sm:$0xff] 0.0
        %222 = vst [vmem:[#allocation2 + $0x188] sm:$0xff] 0.0
        %223 = vst [vmem:[#allocation2 + $0x190] sm:$0x3] 0.0
        %224 = vst [vmem:[#allocation2 + $0x198] sm:$0xff] 0.0
        %225 = vst [vmem:[#allocation2 + $0x1a0] sm:$0xff] 0.0
        %226 = vst [vmem:[#allocation2 + $0x1a8] sm:$0x3] 0.0
        %227 = vst [vmem:[%s3] sm:$0x3] 0.0
      $region32: #{vgg_block_forward.3} parent=27 // pred_fallthru
        _
      %v228 = vld [vmem:[%s163] sm:$0xf]
      %v229 = vld [vmem:[%s163 + $0x4] sm:$0xf]
      %v230 = vld [vmem:[%s163 + $0x8] sm:$0xf]
      %v231 = vld [vmem:[%s163 + $0xc] sm:$0xf]
      %v232 = vld [vmem:[%s163 + $0x10] sm:$0xf]
      %v233 = vld [vmem:[%s163 + $0x14] sm:$0xf]
      %v234 = vld [vmem:[%s163 + $0x18] sm:$0xf]
      %v235 = vld [vmem:[%s163 + $0x1c] sm:$0xf]
      %v236 = vld [vmem:[%s163 + $0x20] sm:$0xf]
      %v237 = vld [vmem:[%s163 + $0x24] sm:$0xf]
      %v238 = vld [vmem:[%s163 + $0x28] sm:$0xf]
      %v239 = vld [vmem:[%s163 + $0x2c] sm:$0xf]
      %v240 = vld [vmem:[%s163 + $0x30] sm:$0xf]
      %v241 = vld [vmem:[%s163 + $0x34] sm:$0xf]
      %v242 = vld [vmem:[%s163 + $0x38] sm:$0xf]
      %v243 = vld [vmem:[%s163 + $0x3c] sm:$0xf]
      %v244 = vld [vmem:[%s163 + $0x40] sm:$0xf]
      %v245 = vld [vmem:[%s163 + $0x44] sm:$0xf]
      %v246 = vld [vmem:[%s163 + $0x48] sm:$0xf]
      %v247 = vld [vmem:[%s163 + $0x4c] sm:$0xf]
      %v248 = vld [vmem:[%s163 + $0x50] sm:$0xf]
      %v249 = vld [vmem:[%s163 + $0x54] sm:$0xf]
      %v250 = vld [vmem:[%s163 + $0x58] sm:$0xf]
      %v251 = vld [vmem:[%s163 + $0x5c] sm:$0xf]
      %v252 = vld [vmem:[%s163 + $0x60] sm:$0xf]
      %v253 = vld [vmem:[%s163 + $0x64] sm:$0xf]
      %v254 = vld [vmem:[%s163 + $0x68] sm:$0xf]
      %v255 = vld [vmem:[%s163 + $0x6c] sm:$0xf]
      %v256 = vld [vmem:[%s163 + $0x70] sm:$0xf]
      %v257 = vld [vmem:[%s163 + $0x74] sm:$0xf]
      %v258 = vld [vmem:[%s163 + $0x78] sm:$0xf]
      %v259 = vld [vmem:[%s163 + $0x7c] sm:$0xf]
      %v260 = vunpack.c.l.bf16 %v228
      %v261 = vunpack.c.l.bf16 %v229
      %v262 = vunpack.c.l.bf16 %v230
      %v263 = vunpack.c.l.bf16 %v231
      %v264 = vunpack.c.l.bf16 %v232
      %v265 = vunpack.c.l.bf16 %v233
      %v266 = vunpack.c.l.bf16 %v234
      %v267 = vunpack.c.l.bf16 %v235
      %v268 = vunpack.c.l.bf16 %v236
      %v269 = vunpack.c.l.bf16 %v237
      %v270 = vunpack.c.l.bf16 %v238
      %v271 = vunpack.c.l.bf16 %v239
      %v272 = vunpack.c.l.bf16 %v240
      %v273 = vunpack.c.l.bf16 %v241
      %v274 = vunpack.c.l.bf16 %v242
      %v275 = vunpack.c.l.bf16 %v243
      %v276 = vunpack.c.l.bf16 %v244
      %v277 = vunpack.c.l.bf16 %v245
      %v278 = vunpack.c.l.bf16 %v246
      %v279 = vunpack.c.l.bf16 %v247
      %v280 = vunpack.c.l.bf16 %v248
      %v281 = vunpack.c.l.bf16 %v249
      %v282 = vunpack.c.l.bf16 %v250
      %v283 = vunpack.c.l.bf16 %v251
      %v284 = vunpack.c.l.bf16 %v252
      %v285 = vunpack.c.l.bf16 %v253
      %v286 = vunpack.c.l.bf16 %v254
      %v287 = vunpack.c.l.bf16 %v255
      %v288 = vunpack.c.l.bf16 %v256
      %v289 = vunpack.c.l.bf16 %v257
      %v290 = vunpack.c.l.bf16 %v258
      %v291 = vunpack.c.l.bf16 %v259
      %s292 = scalar_lea.vmem [#allocation2], 24
      %293 = vst [vmem:[%s292 + $0x1] sm:$0xff] %v260
      %294 = vst [vmem:[%s292 + $0x9] sm:$0xff] %v261
      %295 = vst [vmem:[%s292 + $0x19] sm:$0xff] %v262
      %296 = vst [vmem:[%s292 + $0x21] sm:$0xff] %v263
      %297 = vst [vmem:[%s292 + $0x31] sm:$0xff] %v264
      %298 = vst [vmem:[%s292 + $0x39] sm:$0xff] %v265
      %299 = vst [vmem:[%s292 + $0x49] sm:$0xff] %v266
      %300 = vst [vmem:[%s292 + $0x51] sm:$0xff] %v267
      %301 = vst [vmem:[%s292 + $0x61] sm:$0xff] %v268
      %302 = vst [vmem:[%s292 + $0x69] sm:$0xff] %v269
      %303 = vst [vmem:[%s292 + $0x79] sm:$0xff] %v270
      %304 = vst [vmem:[%s292 + $0x81] sm:$0xff] %v271
      %305 = vst [vmem:[%s292 + $0x91] sm:$0xff] %v272
      %306 = vst [vmem:[%s292 + $0x99] sm:$0xff] %v273
      %307 = vst [vmem:[%s292 + $0xa9] sm:$0xff] %v274
      %308 = vst [vmem:[%s292 + $0xb1] sm:$0xff] %v275
      %309 = vst [vmem:[%s292 + $0xc1] sm:$0xff] %v276
      %310 = vst [vmem:[%s292 + $0xc9] sm:$0xff] %v277
      %311 = vst [vmem:[%s292 + $0xd9] sm:$0xff] %v278
      %312 = vst [vmem:[%s292 + $0xe1] sm:$0xff] %v279
      %313 = vst [vmem:[%s292 + $0xf1] sm:$0xff] %v280
      %314 = vst [vmem:[%s292 + $0xf9] sm:$0xff] %v281
      %315 = vst [vmem:[%s292 + $0x109] sm:$0xff] %v282
      %316 = vst [vmem:[%s292 + $0x111] sm:$0xff] %v283
      %317 = vst [vmem:[%s292 + $0x121] sm:$0xff] %v284
      %318 = vst [vmem:[%s292 + $0x129] sm:$0xff] %v285
      %319 = vst [vmem:[%s292 + $0x139] sm:$0xff] %v286
      %320 = vst [vmem:[%s292 + $0x141] sm:$0xff] %v287
      %321 = vst [vmem:[%s292 + $0x151] sm:$0xff] %v288
      %322 = vst [vmem:[%s292 + $0x159] sm:$0xff] %v289
      %323 = vst [vmem:[%s292 + $0x169] sm:$0xff] %v290
      %324 = vst [vmem:[%s292 + $0x171] sm:$0xff] %v291
      %v325 = vld [vmem:[#allocation2] sm:$0xff]
      %v326 = vld [vmem:[#allocation2 + $0x8] sm:$0xff]
      %v327 = vld [vmem:[#allocation2 + $0x18] sm:$0xff]
      %v328 = vld [vmem:[#allocation2 + $0x20] sm:$0xff]
      %v329 = vld [vmem:[#allocation2 + $0x30] sm:$0xff]
      %v330 = vld [vmem:[#allocation2 + $0x38] sm:$0xff]
      %v331 = vld [vmem:[#allocation2 + $0x48] sm:$0xff]
      %v332 = vld [vmem:[#allocation2 + $0x50] sm:$0xff]
      %v333 = vld [vmem:[#allocation2 + $0x60] sm:$0xff]
      %v334 = vld [vmem:[#allocation2 + $0x68] sm:$0xff]
      %v335 = vld [vmem:[#allocation2 + $0x78] sm:$0xff]
      %v336 = vld [vmem:[#allocation2 + $0x80] sm:$0xff]
      %v337 = vld [vmem:[#allocation2 + $0x90] sm:$0xff]
      %v338 = vld [vmem:[#allocation2 + $0x98] sm:$0xff]
      %v339 = vld [vmem:[#allocation2 + $0xa8] sm:$0xff]
      %v340 = vld [vmem:[#allocation2 + $0xb0] sm:$0xff]
      %v341 = vld [vmem:[#allocation2 + $0xc0] sm:$0xff]
      %v342 = vld [vmem:[#allocation2 + $0xc8] sm:$0xff]
      %v343 = vld [vmem:[#allocation2 + $0xd8] sm:$0xff]
      %v344 = vld [vmem:[#allocation2 + $0xe0] sm:$0xff]
      %v345 = vld [vmem:[#allocation2 + $0xf0] sm:$0xff]
      %v346 = vld [vmem:[#allocation2 + $0xf8] sm:$0xff]
      %v347 = vld [vmem:[#allocation2 + $0x108] sm:$0xff]
      %v348 = vld [vmem:[#allocation2 + $0x110] sm:$0xff]
      %v349 = vld [vmem:[#allocation2 + $0x120] sm:$0xff]
      %v350 = vld [vmem:[#allocation2 + $0x128] sm:$0xff]
      %v351 = vld [vmem:[#allocation2 + $0x138] sm:$0xff]
      %v352 = vld [vmem:[#allocation2 + $0x140] sm:$0xff]
      %v353 = vld [vmem:[#allocation2 + $0x150] sm:$0xff]
      %v354 = vld [vmem:[#allocation2 + $0x158] sm:$0xff]
      %v355 = vld [vmem:[#allocation2 + $0x168] sm:$0xff]
      %v356 = vld [vmem:[#allocation2 + $0x170] sm:$0xff]
      %v357 = vpack.c.bf16 %v326, %v325
      %v358 = vpack.c.bf16 %v328, %v327
      %v359 = vpack.c.bf16 %v330, %v329
      %v360 = vpack.c.bf16 %v332, %v331
      %v361 = vpack.c.bf16 %v334, %v333
      %v362 = vpack.c.bf16 %v336, %v335
      %v363 = vpack.c.bf16 %v338, %v337
      %v364 = vpack.c.bf16 %v340, %v339
      %v365 = vpack.c.bf16 %v342, %v341
      %v366 = vpack.c.bf16 %v344, %v343
      %v367 = vpack.c.bf16 %v346, %v345
      %v368 = vpack.c.bf16 %v348, %v347
      %v369 = vpack.c.bf16 %v350, %v349
      %v370 = vpack.c.bf16 %v352, %v351
      %v371 = vpack.c.bf16 %v354, %v353
      %v372 = vpack.c.bf16 %v356, %v355
      %v373 = vld [vmem:[%s1] sm:$0xf]
      %v374 = vld [vmem:[%s1 + $0x4] sm:$0xf]
      %v375 = vld [vmem:[%s1 + $0x8] sm:$0xf]
      %v376 = vld [vmem:[%s1 + $0xc] sm:$0xf]
      %v377 = vld [vmem:[%s1 + $0x10] sm:$0xf]
      %v378 = vld [vmem:[%s1 + $0x14] sm:$0xf]
      %v379 = vld [vmem:[%s1 + $0x18] sm:$0xf]
      %v380 = vld [vmem:[%s1 + $0x1c] sm:$0xf]
      %v381 = vld [vmem:[%s1 + $0x20] sm:$0xf]
      %v382 = vld [vmem:[%s1 + $0x24] sm:$0xf]
      %v383 = vld [vmem:[%s1 + $0x28] sm:$0xf]
      %v384 = vld [vmem:[%s1 + $0x2c] sm:$0xf]
      %v385 = vld [vmem:[%s1 + $0x30] sm:$0xf]
      %v386 = vld [vmem:[%s1 + $0x34] sm:$0xf]
      %v387 = vld [vmem:[%s1 + $0x38] sm:$0xf]
      %v388 = vld [vmem:[%s1 + $0x3c] sm:$0xf]
      %v389 = vld [vmem:[#allocation2 + $0x1] sm:$0xff]
      %v390 = vld [vmem:[#allocation2 + $0x9] sm:$0xff]
      %v391 = vld [vmem:[#allocation2 + $0x19] sm:$0xff]
      %v392 = vld [vmem:[#allocation2 + $0x21] sm:$0xff]
      %v393 = vld [vmem:[#allocation2 + $0x31] sm:$0xff]
      %v394 = vld [vmem:[#allocation2 + $0x39] sm:$0xff]
      %v395 = vld [vmem:[#allocation2 + $0x49] sm:$0xff]
      %v396 = vld [vmem:[#allocation2 + $0x51] sm:$0xff]
      %v397 = vld [vmem:[#allocation2 + $0x61] sm:$0xff]
      %v398 = vld [vmem:[#allocation2 + $0x69] sm:$0xff]
      %v399 = vld [vmem:[#allocation2 + $0x79] sm:$0xff]
      %v400 = vld [vmem:[#allocation2 + $0x81] sm:$0xff]
      %v401 = vld [vmem:[#allocation2 + $0x91] sm:$0xff]
      %v402 = vld [vmem:[#allocation2 + $0x99] sm:$0xff]
      %v403 = vld [vmem:[#allocation2 + $0xa9] sm:$0xff]
      %v404 = vld [vmem:[#allocation2 + $0xb1] sm:$0xff]
      %v405 = vld [vmem:[#allocation2 + $0xc1] sm:$0xff]
      %v406 = vld [vmem:[#allocation2 + $0xc9] sm:$0xff]
      %v407 = vld [vmem:[#allocation2 + $0xd9] sm:$0xff]
      %v408 = vld [vmem:[#allocation2 + $0xe1] sm:$0xff]
      %v409 = vld [vmem:[#allocation2 + $0xf1] sm:$0xff]
      %v410 = vld [vmem:[#allocation2 + $0xf9] sm:$0xff]
      %v411 = vld [vmem:[#allocation2 + $0x109] sm:$0xff]
      %v412 = vld [vmem:[#allocation2 + $0x111] sm:$0xff]
      %v413 = vld [vmem:[#allocation2 + $0x121] sm:$0xff]
      %v414 = vld [vmem:[#allocation2 + $0x129] sm:$0xff]
      %v415 = vld [vmem:[#allocation2 + $0x139] sm:$0xff]
      %v416 = vld [vmem:[#allocation2 + $0x141] sm:$0xff]
      %v417 = vld [vmem:[#allocation2 + $0x151] sm:$0xff]
      %v418 = vld [vmem:[#allocation2 + $0x159] sm:$0xff]
      %v419 = vld [vmem:[#allocation2 + $0x169] sm:$0xff]
      %v420 = vld [vmem:[#allocation2 + $0x171] sm:$0xff]
      %v421 = vpack.c.bf16 %v390, %v389
      %v422 = vpack.c.bf16 %v392, %v391
      %v423 = vpack.c.bf16 %v394, %v393
      %v424 = vpack.c.bf16 %v396, %v395
      %v425 = vpack.c.bf16 %v398, %v397
      %v426 = vpack.c.bf16 %v400, %v399
      %v427 = vpack.c.bf16 %v402, %v401
      %v428 = vpack.c.bf16 %v404, %v403
      %v429 = vpack.c.bf16 %v406, %v405
      %v430 = vpack.c.bf16 %v408, %v407
      %v431 = vpack.c.bf16 %v410, %v409
      %v432 = vpack.c.bf16 %v412, %v411
      %v433 = vpack.c.bf16 %v414, %v413
      %v434 = vpack.c.bf16 %v416, %v415
      %v435 = vpack.c.bf16 %v418, %v417
      %v436 = vpack.c.bf16 %v420, %v419
      %s437 = scalar_lea.vmem %s1, 64
      %v438 = vld [vmem:[%s437] sm:$0xf]
      %v439 = vld [vmem:[%s437 + $0x4] sm:$0xf]
      %v440 = vld [vmem:[%s437 + $0x8] sm:$0xf]
      %v441 = vld [vmem:[%s437 + $0xc] sm:$0xf]
      %v442 = vld [vmem:[%s437 + $0x10] sm:$0xf]
      %v443 = vld [vmem:[%s437 + $0x14] sm:$0xf]
      %v444 = vld [vmem:[%s437 + $0x18] sm:$0xf]
      %v445 = vld [vmem:[%s437 + $0x1c] sm:$0xf]
      %v446 = vld [vmem:[%s437 + $0x20] sm:$0xf]
      %v447 = vld [vmem:[%s437 + $0x24] sm:$0xf]
      %v448 = vld [vmem:[%s437 + $0x28] sm:$0xf]
      %v449 = vld [vmem:[%s437 + $0x2c] sm:$0xf]
      %v450 = vld [vmem:[%s437 + $0x30] sm:$0xf]
      %v451 = vld [vmem:[%s437 + $0x34] sm:$0xf]
      %v452 = vld [vmem:[%s437 + $0x38] sm:$0xf]
      %v453 = vld [vmem:[%s437 + $0x3c] sm:$0xf]
      %v470 = vunpack.c.l.b16 %v438
      %v471 = vunpack.c.l.b16 %v439
      %v472 = vunpack.c.l.b16 %v440
      %v473 = vunpack.c.l.b16 %v441
      %v474 = vunpack.c.l.b16 %v442
      %v475 = vunpack.c.l.b16 %v443
      %v476 = vunpack.c.l.b16 %v444
      %v477 = vunpack.c.l.b16 %v445
      %v478 = vunpack.c.l.b16 %v446
      %v479 = vunpack.c.l.b16 %v447
      %v480 = vunpack.c.l.b16 %v448
      %v481 = vunpack.c.l.b16 %v449
      %v482 = vunpack.c.l.b16 %v450
      %v483 = vunpack.c.l.b16 %v451
      %v484 = vunpack.c.l.b16 %v452
      %v485 = vunpack.c.l.b16 %v453
      %v486 = vpack.c.b16 %v471, %v470
      %v487 = vpack.c.b16 %v473, %v472
      %v488 = vpack.c.b16 %v475, %v474
      %v489 = vpack.c.b16 %v477, %v476
      %v490 = vpack.c.b16 %v479, %v478
      %v491 = vpack.c.b16 %v481, %v480
      %v492 = vpack.c.b16 %v483, %v482
      %v493 = vpack.c.b16 %v485, %v484
      %502 = vmatpush.bf16.msra.mxu0 %v493
      %503 = vmatpush.bf16.msra.mxu0 %v492
      %504 = vmatpush.bf16.msra.mxu0 %v491
      %505 = vmatpush.bf16.msra.mxu0 %v490
      %506 = vmatpush.bf16.msra.mxu0 %v489
      %507 = vmatpush.bf16.msra.mxu0 %v488
      %508 = vmatpush.bf16.msra.mxu0 %v487
      %509 = vmatpush.bf16.msra.mxu0 %v486
      %510 = vmatmul.bf16.gmra.mxu0 %v421
      %v511 = vpop.f32.mrf.mxu0
      %v512 = vadd.f32 0.0, %v511
      %v513 = vpop.f32.mrf.mxu0
      %v514 = vadd.f32 0.0, %v513
      %515 = vmatmul.bf16.gmra.mxu0 %v422
      %v516 = vpop.f32.mrf.mxu0
      %v517 = vadd.f32 0.0, %v516
      %v518 = vpop.f32.mrf.mxu0
      %v519 = vadd.f32 0.0, %v518
      %520 = vmatmul.bf16.gmra.mxu0 %v423
      %v521 = vpop.f32.mrf.mxu0
      %v522 = vadd.f32 0.0, %v521
      %v523 = vpop.f32.mrf.mxu0
      %v524 = vadd.f32 0.0, %v523
      %525 = vmatmul.bf16.gmra.mxu0 %v424
      %v526 = vpop.f32.mrf.mxu0
      %v527 = vadd.f32 0.0, %v526
      %v528 = vpop.f32.mrf.mxu0
      %v529 = vadd.f32 0.0, %v528
      %530 = vmatmul.bf16.gmra.mxu0 %v425
      %v531 = vpop.f32.mrf.mxu0
      %v532 = vadd.f32 0.0, %v531
      %v533 = vpop.f32.mrf.mxu0
      %v534 = vadd.f32 0.0, %v533
      %535 = vmatmul.bf16.gmra.mxu0 %v426
      %v536 = vpop.f32.mrf.mxu0
      %v537 = vadd.f32 0.0, %v536
      %v538 = vpop.f32.mrf.mxu0
      %v539 = vadd.f32 0.0, %v538
      %540 = vmatmul.bf16.gmra.mxu0 %v427
      %v541 = vpop.f32.mrf.mxu0
      %v542 = vadd.f32 0.0, %v541
      %v543 = vpop.f32.mrf.mxu0
      %v544 = vadd.f32 0.0, %v543
      %545 = vmatmul.bf16.gmra.mxu0 %v428
      %v546 = vpop.f32.mrf.mxu0
      %v547 = vadd.f32 0.0, %v546
      %v548 = vpop.f32.mrf.mxu0
      %v549 = vadd.f32 0.0, %v548
      %550 = vmatmul.bf16.gmra.mxu0 %v429
      %v551 = vpop.f32.mrf.mxu0
      %v552 = vadd.f32 0.0, %v551
      %v553 = vpop.f32.mrf.mxu0
      %v554 = vadd.f32 0.0, %v553
      %555 = vmatmul.bf16.gmra.mxu0 %v430
      %v556 = vpop.f32.mrf.mxu0
      %v557 = vadd.f32 0.0, %v556
      %v558 = vpop.f32.mrf.mxu0
      %v559 = vadd.f32 0.0, %v558
      %560 = vmatmul.bf16.gmra.mxu0 %v431
      %v561 = vpop.f32.mrf.mxu0
      %v562 = vadd.f32 0.0, %v561
      %v563 = vpop.f32.mrf.mxu0
      %v564 = vadd.f32 0.0, %v563
      %565 = vmatmul.bf16.gmra.mxu0 %v432
      %v566 = vpop.f32.mrf.mxu0
      %v567 = vadd.f32 0.0, %v566
      %v568 = vpop.f32.mrf.mxu0
      %v569 = vadd.f32 0.0, %v568
      %570 = vmatmul.bf16.gmra.mxu0 %v433
      %v571 = vpop.f32.mrf.mxu0
      %v572 = vadd.f32 0.0, %v571
      %v573 = vpop.f32.mrf.mxu0
      %v574 = vadd.f32 0.0, %v573
      %575 = vmatmul.bf16.gmra.mxu0 %v434
      %v576 = vpop.f32.mrf.mxu0
      %v577 = vadd.f32 0.0, %v576
      %v578 = vpop.f32.mrf.mxu0
      %v579 = vadd.f32 0.0, %v578
      %580 = vmatmul.bf16.gmra.mxu0 %v435
      %v581 = vpop.f32.mrf.mxu0
      %v582 = vadd.f32 0.0, %v581
      %v583 = vpop.f32.mrf.mxu0
      %v584 = vadd.f32 0.0, %v583
      %585 = vmatmul.bf16.gmra.mxu0 %v436
      %v586 = vpop.f32.mrf.mxu0
      %v587 = vadd.f32 0.0, %v586
      %v588 = vpop.f32.mrf.mxu0
      %v589 = vadd.f32 0.0, %v588
      %590 = vdwg.mxu0
      %v607 = vunpack.c.l.b16 %v373
      %v608 = vunpack.c.l.b16 %v374
      %v609 = vunpack.c.l.b16 %v375
      %v610 = vunpack.c.l.b16 %v376
      %v611 = vunpack.c.l.b16 %v377
      %v612 = vunpack.c.l.b16 %v378
      %v613 = vunpack.c.l.b16 %v379
      %v614 = vunpack.c.l.b16 %v380
      %v615 = vunpack.c.l.b16 %v381
      %v616 = vunpack.c.l.b16 %v382
      %v617 = vunpack.c.l.b16 %v383
      %v618 = vunpack.c.l.b16 %v384
      %v619 = vunpack.c.l.b16 %v385
      %v620 = vunpack.c.l.b16 %v386
      %v621 = vunpack.c.l.b16 %v387
      %v622 = vunpack.c.l.b16 %v388
      %v623 = vpack.c.b16 %v608, %v607
      %v624 = vpack.c.b16 %v610, %v609
      %v625 = vpack.c.b16 %v612, %v611
      %v626 = vpack.c.b16 %v614, %v613
      %v627 = vpack.c.b16 %v616, %v615
      %v628 = vpack.c.b16 %v618, %v617
      %v629 = vpack.c.b16 %v620, %v619
      %v630 = vpack.c.b16 %v622, %v621
      %639 = vmatpush.bf16.msra.mxu0 %v630
      %640 = vmatpush.bf16.msra.mxu0 %v629
      %641 = vmatpush.bf16.msra.mxu0 %v628
      %642 = vmatpush.bf16.msra.mxu0 %v627
      %643 = vmatpush.bf16.msra.mxu0 %v626
      %644 = vmatpush.bf16.msra.mxu0 %v625
      %645 = vmatpush.bf16.msra.mxu0 %v624
      %646 = vmatpush.bf16.msra.mxu0 %v623
      %647 = vmatmul.bf16.gmra.mxu0 %v357
      %v648 = vpop.f32.mrf.mxu0
      %v649 = vadd.f32 %v512, %v648
      %v650 = vpop.f32.mrf.mxu0
      %v651 = vadd.f32 %v514, %v650
      %652 = vmatmul.bf16.gmra.mxu0 %v358
      %v653 = vpop.f32.mrf.mxu0
      %v654 = vadd.f32 %v517, %v653
      %v655 = vpop.f32.mrf.mxu0
      %v656 = vadd.f32 %v519, %v655
      %657 = vmatmul.bf16.gmra.mxu0 %v359
      %v658 = vpop.f32.mrf.mxu0
      %v659 = vadd.f32 %v522, %v658
      %v660 = vpop.f32.mrf.mxu0
      %v661 = vadd.f32 %v524, %v660
      %662 = vmatmul.bf16.gmra.mxu0 %v360
      %v663 = vpop.f32.mrf.mxu0
      %v664 = vadd.f32 %v527, %v663
      %v665 = vpop.f32.mrf.mxu0
      %v666 = vadd.f32 %v529, %v665
      %667 = vmatmul.bf16.gmra.mxu0 %v361
      %v668 = vpop.f32.mrf.mxu0
      %v669 = vadd.f32 %v532, %v668
      %v670 = vpop.f32.mrf.mxu0
      %v671 = vadd.f32 %v534, %v670
      %672 = vmatmul.bf16.gmra.mxu0 %v362
      %v673 = vpop.f32.mrf.mxu0
      %v674 = vadd.f32 %v537, %v673
      %v675 = vpop.f32.mrf.mxu0
      %v676 = vadd.f32 %v539, %v675
      %677 = vmatmul.bf16.gmra.mxu0 %v363
      %v678 = vpop.f32.mrf.mxu0
      %v679 = vadd.f32 %v542, %v678
      %v680 = vpop.f32.mrf.mxu0
      %v681 = vadd.f32 %v544, %v680
      %682 = vmatmul.bf16.gmra.mxu0 %v364
      %v683 = vpop.f32.mrf.mxu0
      %v684 = vadd.f32 %v547, %v683
      %v685 = vpop.f32.mrf.mxu0
      %v686 = vadd.f32 %v549, %v685
      %687 = vmatmul.bf16.gmra.mxu0 %v365
      %v688 = vpop.f32.mrf.mxu0
      %v689 = vadd.f32 %v552, %v688
      %v690 = vpop.f32.mrf.mxu0
      %v691 = vadd.f32 %v554, %v690
      %692 = vmatmul.bf16.gmra.mxu0 %v366
      %v693 = vpop.f32.mrf.mxu0
      %v694 = vadd.f32 %v557, %v693
      %v695 = vpop.f32.mrf.mxu0
      %v696 = vadd.f32 %v559, %v695
      %697 = vmatmul.bf16.gmra.mxu0 %v367
      %v698 = vpop.f32.mrf.mxu0
      %v699 = vadd.f32 %v562, %v698
      %v700 = vpop.f32.mrf.mxu0
      %v701 = vadd.f32 %v564, %v700
      %702 = vmatmul.bf16.gmra.mxu0 %v368
      %v703 = vpop.f32.mrf.mxu0
      %v704 = vadd.f32 %v567, %v703
      %v705 = vpop.f32.mrf.mxu0
      %v706 = vadd.f32 %v569, %v705
      %707 = vmatmul.bf16.gmra.mxu0 %v369
      %v708 = vpop.f32.mrf.mxu0
      %v709 = vadd.f32 %v572, %v708
      %v710 = vpop.f32.mrf.mxu0
      %v711 = vadd.f32 %v574, %v710
      %712 = vmatmul.bf16.gmra.mxu0 %v370
      %v713 = vpop.f32.mrf.mxu0
      %v714 = vadd.f32 %v577, %v713
      %v715 = vpop.f32.mrf.mxu0
      %v716 = vadd.f32 %v579, %v715
      %717 = vmatmul.bf16.gmra.mxu0 %v371
      %v718 = vpop.f32.mrf.mxu0
      %v719 = vadd.f32 %v582, %v718
      %v720 = vpop.f32.mrf.mxu0
      %v721 = vadd.f32 %v584, %v720
      %722 = vmatmul.bf16.gmra.mxu0 %v372
      %v723 = vpop.f32.mrf.mxu0
      %v724 = vadd.f32 %v587, %v723
      %v725 = vpop.f32.mrf.mxu0
      %v726 = vadd.f32 %v589, %v725
      %727 = vdwg.mxu0
      %v728 = vld [vmem:[#allocation2 + $0x2] sm:$0xff]
      %v729 = vld [vmem:[#allocation2 + $0xa] sm:$0xff]
      %v730 = vld [vmem:[#allocation2 + $0x1a] sm:$0xff]
      %v731 = vld [vmem:[#allocation2 + $0x22] sm:$0xff]
      %v732 = vld [vmem:[#allocation2 + $0x32] sm:$0xff]
      %v733 = vld [vmem:[#allocation2 + $0x3a] sm:$0xff]
      %v734 = vld [vmem:[#allocation2 + $0x4a] sm:$0xff]
      %v735 = vld [vmem:[#allocation2 + $0x52] sm:$0xff]
      %v736 = vld [vmem:[#allocation2 + $0x62] sm:$0xff]
      %v737 = vld [vmem:[#allocation2 + $0x6a] sm:$0xff]
      %v738 = vld [vmem:[#allocation2 + $0x7a] sm:$0xff]
      %v739 = vld [vmem:[#allocation2 + $0x82] sm:$0xff]
      %v740 = vld [vmem:[#allocation2 + $0x92] sm:$0xff]
      %v741 = vld [vmem:[#allocation2 + $0x9a] sm:$0xff]
      %v742 = vld [vmem:[#allocation2 + $0xaa] sm:$0xff]
      %v743 = vld [vmem:[#allocation2 + $0xb2] sm:$0xff]
      %v744 = vld [vmem:[#allocation2 + $0xc2] sm:$0xff]
      %v745 = vld [vmem:[#allocation2 + $0xca] sm:$0xff]
      %v746 = vld [vmem:[#allocation2 + $0xda] sm:$0xff]
      %v747 = vld [vmem:[#allocation2 + $0xe2] sm:$0xff]
      %v748 = vld [vmem:[#allocation2 + $0xf2] sm:$0xff]
      %v749 = vld [vmem:[#allocation2 + $0xfa] sm:$0xff]
      %v750 = vld [vmem:[#allocation2 + $0x10a] sm:$0xff]
      %v751 = vld [vmem:[#allocation2 + $0x112] sm:$0xff]
      %v752 = vld [vmem:[#allocation2 + $0x122] sm:$0xff]
      %v753 = vld [vmem:[#allocation2 + $0x12a] sm:$0xff]
      %v754 = vld [vmem:[#allocation2 + $0x13a] sm:$0xff]
      %v755 = vld [vmem:[#allocation2 + $0x142] sm:$0xff]
      %v756 = vld [vmem:[#allocation2 + $0x152] sm:$0xff]
      %v757 = vld [vmem:[#allocation2 + $0x15a] sm:$0xff]
      %v758 = vld [vmem:[#allocation2 + $0x16a] sm:$0xff]
      %v759 = vld [vmem:[#allocation2 + $0x172] sm:$0xff]
      %v760 = vpack.c.bf16 %v729, %v728
      %v761 = vpack.c.bf16 %v731, %v730
      %v762 = vpack.c.bf16 %v733, %v732
      %v763 = vpack.c.bf16 %v735, %v734
      %v764 = vpack.c.bf16 %v737, %v736
      %v765 = vpack.c.bf16 %v739, %v738
      %v766 = vpack.c.bf16 %v741, %v740
      %v767 = vpack.c.bf16 %v743, %v742
      %v768 = vpack.c.bf16 %v745, %v744
      %v769 = vpack.c.bf16 %v747, %v746
      %v770 = vpack.c.bf16 %v749, %v748
      %v771 = vpack.c.bf16 %v751, %v750
      %v772 = vpack.c.bf16 %v753, %v752
      %v773 = vpack.c.bf16 %v755, %v754
      %v774 = vpack.c.bf16 %v757, %v756
      %v775 = vpack.c.bf16 %v759, %v758
      %s776 = scalar_lea.vmem %s1, 128
      %v777 = vld [vmem:[%s776] sm:$0xf]
      %v778 = vld [vmem:[%s776 + $0x4] sm:$0xf]
      %v779 = vld [vmem:[%s776 + $0x8] sm:$0xf]
      %v780 = vld [vmem:[%s776 + $0xc] sm:$0xf]
      %v781 = vld [vmem:[%s776 + $0x10] sm:$0xf]
      %v782 = vld [vmem:[%s776 + $0x14] sm:$0xf]
      %v783 = vld [vmem:[%s776 + $0x18] sm:$0xf]
      %v784 = vld [vmem:[%s776 + $0x1c] sm:$0xf]
      %v785 = vld [vmem:[%s776 + $0x20] sm:$0xf]
      %v786 = vld [vmem:[%s776 + $0x24] sm:$0xf]
      %v787 = vld [vmem:[%s776 + $0x28] sm:$0xf]
      %v788 = vld [vmem:[%s776 + $0x2c] sm:$0xf]
      %v789 = vld [vmem:[%s776 + $0x30] sm:$0xf]
      %v790 = vld [vmem:[%s776 + $0x34] sm:$0xf]
      %v791 = vld [vmem:[%s776 + $0x38] sm:$0xf]
      %v792 = vld [vmem:[%s776 + $0x3c] sm:$0xf]
      %v809 = vunpack.c.l.b16 %v777
      %v810 = vunpack.c.l.b16 %v778
      %v811 = vunpack.c.l.b16 %v779
      %v812 = vunpack.c.l.b16 %v780
      %v813 = vunpack.c.l.b16 %v781
      %v814 = vunpack.c.l.b16 %v782
      %v815 = vunpack.c.l.b16 %v783
      %v816 = vunpack.c.l.b16 %v784
      %v817 = vunpack.c.l.b16 %v785
      %v818 = vunpack.c.l.b16 %v786
      %v819 = vunpack.c.l.b16 %v787
      %v820 = vunpack.c.l.b16 %v788
      %v821 = vunpack.c.l.b16 %v789
      %v822 = vunpack.c.l.b16 %v790
      %v823 = vunpack.c.l.b16 %v791
      %v824 = vunpack.c.l.b16 %v792
      %v825 = vpack.c.b16 %v810, %v809
      %v826 = vpack.c.b16 %v812, %v811
      %v827 = vpack.c.b16 %v814, %v813
      %v828 = vpack.c.b16 %v816, %v815
      %v829 = vpack.c.b16 %v818, %v817
      %v830 = vpack.c.b16 %v820, %v819
      %v831 = vpack.c.b16 %v822, %v821
      %v832 = vpack.c.b16 %v824, %v823
      %841 = vmatpush.bf16.msra.mxu0 %v832
      %842 = vmatpush.bf16.msra.mxu0 %v831
      %843 = vmatpush.bf16.msra.mxu0 %v830
      %844 = vmatpush.bf16.msra.mxu0 %v829
      %845 = vmatpush.bf16.msra.mxu0 %v828
      %846 = vmatpush.bf16.msra.mxu0 %v827
      %847 = vmatpush.bf16.msra.mxu0 %v826
      %848 = vmatpush.bf16.msra.mxu0 %v825
      %849 = vmatmul.bf16.gmra.mxu0 %v760
      %v850 = vpop.f32.mrf.mxu0
      %v851 = vadd.f32 0.0, %v850
      %v852 = vpop.f32.mrf.mxu0
      %v853 = vadd.f32 0.0, %v852
      %854 = vmatmul.bf16.gmra.mxu0 %v761
      %v855 = vpop.f32.mrf.mxu0
      %v856 = vadd.f32 0.0, %v855
      %v857 = vpop.f32.mrf.mxu0
      %v858 = vadd.f32 0.0, %v857
      %859 = vmatmul.bf16.gmra.mxu0 %v762
      %v860 = vpop.f32.mrf.mxu0
      %v861 = vadd.f32 0.0, %v860
      %v862 = vpop.f32.mrf.mxu0
      %v863 = vadd.f32 0.0, %v862
      %864 = vmatmul.bf16.gmra.mxu0 %v763
      %v865 = vpop.f32.mrf.mxu0
      %v866 = vadd.f32 0.0, %v865
      %v867 = vpop.f32.mrf.mxu0
      %v868 = vadd.f32 0.0, %v867
      %869 = vmatmul.bf16.gmra.mxu0 %v764
      %v870 = vpop.f32.mrf.mxu0
      %v871 = vadd.f32 0.0, %v870
      %v872 = vpop.f32.mrf.mxu0
      %v873 = vadd.f32 0.0, %v872
      %874 = vmatmul.bf16.gmra.mxu0 %v765
      %v875 = vpop.f32.mrf.mxu0
      %v876 = vadd.f32 0.0, %v875
      %v877 = vpop.f32.mrf.mxu0
      %v878 = vadd.f32 0.0, %v877
      %879 = vmatmul.bf16.gmra.mxu0 %v766
      %v880 = vpop.f32.mrf.mxu0
      %v881 = vadd.f32 0.0, %v880
      %v882 = vpop.f32.mrf.mxu0
      %v883 = vadd.f32 0.0, %v882
      %884 = vmatmul.bf16.gmra.mxu0 %v767
      %v885 = vpop.f32.mrf.mxu0
      %v886 = vadd.f32 0.0, %v885
      %v887 = vpop.f32.mrf.mxu0
      %v888 = vadd.f32 0.0, %v887
      %889 = vmatmul.bf16.gmra.mxu0 %v768
      %v890 = vpop.f32.mrf.mxu0
      %v891 = vadd.f32 0.0, %v890
      %v892 = vpop.f32.mrf.mxu0
      %v893 = vadd.f32 0.0, %v892
      %894 = vmatmul.bf16.gmra.mxu0 %v769
      %v895 = vpop.f32.mrf.mxu0
      %v896 = vadd.f32 0.0, %v895
      %v897 = vpop.f32.mrf.mxu0
      %v898 = vadd.f32 0.0, %v897
      %899 = vmatmul.bf16.gmra.mxu0 %v770
      %v900 = vpop.f32.mrf.mxu0
      %v901 = vadd.f32 0.0, %v900
      %v902 = vpop.f32.mrf.mxu0
      %v903 = vadd.f32 0.0, %v902
      %904 = vmatmul.bf16.gmra.mxu0 %v771
      %v905 = vpop.f32.mrf.mxu0
      %v906 = vadd.f32 0.0, %v905
      %v907 = vpop.f32.mrf.mxu0
      %v908 = vadd.f32 0.0, %v907
      %909 = vmatmul.bf16.gmra.mxu0 %v772
      %v910 = vpop.f32.mrf.mxu0
      %v911 = vadd.f32 0.0, %v910
      %v912 = vpop.f32.mrf.mxu0
      %v913 = vadd.f32 0.0, %v912
      %914 = vmatmul.bf16.gmra.mxu0 %v773
      %v915 = vpop.f32.mrf.mxu0
      %v916 = vadd.f32 0.0, %v915
      %v917 = vpop.f32.mrf.mxu0
      %v918 = vadd.f32 0.0, %v917
      %919 = vmatmul.bf16.gmra.mxu0 %v774
      %v920 = vpop.f32.mrf.mxu0
      %v921 = vadd.f32 0.0, %v920
      %v922 = vpop.f32.mrf.mxu0
      %v923 = vadd.f32 0.0, %v922
      %924 = vmatmul.bf16.gmra.mxu0 %v775
      %v925 = vpop.f32.mrf.mxu0
      %v926 = vadd.f32 0.0, %v925
      %v927 = vpop.f32.mrf.mxu0
      %v928 = vadd.f32 0.0, %v927
      %929 = vdwg.mxu0
      %v930 = vadd.f32 %v649, %v851
      %v931 = vadd.f32 %v651, %v853
      %v932 = vadd.f32 %v654, %v856
      %v933 = vadd.f32 %v656, %v858
      %v934 = vadd.f32 %v659, %v861
      %v935 = vadd.f32 %v661, %v863
      %v936 = vadd.f32 %v664, %v866
      %v937 = vadd.f32 %v666, %v868
      %v938 = vadd.f32 %v669, %v871
      %v939 = vadd.f32 %v671, %v873
      %v940 = vadd.f32 %v674, %v876
      %v941 = vadd.f32 %v676, %v878
      %v942 = vadd.f32 %v679, %v881
      %v943 = vadd.f32 %v681, %v883
      %v944 = vadd.f32 %v684, %v886
      %v945 = vadd.f32 %v686, %v888
      %v946 = vadd.f32 %v689, %v891
      %v947 = vadd.f32 %v691, %v893
      %v948 = vadd.f32 %v694, %v896
      %v949 = vadd.f32 %v696, %v898
      %v950 = vadd.f32 %v699, %v901
      %v951 = vadd.f32 %v701, %v903
      %v952 = vadd.f32 %v704, %v906
      %v953 = vadd.f32 %v706, %v908
      %v954 = vadd.f32 %v709, %v911
      %v955 = vadd.f32 %v711, %v913
      %v956 = vadd.f32 %v714, %v916
      %v957 = vadd.f32 %v716, %v918
      %v958 = vadd.f32 %v719, %v921
      %v959 = vadd.f32 %v721, %v923
      %v960 = vadd.f32 %v724, %v926
      %v961 = vadd.f32 %v726, %v928
      %v962 = vld [vmem:[%s292] sm:$0xff]
      %v963 = vld [vmem:[%s292 + $0x8] sm:$0xff]
      %v964 = vld [vmem:[%s292 + $0x18] sm:$0xff]
      %v965 = vld [vmem:[%s292 + $0x20] sm:$0xff]
      %v966 = vld [vmem:[%s292 + $0x30] sm:$0xff]
      %v967 = vld [vmem:[%s292 + $0x38] sm:$0xff]
      %v968 = vld [vmem:[%s292 + $0x48] sm:$0xff]
      %v969 = vld [vmem:[%s292 + $0x50] sm:$0xff]
      %v970 = vld [vmem:[%s292 + $0x60] sm:$0xff]
      %v971 = vld [vmem:[%s292 + $0x68] sm:$0xff]
      %v972 = vld [vmem:[%s292 + $0x78] sm:$0xff]
      %v973 = vld [vmem:[%s292 + $0x80] sm:$0xff]
      %v974 = vld [vmem:[%s292 + $0x90] sm:$0xff]
      %v975 = vld [vmem:[%s292 + $0x98] sm:$0xff]
      %v976 = vld [vmem:[%s292 + $0xa8] sm:$0xff]
      %v977 = vld [vmem:[%s292 + $0xb0] sm:$0xff]
      %v978 = vld [vmem:[%s292 + $0xc0] sm:$0xff]
      %v979 = vld [vmem:[%s292 + $0xc8] sm:$0xff]
      %v980 = vld [vmem:[%s292 + $0xd8] sm:$0xff]
      %v981 = vld [vmem:[%s292 + $0xe0] sm:$0xff]
      %v982 = vld [vmem:[%s292 + $0xf0] sm:$0xff]
      %v983 = vld [vmem:[%s292 + $0xf8] sm:$0xff]
      %v984 = vld [vmem:[%s292 + $0x108] sm:$0xff]
      %v985 = vld [vmem:[%s292 + $0x110] sm:$0xff]
      %v986 = vld [vmem:[%s292 + $0x120] sm:$0xff]
      %v987 = vld [vmem:[%s292 + $0x128] sm:$0xff]
      %v988 = vld [vmem:[%s292 + $0x138] sm:$0xff]
      %v989 = vld [vmem:[%s292 + $0x140] sm:$0xff]
      %v990 = vld [vmem:[%s292 + $0x150] sm:$0xff]
      %v991 = vld [vmem:[%s292 + $0x158] sm:$0xff]
      %v992 = vld [vmem:[%s292 + $0x168] sm:$0xff]
      %v993 = vld [vmem:[%s292 + $0x170] sm:$0xff]
      %v994 = vpack.c.bf16 %v963, %v962
      %v995 = vpack.c.bf16 %v965, %v964
      %v996 = vpack.c.bf16 %v967, %v966
      %v997 = vpack.c.bf16 %v969, %v968
      %v998 = vpack.c.bf16 %v971, %v970
      %v999 = vpack.c.bf16 %v973, %v972
      %v1000 = vpack.c.bf16 %v975, %v974
      %v1001 = vpack.c.bf16 %v977, %v976
      %v1002 = vpack.c.bf16 %v979, %v978
      %v1003 = vpack.c.bf16 %v981, %v980
      %v1004 = vpack.c.bf16 %v983, %v982
      %v1005 = vpack.c.bf16 %v985, %v984
      %v1006 = vpack.c.bf16 %v987, %v986
      %v1007 = vpack.c.bf16 %v989, %v988
      %v1008 = vpack.c.bf16 %v991, %v990
      %v1009 = vpack.c.bf16 %v993, %v992
      %s1010 = scalar_lea.vmem %s1, 192
      %v1011 = vld [vmem:[%s1010] sm:$0xf]
      %v1012 = vld [vmem:[%s1010 + $0x4] sm:$0xf]
      %v1013 = vld [vmem:[%s1010 + $0x8] sm:$0xf]
      %v1014 = vld [vmem:[%s1010 + $0xc] sm:$0xf]
      %v1015 = vld [vmem:[%s1010 + $0x10] sm:$0xf]
      %v1016 = vld [vmem:[%s1010 + $0x14] sm:$0xf]
      %v1017 = vld [vmem:[%s1010 + $0x18] sm:$0xf]
      %v1018 = vld [vmem:[%s1010 + $0x1c] sm:$0xf]
      %v1019 = vld [vmem:[%s1010 + $0x20] sm:$0xf]
      %v1020 = vld [vmem:[%s1010 + $0x24] sm:$0xf]
      %v1021 = vld [vmem:[%s1010 + $0x28] sm:$0xf]
      %v1022 = vld [vmem:[%s1010 + $0x2c] sm:$0xf]
      %v1023 = vld [vmem:[%s1010 + $0x30] sm:$0xf]
      %v1024 = vld [vmem:[%s1010 + $0x34] sm:$0xf]
      %v1025 = vld [vmem:[%s1010 + $0x38] sm:$0xf]
      %v1026 = vld [vmem:[%s1010 + $0x3c] sm:$0xf]
      %v1043 = vunpack.c.l.b16 %v1011
      %v1044 = vunpack.c.l.b16 %v1012
      %v1045 = vunpack.c.l.b16 %v1013
      %v1046 = vunpack.c.l.b16 %v1014
      %v1047 = vunpack.c.l.b16 %v1015
      %v1048 = vunpack.c.l.b16 %v1016
      %v1049 = vunpack.c.l.b16 %v1017
      %v1050 = vunpack.c.l.b16 %v1018
      %v1051 = vunpack.c.l.b16 %v1019
      %v1052 = vunpack.c.l.b16 %v1020
      %v1053 = vunpack.c.l.b16 %v1021
      %v1054 = vunpack.c.l.b16 %v1022
      %v1055 = vunpack.c.l.b16 %v1023
      %v1056 = vunpack.c.l.b16 %v1024
      %v1057 = vunpack.c.l.b16 %v1025
      %v1058 = vunpack.c.l.b16 %v1026
      %v1059 = vpack.c.b16 %v1044, %v1043
      %v1060 = vpack.c.b16 %v1046, %v1045
      %v1061 = vpack.c.b16 %v1048, %v1047
      %v1062 = vpack.c.b16 %v1050, %v1049
      %v1063 = vpack.c.b16 %v1052, %v1051
      %v1064 = vpack.c.b16 %v1054, %v1053
      %v1065 = vpack.c.b16 %v1056, %v1055
      %v1066 = vpack.c.b16 %v1058, %v1057
      %1075 = vmatpush.bf16.msra.mxu0 %v1066
      %1076 = vmatpush.bf16.msra.mxu0 %v1065
      %1077 = vmatpush.bf16.msra.mxu0 %v1064
      %1078 = vmatpush.bf16.msra.mxu0 %v1063
      %1079 = vmatpush.bf16.msra.mxu0 %v1062
      %1080 = vmatpush.bf16.msra.mxu0 %v1061
      %1081 = vmatpush.bf16.msra.mxu0 %v1060
      %1082 = vmatpush.bf16.msra.mxu0 %v1059
      %1083 = vmatmul.bf16.gmra.mxu0 %v994
      %v1084 = vpop.f32.mrf.mxu0
      %v1085 = vadd.f32 0.0, %v1084
      %v1086 = vpop.f32.mrf.mxu0
      %v1087 = vadd.f32 0.0, %v1086
      %1088 = vmatmul.bf16.gmra.mxu0 %v995
      %v1089 = vpop.f32.mrf.mxu0
      %v1090 = vadd.f32 0.0, %v1089
      %v1091 = vpop.f32.mrf.mxu0
      %v1092 = vadd.f32 0.0, %v1091
      %1093 = vmatmul.bf16.gmra.mxu0 %v996
      %v1094 = vpop.f32.mrf.mxu0
      %v1095 = vadd.f32 0.0, %v1094
      %v1096 = vpop.f32.mrf.mxu0
      %v1097 = vadd.f32 0.0, %v1096
      %1098 = vmatmul.bf16.gmra.mxu0 %v997
      %v1099 = vpop.f32.mrf.mxu0
      %v1100 = vadd.f32 0.0, %v1099
      %v1101 = vpop.f32.mrf.mxu0
      %v1102 = vadd.f32 0.0, %v1101
      %1103 = vmatmul.bf16.gmra.mxu0 %v998
      %v1104 = vpop.f32.mrf.mxu0
      %v1105 = vadd.f32 0.0, %v1104
      %v1106 = vpop.f32.mrf.mxu0
      %v1107 = vadd.f32 0.0, %v1106
      %1108 = vmatmul.bf16.gmra.mxu0 %v999
      %v1109 = vpop.f32.mrf.mxu0
      %v1110 = vadd.f32 0.0, %v1109
      %v1111 = vpop.f32.mrf.mxu0
      %v1112 = vadd.f32 0.0, %v1111
      %1113 = vmatmul.bf16.gmra.mxu0 %v1000
      %v1114 = vpop.f32.mrf.mxu0
      %v1115 = vadd.f32 0.0, %v1114
      %v1116 = vpop.f32.mrf.mxu0
      %v1117 = vadd.f32 0.0, %v1116
      %1118 = vmatmul.bf16.gmra.mxu0 %v1001
      %v1119 = vpop.f32.mrf.mxu0
      %v1120 = vadd.f32 0.0, %v1119
      %v1121 = vpop.f32.mrf.mxu0
      %v1122 = vadd.f32 0.0, %v1121
      %1123 = vmatmul.bf16.gmra.mxu0 %v1002
      %v1124 = vpop.f32.mrf.mxu0
      %v1125 = vadd.f32 0.0, %v1124
      %v1126 = vpop.f32.mrf.mxu0
      %v1127 = vadd.f32 0.0, %v1126
      %1128 = vmatmul.bf16.gmra.mxu0 %v1003
      %v1129 = vpop.f32.mrf.mxu0
      %v1130 = vadd.f32 0.0, %v1129
      %v1131 = vpop.f32.mrf.mxu0
      %v1132 = vadd.f32 0.0, %v1131
      %1133 = vmatmul.bf16.gmra.mxu0 %v1004
      %v1134 = vpop.f32.mrf.mxu0
      %v1135 = vadd.f32 0.0, %v1134
      %v1136 = vpop.f32.mrf.mxu0
      %v1137 = vadd.f32 0.0, %v1136
      %1138 = vmatmul.bf16.gmra.mxu0 %v1005
      %v1139 = vpop.f32.mrf.mxu0
      %v1140 = vadd.f32 0.0, %v1139
      %v1141 = vpop.f32.mrf.mxu0
      %v1142 = vadd.f32 0.0, %v1141
      %1143 = vmatmul.bf16.gmra.mxu0 %v1006
      %v1144 = vpop.f32.mrf.mxu0
      %v1145 = vadd.f32 0.0, %v1144
      %v1146 = vpop.f32.mrf.mxu0
      %v1147 = vadd.f32 0.0, %v1146
      %1148 = vmatmul.bf16.gmra.mxu0 %v1007
      %v1149 = vpop.f32.mrf.mxu0
      %v1150 = vadd.f32 0.0, %v1149
      %v1151 = vpop.f32.mrf.mxu0
      %v1152 = vadd.f32 0.0, %v1151
      %1153 = vmatmul.bf16.gmra.mxu0 %v1008
      %v1154 = vpop.f32.mrf.mxu0
      %v1155 = vadd.f32 0.0, %v1154
      %v1156 = vpop.f32.mrf.mxu0
      %v1157 = vadd.f32 0.0, %v1156
      %1158 = vmatmul.bf16.gmra.mxu0 %v1009
      %v1159 = vpop.f32.mrf.mxu0
      %v1160 = vadd.f32 0.0, %v1159
      %v1161 = vpop.f32.mrf.mxu0
      %v1162 = vadd.f32 0.0, %v1161
      %1163 = vdwg.mxu0
      %v1164 = vadd.f32 %v930, %v1085
      %v1165 = vadd.f32 %v931, %v1087
      %v1166 = vadd.f32 %v932, %v1090
      %v1167 = vadd.f32 %v933, %v1092
      %v1168 = vadd.f32 %v934, %v1095
      %v1169 = vadd.f32 %v935, %v1097
      %v1170 = vadd.f32 %v936, %v1100
      %v1171 = vadd.f32 %v937, %v1102
      %v1172 = vadd.f32 %v938, %v1105
      %v1173 = vadd.f32 %v939, %v1107
      %v1174 = vadd.f32 %v940, %v1110
      %v1175 = vadd.f32 %v941, %v1112
      %v1176 = vadd.f32 %v942, %v1115
      %v1177 = vadd.f32 %v943, %v1117
      %v1178 = vadd.f32 %v944, %v1120
      %v1179 = vadd.f32 %v945, %v1122
      %v1180 = vadd.f32 %v946, %v1125
      %v1181 = vadd.f32 %v947, %v1127
      %v1182 = vadd.f32 %v948, %v1130
      %v1183 = vadd.f32 %v949, %v1132
      %v1184 = vadd.f32 %v950, %v1135
      %v1185 = vadd.f32 %v951, %v1137
      %v1186 = vadd.f32 %v952, %v1140
      %v1187 = vadd.f32 %v953, %v1142
      %v1188 = vadd.f32 %v954, %v1145
      %v1189 = vadd.f32 %v955, %v1147
      %v1190 = vadd.f32 %v956, %v1150
      %v1191 = vadd.f32 %v957, %v1152
      %v1192 = vadd.f32 %v958, %v1155
      %v1193 = vadd.f32 %v959, %v1157
      %v1194 = vadd.f32 %v960, %v1160
      %v1195 = vadd.f32 %v961, %v1162
      %v1196 = vld [vmem:[%s292 + $0x1] sm:$0xff]
      %v1197 = vld [vmem:[%s292 + $0x9] sm:$0xff]
      %v1198 = vld [vmem:[%s292 + $0x19] sm:$0xff]
      %v1199 = vld [vmem:[%s292 + $0x21] sm:$0xff]
      %v1200 = vld [vmem:[%s292 + $0x31] sm:$0xff]
      %v1201 = vld [vmem:[%s292 + $0x39] sm:$0xff]
      %v1202 = vld [vmem:[%s292 + $0x49] sm:$0xff]
      %v1203 = vld [vmem:[%s292 + $0x51] sm:$0xff]
      %v1204 = vld [vmem:[%s292 + $0x61] sm:$0xff]
      %v1205 = vld [vmem:[%s292 + $0x69] sm:$0xff]
      %v1206 = vld [vmem:[%s292 + $0x79] sm:$0xff]
      %v1207 = vld [vmem:[%s292 + $0x81] sm:$0xff]
      %v1208 = vld [vmem:[%s292 + $0x91] sm:$0xff]
      %v1209 = vld [vmem:[%s292 + $0x99] sm:$0xff]
      %v1210 = vld [vmem:[%s292 + $0xa9] sm:$0xff]
      %v1211 = vld [vmem:[%s292 + $0xb1] sm:$0xff]
      %v1212 = vld [vmem:[%s292 + $0xc1] sm:$0xff]
      %v1213 = vld [vmem:[%s292 + $0xc9] sm:$0xff]
      %v1214 = vld [vmem:[%s292 + $0xd9] sm:$0xff]
      %v1215 = vld [vmem:[%s292 + $0xe1] sm:$0xff]
      %v1216 = vld [vmem:[%s292 + $0xf1] sm:$0xff]
      %v1217 = vld [vmem:[%s292 + $0xf9] sm:$0xff]
      %v1218 = vld [vmem:[%s292 + $0x109] sm:$0xff]
      %v1219 = vld [vmem:[%s292 + $0x111] sm:$0xff]
      %v1220 = vld [vmem:[%s292 + $0x121] sm:$0xff]
      %v1221 = vld [vmem:[%s292 + $0x129] sm:$0xff]
      %v1222 = vld [vmem:[%s292 + $0x139] sm:$0xff]
      %v1223 = vld [vmem:[%s292 + $0x141] sm:$0xff]
      %v1224 = vld [vmem:[%s292 + $0x151] sm:$0xff]
      %v1225 = vld [vmem:[%s292 + $0x159] sm:$0xff]
      %v1226 = vld [vmem:[%s292 + $0x169] sm:$0xff]
      %v1227 = vld [vmem:[%s292 + $0x171] sm:$0xff]
      %v1228 = vpack.c.bf16 %v1197, %v1196
      %v1229 = vpack.c.bf16 %v1199, %v1198
      %v1230 = vpack.c.bf16 %v1201, %v1200
      %v1231 = vpack.c.bf16 %v1203, %v1202
      %v1232 = vpack.c.bf16 %v1205, %v1204
      %v1233 = vpack.c.bf16 %v1207, %v1206
      %v1234 = vpack.c.bf16 %v1209, %v1208
      %v1235 = vpack.c.bf16 %v1211, %v1210
      %v1236 = vpack.c.bf16 %v1213, %v1212
      %v1237 = vpack.c.bf16 %v1215, %v1214
      %v1238 = vpack.c.bf16 %v1217, %v1216
      %v1239 = vpack.c.bf16 %v1219, %v1218
      %v1240 = vpack.c.bf16 %v1221, %v1220
      %v1241 = vpack.c.bf16 %v1223, %v1222
      %v1242 = vpack.c.bf16 %v1225, %v1224
      %v1243 = vpack.c.bf16 %v1227, %v1226
      %s1244 = scalar_lea.vmem %s1, 256
      %v1245 = vld [vmem:[%s1244] sm:$0xf]
      %v1246 = vld [vmem:[%s1244 + $0x4] sm:$0xf]
      %v1247 = vld [vmem:[%s1244 + $0x8] sm:$0xf]
      %v1248 = vld [vmem:[%s1244 + $0xc] sm:$0xf]
      %v1249 = vld [vmem:[%s1244 + $0x10] sm:$0xf]
      %v1250 = vld [vmem:[%s1244 + $0x14] sm:$0xf]
      %v1251 = vld [vmem:[%s1244 + $0x18] sm:$0xf]
      %v1252 = vld [vmem:[%s1244 + $0x1c] sm:$0xf]
      %v1253 = vld [vmem:[%s1244 + $0x20] sm:$0xf]
      %v1254 = vld [vmem:[%s1244 + $0x24] sm:$0xf]
      %v1255 = vld [vmem:[%s1244 + $0x28] sm:$0xf]
      %v1256 = vld [vmem:[%s1244 + $0x2c] sm:$0xf]
      %v1257 = vld [vmem:[%s1244 + $0x30] sm:$0xf]
      %v1258 = vld [vmem:[%s1244 + $0x34] sm:$0xf]
      %v1259 = vld [vmem:[%s1244 + $0x38] sm:$0xf]
      %v1260 = vld [vmem:[%s1244 + $0x3c] sm:$0xf]
      %v1277 = vunpack.c.l.b16 %v1245
      %v1278 = vunpack.c.l.b16 %v1246
      %v1279 = vunpack.c.l.b16 %v1247
      %v1280 = vunpack.c.l.b16 %v1248
      %v1281 = vunpack.c.l.b16 %v1249
      %v1282 = vunpack.c.l.b16 %v1250
      %v1283 = vunpack.c.l.b16 %v1251
      %v1284 = vunpack.c.l.b16 %v1252
      %v1285 = vunpack.c.l.b16 %v1253
      %v1286 = vunpack.c.l.b16 %v1254
      %v1287 = vunpack.c.l.b16 %v1255
      %v1288 = vunpack.c.l.b16 %v1256
      %v1289 = vunpack.c.l.b16 %v1257
      %v1290 = vunpack.c.l.b16 %v1258
      %v1291 = vunpack.c.l.b16 %v1259
      %v1292 = vunpack.c.l.b16 %v1260
      %v1293 = vpack.c.b16 %v1278, %v1277
      %v1294 = vpack.c.b16 %v1280, %v1279
      %v1295 = vpack.c.b16 %v1282, %v1281
      %v1296 = vpack.c.b16 %v1284, %v1283
      %v1297 = vpack.c.b16 %v1286, %v1285
      %v1298 = vpack.c.b16 %v1288, %v1287
      %v1299 = vpack.c.b16 %v1290, %v1289
      %v1300 = vpack.c.b16 %v1292, %v1291
      %1309 = vmatpush.bf16.msra.mxu0 %v1300
      %1310 = vmatpush.bf16.msra.mxu0 %v1299
      %1311 = vmatpush.bf16.msra.mxu0 %v1298
      %1312 = vmatpush.bf16.msra.mxu0 %v1297
      %1313 = vmatpush.bf16.msra.mxu0 %v1296
      %1314 = vmatpush.bf16.msra.mxu0 %v1295
      %1315 = vmatpush.bf16.msra.mxu0 %v1294
      %1316 = vmatpush.bf16.msra.mxu0 %v1293
      %1317 = vmatmul.bf16.gmra.mxu0 %v1228
      %v1318 = vpop.f32.mrf.mxu0
      %v1319 = vadd.f32 0.0, %v1318
      %v1320 = vpop.f32.mrf.mxu0
      %v1321 = vadd.f32 0.0, %v1320
      %1322 = vmatmul.bf16.gmra.mxu0 %v1229
      %v1323 = vpop.f32.mrf.mxu0
      %v1324 = vadd.f32 0.0, %v1323
      %v1325 = vpop.f32.mrf.mxu0
      %v1326 = vadd.f32 0.0, %v1325
      %1327 = vmatmul.bf16.gmra.mxu0 %v1230
      %v1328 = vpop.f32.mrf.mxu0
      %v1329 = vadd.f32 0.0, %v1328
      %v1330 = vpop.f32.mrf.mxu0
      %v1331 = vadd.f32 0.0, %v1330
      %1332 = vmatmul.bf16.gmra.mxu0 %v1231
      %v1333 = vpop.f32.mrf.mxu0
      %v1334 = vadd.f32 0.0, %v1333
      %v1335 = vpop.f32.mrf.mxu0
      %v1336 = vadd.f32 0.0, %v1335
      %1337 = vmatmul.bf16.gmra.mxu0 %v1232
      %v1338 = vpop.f32.mrf.mxu0
      %v1339 = vadd.f32 0.0, %v1338
      %v1340 = vpop.f32.mrf.mxu0
      %v1341 = vadd.f32 0.0, %v1340
      %1342 = vmatmul.bf16.gmra.mxu0 %v1233
      %v1343 = vpop.f32.mrf.mxu0
      %v1344 = vadd.f32 0.0, %v1343
      %v1345 = vpop.f32.mrf.mxu0
      %v1346 = vadd.f32 0.0, %v1345
      %1347 = vmatmul.bf16.gmra.mxu0 %v1234
      %v1348 = vpop.f32.mrf.mxu0
      %v1349 = vadd.f32 0.0, %v1348
      %v1350 = vpop.f32.mrf.mxu0
      %v1351 = vadd.f32 0.0, %v1350
      %1352 = vmatmul.bf16.gmra.mxu0 %v1235
      %v1353 = vpop.f32.mrf.mxu0
      %v1354 = vadd.f32 0.0, %v1353
      %v1355 = vpop.f32.mrf.mxu0
      %v1356 = vadd.f32 0.0, %v1355
      %1357 = vmatmul.bf16.gmra.mxu0 %v1236
      %v1358 = vpop.f32.mrf.mxu0
      %v1359 = vadd.f32 0.0, %v1358
      %v1360 = vpop.f32.mrf.mxu0
      %v1361 = vadd.f32 0.0, %v1360
      %1362 = vmatmul.bf16.gmra.mxu0 %v1237
      %v1363 = vpop.f32.mrf.mxu0
      %v1364 = vadd.f32 0.0, %v1363
      %v1365 = vpop.f32.mrf.mxu0
      %v1366 = vadd.f32 0.0, %v1365
      %1367 = vmatmul.bf16.gmra.mxu0 %v1238
      %v1368 = vpop.f32.mrf.mxu0
      %v1369 = vadd.f32 0.0, %v1368
      %v1370 = vpop.f32.mrf.mxu0
      %v1371 = vadd.f32 0.0, %v1370
      %1372 = vmatmul.bf16.gmra.mxu0 %v1239
      %v1373 = vpop.f32.mrf.mxu0
      %v1374 = vadd.f32 0.0, %v1373
      %v1375 = vpop.f32.mrf.mxu0
      %v1376 = vadd.f32 0.0, %v1375
      %1377 = vmatmul.bf16.gmra.mxu0 %v1240
      %v1378 = vpop.f32.mrf.mxu0
      %v1379 = vadd.f32 0.0, %v1378
      %v1380 = vpop.f32.mrf.mxu0
      %v1381 = vadd.f32 0.0, %v1380
      %1382 = vmatmul.bf16.gmra.mxu0 %v1241
      %v1383 = vpop.f32.mrf.mxu0
      %v1384 = vadd.f32 0.0, %v1383
      %v1385 = vpop.f32.mrf.mxu0
      %v1386 = vadd.f32 0.0, %v1385
      %1387 = vmatmul.bf16.gmra.mxu0 %v1242
      %v1388 = vpop.f32.mrf.mxu0
      %v1389 = vadd.f32 0.0, %v1388
      %v1390 = vpop.f32.mrf.mxu0
      %v1391 = vadd.f32 0.0, %v1390
      %1392 = vmatmul.bf16.gmra.mxu0 %v1243
      %v1393 = vpop.f32.mrf.mxu0
      %v1394 = vadd.f32 0.0, %v1393
      %v1395 = vpop.f32.mrf.mxu0
      %v1396 = vadd.f32 0.0, %v1395
      %1397 = vdwg.mxu0
      %v1398 = vadd.f32 %v1164, %v1319
      %v1399 = vadd.f32 %v1165, %v1321
      %v1400 = vadd.f32 %v1166, %v1324
      %v1401 = vadd.f32 %v1167, %v1326
      %v1402 = vadd.f32 %v1168, %v1329
      %v1403 = vadd.f32 %v1169, %v1331
      %v1404 = vadd.f32 %v1170, %v1334
      %v1405 = vadd.f32 %v1171, %v1336
      %v1406 = vadd.f32 %v1172, %v1339
      %v1407 = vadd.f32 %v1173, %v1341
      %v1408 = vadd.f32 %v1174, %v1344
      %v1409 = vadd.f32 %v1175, %v1346
      %v1410 = vadd.f32 %v1176, %v1349
      %v1411 = vadd.f32 %v1177, %v1351
      %v1412 = vadd.f32 %v1178, %v1354
      %v1413 = vadd.f32 %v1179, %v1356
      %v1414 = vadd.f32 %v1180, %v1359
      %v1415 = vadd.f32 %v1181, %v1361
      %v1416 = vadd.f32 %v1182, %v1364
      %v1417 = vadd.f32 %v1183, %v1366
      %v1418 = vadd.f32 %v1184, %v1369
      %v1419 = vadd.f32 %v1185, %v1371
      %v1420 = vadd.f32 %v1186, %v1374
      %v1421 = vadd.f32 %v1187, %v1376
      %v1422 = vadd.f32 %v1188, %v1379
      %v1423 = vadd.f32 %v1189, %v1381
      %v1424 = vadd.f32 %v1190, %v1384
      %v1425 = vadd.f32 %v1191, %v1386
      %v1426 = vadd.f32 %v1192, %v1389
      %v1427 = vadd.f32 %v1193, %v1391
      %v1428 = vadd.f32 %v1194, %v1394
      %v1429 = vadd.f32 %v1195, %v1396
      %v1430 = vld [vmem:[%s292 + $0x2] sm:$0xff]
      %v1431 = vld [vmem:[%s292 + $0xa] sm:$0xff]
      %v1432 = vld [vmem:[%s292 + $0x1a] sm:$0xff]
      %v1433 = vld [vmem:[%s292 + $0x22] sm:$0xff]
      %v1434 = vld [vmem:[%s292 + $0x32] sm:$0xff]
      %v1435 = vld [vmem:[%s292 + $0x3a] sm:$0xff]
      %v1436 = vld [vmem:[%s292 + $0x4a] sm:$0xff]
      %v1437 = vld [vmem:[%s292 + $0x52] sm:$0xff]
      %v1438 = vld [vmem:[%s292 + $0x62] sm:$0xff]
      %v1439 = vld [vmem:[%s292 + $0x6a] sm:$0xff]
      %v1440 = vld [vmem:[%s292 + $0x7a] sm:$0xff]
      %v1441 = vld [vmem:[%s292 + $0x82] sm:$0xff]
      %v1442 = vld [vmem:[%s292 + $0x92] sm:$0xff]
      %v1443 = vld [vmem:[%s292 + $0x9a] sm:$0xff]
      %v1444 = vld [vmem:[%s292 + $0xaa] sm:$0xff]
      %v1445 = vld [vmem:[%s292 + $0xb2] sm:$0xff]
      %v1446 = vld [vmem:[%s292 + $0xc2] sm:$0xff]
      %v1447 = vld [vmem:[%s292 + $0xca] sm:$0xff]
      %v1448 = vld [vmem:[%s292 + $0xda] sm:$0xff]
      %v1449 = vld [vmem:[%s292 + $0xe2] sm:$0xff]
      %v1450 = vld [vmem:[%s292 + $0xf2] sm:$0xff]
      %v1451 = vld [vmem:[%s292 + $0xfa] sm:$0xff]
      %v1452 = vld [vmem:[%s292 + $0x10a] sm:$0xff]
      %v1453 = vld [vmem:[%s292 + $0x112] sm:$0xff]
      %v1454 = vld [vmem:[%s292 + $0x122] sm:$0xff]
      %v1455 = vld [vmem:[%s292 + $0x12a] sm:$0xff]
      %v1456 = vld [vmem:[%s292 + $0x13a] sm:$0xff]
      %v1457 = vld [vmem:[%s292 + $0x142] sm:$0xff]
      %v1458 = vld [vmem:[%s292 + $0x152] sm:$0xff]
      %v1459 = vld [vmem:[%s292 + $0x15a] sm:$0xff]
      %v1460 = vld [vmem:[%s292 + $0x16a] sm:$0xff]
      %v1461 = vld [vmem:[%s292 + $0x172] sm:$0xff]
      %v1462 = vpack.c.bf16 %v1431, %v1430
      %v1463 = vpack.c.bf16 %v1433, %v1432
      %v1464 = vpack.c.bf16 %v1435, %v1434
      %v1465 = vpack.c.bf16 %v1437, %v1436
      %v1466 = vpack.c.bf16 %v1439, %v1438
      %v1467 = vpack.c.bf16 %v1441, %v1440
      %v1468 = vpack.c.bf16 %v1443, %v1442
      %v1469 = vpack.c.bf16 %v1445, %v1444
      %v1470 = vpack.c.bf16 %v1447, %v1446
      %v1471 = vpack.c.bf16 %v1449, %v1448
      %v1472 = vpack.c.bf16 %v1451, %v1450
      %v1473 = vpack.c.bf16 %v1453, %v1452
      %v1474 = vpack.c.bf16 %v1455, %v1454
      %v1475 = vpack.c.bf16 %v1457, %v1456
      %v1476 = vpack.c.bf16 %v1459, %v1458
      %v1477 = vpack.c.bf16 %v1461, %v1460
      %s1478 = scalar_lea.vmem %s1, 320
      %v1479 = vld [vmem:[%s1478] sm:$0xf]
      %v1480 = vld [vmem:[%s1478 + $0x4] sm:$0xf]
      %v1481 = vld [vmem:[%s1478 + $0x8] sm:$0xf]
      %v1482 = vld [vmem:[%s1478 + $0xc] sm:$0xf]
      %v1483 = vld [vmem:[%s1478 + $0x10] sm:$0xf]
      %v1484 = vld [vmem:[%s1478 + $0x14] sm:$0xf]
      %v1485 = vld [vmem:[%s1478 + $0x18] sm:$0xf]
      %v1486 = vld [vmem:[%s1478 + $0x1c] sm:$0xf]
      %v1487 = vld [vmem:[%s1478 + $0x20] sm:$0xf]
      %v1488 = vld [vmem:[%s1478 + $0x24] sm:$0xf]
      %v1489 = vld [vmem:[%s1478 + $0x28] sm:$0xf]
      %v1490 = vld [vmem:[%s1478 + $0x2c] sm:$0xf]
      %v1491 = vld [vmem:[%s1478 + $0x30] sm:$0xf]
      %v1492 = vld [vmem:[%s1478 + $0x34] sm:$0xf]
      %v1493 = vld [vmem:[%s1478 + $0x38] sm:$0xf]
      %v1494 = vld [vmem:[%s1478 + $0x3c] sm:$0xf]
      %v1511 = vunpack.c.l.b16 %v1479
      %v1512 = vunpack.c.l.b16 %v1480
      %v1513 = vunpack.c.l.b16 %v1481
      %v1514 = vunpack.c.l.b16 %v1482
      %v1515 = vunpack.c.l.b16 %v1483
      %v1516 = vunpack.c.l.b16 %v1484
      %v1517 = vunpack.c.l.b16 %v1485
      %v1518 = vunpack.c.l.b16 %v1486
      %v1519 = vunpack.c.l.b16 %v1487
      %v1520 = vunpack.c.l.b16 %v1488
      %v1521 = vunpack.c.l.b16 %v1489
      %v1522 = vunpack.c.l.b16 %v1490
      %v1523 = vunpack.c.l.b16 %v1491
      %v1524 = vunpack.c.l.b16 %v1492
      %v1525 = vunpack.c.l.b16 %v1493
      %v1526 = vunpack.c.l.b16 %v1494
      %v1527 = vpack.c.b16 %v1512, %v1511
      %v1528 = vpack.c.b16 %v1514, %v1513
      %v1529 = vpack.c.b16 %v1516, %v1515
      %v1530 = vpack.c.b16 %v1518, %v1517
      %v1531 = vpack.c.b16 %v1520, %v1519
      %v1532 = vpack.c.b16 %v1522, %v1521
      %v1533 = vpack.c.b16 %v1524, %v1523
      %v1534 = vpack.c.b16 %v1526, %v1525
      %1543 = vmatpush.bf16.msra.mxu0 %v1534
      %1544 = vmatpush.bf16.msra.mxu0 %v1533
      %1545 = vmatpush.bf16.msra.mxu0 %v1532
      %1546 = vmatpush.bf16.msra.mxu0 %v1531
      %1547 = vmatpush.bf16.msra.mxu0 %v1530
      %1548 = vmatpush.bf16.msra.mxu0 %v1529
      %1549 = vmatpush.bf16.msra.mxu0 %v1528
      %1550 = vmatpush.bf16.msra.mxu0 %v1527
      %1551 = vmatmul.bf16.gmra.mxu0 %v1462
      %v1552 = vpop.f32.mrf.mxu0
      %v1553 = vadd.f32 0.0, %v1552
      %v1554 = vpop.f32.mrf.mxu0
      %v1555 = vadd.f32 0.0, %v1554
      %1556 = vmatmul.bf16.gmra.mxu0 %v1463
      %v1557 = vpop.f32.mrf.mxu0
      %v1558 = vadd.f32 0.0, %v1557
      %v1559 = vpop.f32.mrf.mxu0
      %v1560 = vadd.f32 0.0, %v1559
      %1561 = vmatmul.bf16.gmra.mxu0 %v1464
      %v1562 = vpop.f32.mrf.mxu0
      %v1563 = vadd.f32 0.0, %v1562
      %v1564 = vpop.f32.mrf.mxu0
      %v1565 = vadd.f32 0.0, %v1564
      %1566 = vmatmul.bf16.gmra.mxu0 %v1465
      %v1567 = vpop.f32.mrf.mxu0
      %v1568 = vadd.f32 0.0, %v1567
      %v1569 = vpop.f32.mrf.mxu0
      %v1570 = vadd.f32 0.0, %v1569
      %1571 = vmatmul.bf16.gmra.mxu0 %v1466
      %v1572 = vpop.f32.mrf.mxu0
      %v1573 = vadd.f32 0.0, %v1572
      %v1574 = vpop.f32.mrf.mxu0
      %v1575 = vadd.f32 0.0, %v1574
      %1576 = vmatmul.bf16.gmra.mxu0 %v1467
      %v1577 = vpop.f32.mrf.mxu0
      %v1578 = vadd.f32 0.0, %v1577
      %v1579 = vpop.f32.mrf.mxu0
      %v1580 = vadd.f32 0.0, %v1579
      %1581 = vmatmul.bf16.gmra.mxu0 %v1468
      %v1582 = vpop.f32.mrf.mxu0
      %v1583 = vadd.f32 0.0, %v1582
      %v1584 = vpop.f32.mrf.mxu0
      %v1585 = vadd.f32 0.0, %v1584
      %1586 = vmatmul.bf16.gmra.mxu0 %v1469
      %v1587 = vpop.f32.mrf.mxu0
      %v1588 = vadd.f32 0.0, %v1587
      %v1589 = vpop.f32.mrf.mxu0
      %v1590 = vadd.f32 0.0, %v1589
      %1591 = vmatmul.bf16.gmra.mxu0 %v1470
      %v1592 = vpop.f32.mrf.mxu0
      %v1593 = vadd.f32 0.0, %v1592
      %v1594 = vpop.f32.mrf.mxu0
      %v1595 = vadd.f32 0.0, %v1594
      %1596 = vmatmul.bf16.gmra.mxu0 %v1471
      %v1597 = vpop.f32.mrf.mxu0
      %v1598 = vadd.f32 0.0, %v1597
      %v1599 = vpop.f32.mrf.mxu0
      %v1600 = vadd.f32 0.0, %v1599
      %1601 = vmatmul.bf16.gmra.mxu0 %v1472
      %v1602 = vpop.f32.mrf.mxu0
      %v1603 = vadd.f32 0.0, %v1602
      %v1604 = vpop.f32.mrf.mxu0
      %v1605 = vadd.f32 0.0, %v1604
      %1606 = vmatmul.bf16.gmra.mxu0 %v1473
      %v1607 = vpop.f32.mrf.mxu0
      %v1608 = vadd.f32 0.0, %v1607
      %v1609 = vpop.f32.mrf.mxu0
      %v1610 = vadd.f32 0.0, %v1609
      %1611 = vmatmul.bf16.gmra.mxu0 %v1474
      %v1612 = vpop.f32.mrf.mxu0
      %v1613 = vadd.f32 0.0, %v1612
      %v1614 = vpop.f32.mrf.mxu0
      %v1615 = vadd.f32 0.0, %v1614
      %1616 = vmatmul.bf16.gmra.mxu0 %v1475
      %v1617 = vpop.f32.mrf.mxu0
      %v1618 = vadd.f32 0.0, %v1617
      %v1619 = vpop.f32.mrf.mxu0
      %v1620 = vadd.f32 0.0, %v1619
      %1621 = vmatmul.bf16.gmra.mxu0 %v1476
      %v1622 = vpop.f32.mrf.mxu0
      %v1623 = vadd.f32 0.0, %v1622
      %v1624 = vpop.f32.mrf.mxu0
      %v1625 = vadd.f32 0.0, %v1624
      %1626 = vmatmul.bf16.gmra.mxu0 %v1477
      %v1627 = vpop.f32.mrf.mxu0
      %v1628 = vadd.f32 0.0, %v1627
      %v1629 = vpop.f32.mrf.mxu0
      %v1630 = vadd.f32 0.0, %v1629
      %1631 = vdwg.mxu0
      %v1632 = vadd.f32 %v1398, %v1553
      %v1633 = vadd.f32 %v1399, %v1555
      %v1634 = vadd.f32 %v1400, %v1558
      %v1635 = vadd.f32 %v1401, %v1560
      %v1636 = vadd.f32 %v1402, %v1563
      %v1637 = vadd.f32 %v1403, %v1565
      %v1638 = vadd.f32 %v1404, %v1568
      %v1639 = vadd.f32 %v1405, %v1570
      %v1640 = vadd.f32 %v1406, %v1573
      %v1641 = vadd.f32 %v1407, %v1575
      %v1642 = vadd.f32 %v1408, %v1578
      %v1643 = vadd.f32 %v1409, %v1580
      %v1644 = vadd.f32 %v1410, %v1583
      %v1645 = vadd.f32 %v1411, %v1585
      %v1646 = vadd.f32 %v1412, %v1588
      %v1647 = vadd.f32 %v1413, %v1590
      %v1648 = vadd.f32 %v1414, %v1593
      %v1649 = vadd.f32 %v1415, %v1595
      %v1650 = vadd.f32 %v1416, %v1598
      %v1651 = vadd.f32 %v1417, %v1600
      %v1652 = vadd.f32 %v1418, %v1603
      %v1653 = vadd.f32 %v1419, %v1605
      %v1654 = vadd.f32 %v1420, %v1608
      %v1655 = vadd.f32 %v1421, %v1610
      %v1656 = vadd.f32 %v1422, %v1613
      %v1657 = vadd.f32 %v1423, %v1615
      %v1658 = vadd.f32 %v1424, %v1618
      %v1659 = vadd.f32 %v1425, %v1620
      %v1660 = vadd.f32 %v1426, %v1623
      %v1661 = vadd.f32 %v1427, %v1625
      %v1662 = vadd.f32 %v1428, %v1628
      %v1663 = vadd.f32 %v1429, %v1630
      %s1664 = scalar_lea.vmem [#allocation2], 48
      %v1665 = vld [vmem:[%s1664] sm:$0xff]
      %v1666 = vld [vmem:[%s1664 + $0x8] sm:$0xff]
      %v1667 = vld [vmem:[%s1664 + $0x18] sm:$0xff]
      %v1668 = vld [vmem:[%s1664 + $0x20] sm:$0xff]
      %v1669 = vld [vmem:[%s1664 + $0x30] sm:$0xff]
      %v1670 = vld [vmem:[%s1664 + $0x38] sm:$0xff]
      %v1671 = vld [vmem:[%s1664 + $0x48] sm:$0xff]
      %v1672 = vld [vmem:[%s1664 + $0x50] sm:$0xff]
      %v1673 = vld [vmem:[%s1664 + $0x60] sm:$0xff]
      %v1674 = vld [vmem:[%s1664 + $0x68] sm:$0xff]
      %v1675 = vld [vmem:[%s1664 + $0x78] sm:$0xff]
      %v1676 = vld [vmem:[%s1664 + $0x80] sm:$0xff]
      %v1677 = vld [vmem:[%s1664 + $0x90] sm:$0xff]
      %v1678 = vld [vmem:[%s1664 + $0x98] sm:$0xff]
      %v1679 = vld [vmem:[%s1664 + $0xa8] sm:$0xff]
      %v1680 = vld [vmem:[%s1664 + $0xb0] sm:$0xff]
      %v1681 = vld [vmem:[%s1664 + $0xc0] sm:$0xff]
      %v1682 = vld [vmem:[%s1664 + $0xc8] sm:$0xff]
      %v1683 = vld [vmem:[%s1664 + $0xd8] sm:$0xff]
      %v1684 = vld [vmem:[%s1664 + $0xe0] sm:$0xff]
      %v1685 = vld [vmem:[%s1664 + $0xf0] sm:$0xff]
      %v1686 = vld [vmem:[%s1664 + $0xf8] sm:$0xff]
      %v1687 = vld [vmem:[%s1664 + $0x108] sm:$0xff]
      %v1688 = vld [vmem:[%s1664 + $0x110] sm:$0xff]
      %v1689 = vld [vmem:[%s1664 + $0x120] sm:$0xff]
      %v1690 = vld [vmem:[%s1664 + $0x128] sm:$0xff]
      %v1691 = vld [vmem:[%s1664 + $0x138] sm:$0xff]
      %v1692 = vld [vmem:[%s1664 + $0x140] sm:$0xff]
      %v1693 = vld [vmem:[%s1664 + $0x150] sm:$0xff]
      %v1694 = vld [vmem:[%s1664 + $0x158] sm:$0xff]
      %v1695 = vld [vmem:[%s1664 + $0x168] sm:$0xff]
      %v1696 = vld [vmem:[%s1664 + $0x170] sm:$0xff]
      %v1697 = vpack.c.bf16 %v1666, %v1665
      %v1698 = vpack.c.bf16 %v1668, %v1667
      %v1699 = vpack.c.bf16 %v1670, %v1669
      %v1700 = vpack.c.bf16 %v1672, %v1671
      %v1701 = vpack.c.bf16 %v1674, %v1673
      %v1702 = vpack.c.bf16 %v1676, %v1675
      %v1703 = vpack.c.bf16 %v1678, %v1677
      %v1704 = vpack.c.bf16 %v1680, %v1679
      %v1705 = vpack.c.bf16 %v1682, %v1681
      %v1706 = vpack.c.bf16 %v1684, %v1683
      %v1707 = vpack.c.bf16 %v1686, %v1685
      %v1708 = vpack.c.bf16 %v1688, %v1687
      %v1709 = vpack.c.bf16 %v1690, %v1689
      %v1710 = vpack.c.bf16 %v1692, %v1691
      %v1711 = vpack.c.bf16 %v1694, %v1693
      %v1712 = vpack.c.bf16 %v1696, %v1695
      %s1713 = scalar_lea.vmem %s1, 384
      %v1714 = vld [vmem:[%s1713] sm:$0xf]
      %v1715 = vld [vmem:[%s1713 + $0x4] sm:$0xf]
      %v1716 = vld [vmem:[%s1713 + $0x8] sm:$0xf]
      %v1717 = vld [vmem:[%s1713 + $0xc] sm:$0xf]
      %v1718 = vld [vmem:[%s1713 + $0x10] sm:$0xf]
      %v1719 = vld [vmem:[%s1713 + $0x14] sm:$0xf]
      %v1720 = vld [vmem:[%s1713 + $0x18] sm:$0xf]
      %v1721 = vld [vmem:[%s1713 + $0x1c] sm:$0xf]
      %v1722 = vld [vmem:[%s1713 + $0x20] sm:$0xf]
      %v1723 = vld [vmem:[%s1713 + $0x24] sm:$0xf]
      %v1724 = vld [vmem:[%s1713 + $0x28] sm:$0xf]
      %v1725 = vld [vmem:[%s1713 + $0x2c] sm:$0xf]
      %v1726 = vld [vmem:[%s1713 + $0x30] sm:$0xf]
      %v1727 = vld [vmem:[%s1713 + $0x34] sm:$0xf]
      %v1728 = vld [vmem:[%s1713 + $0x38] sm:$0xf]
      %v1729 = vld [vmem:[%s1713 + $0x3c] sm:$0xf]
      %v1746 = vunpack.c.l.b16 %v1714
      %v1747 = vunpack.c.l.b16 %v1715
      %v1748 = vunpack.c.l.b16 %v1716
      %v1749 = vunpack.c.l.b16 %v1717
      %v1750 = vunpack.c.l.b16 %v1718
      %v1751 = vunpack.c.l.b16 %v1719
      %v1752 = vunpack.c.l.b16 %v1720
      %v1753 = vunpack.c.l.b16 %v1721
      %v1754 = vunpack.c.l.b16 %v1722
      %v1755 = vunpack.c.l.b16 %v1723
      %v1756 = vunpack.c.l.b16 %v1724
      %v1757 = vunpack.c.l.b16 %v1725
      %v1758 = vunpack.c.l.b16 %v1726
      %v1759 = vunpack.c.l.b16 %v1727
      %v1760 = vunpack.c.l.b16 %v1728
      %v1761 = vunpack.c.l.b16 %v1729
      %v1762 = vpack.c.b16 %v1747, %v1746
      %v1763 = vpack.c.b16 %v1749, %v1748
      %v1764 = vpack.c.b16 %v1751, %v1750
      %v1765 = vpack.c.b16 %v1753, %v1752
      %v1766 = vpack.c.b16 %v1755, %v1754
      %v1767 = vpack.c.b16 %v1757, %v1756
      %v1768 = vpack.c.b16 %v1759, %v1758
      %v1769 = vpack.c.b16 %v1761, %v1760
      %1778 = vmatpush.bf16.msra.mxu0 %v1769
      %1779 = vmatpush.bf16.msra.mxu0 %v1768
      %1780 = vmatpush.bf16.msra.mxu0 %v1767
      %1781 = vmatpush.bf16.msra.mxu0 %v1766
      %1782 = vmatpush.bf16.msra.mxu0 %v1765
      %1783 = vmatpush.bf16.msra.mxu0 %v1764
      %1784 = vmatpush.bf16.msra.mxu0 %v1763
      %1785 = vmatpush.bf16.msra.mxu0 %v1762
      %1786 = vmatmul.bf16.gmra.mxu0 %v1697
      %v1787 = vpop.f32.mrf.mxu0
      %v1788 = vadd.f32 0.0, %v1787
      %v1789 = vpop.f32.mrf.mxu0
      %v1790 = vadd.f32 0.0, %v1789
      %1791 = vmatmul.bf16.gmra.mxu0 %v1698
      %v1792 = vpop.f32.mrf.mxu0
      %v1793 = vadd.f32 0.0, %v1792
      %v1794 = vpop.f32.mrf.mxu0
      %v1795 = vadd.f32 0.0, %v1794
      %1796 = vmatmul.bf16.gmra.mxu0 %v1699
      %v1797 = vpop.f32.mrf.mxu0
      %v1798 = vadd.f32 0.0, %v1797
      %v1799 = vpop.f32.mrf.mxu0
      %v1800 = vadd.f32 0.0, %v1799
      %1801 = vmatmul.bf16.gmra.mxu0 %v1700
      %v1802 = vpop.f32.mrf.mxu0
      %v1803 = vadd.f32 0.0, %v1802
      %v1804 = vpop.f32.mrf.mxu0
      %v1805 = vadd.f32 0.0, %v1804
      %1806 = vmatmul.bf16.gmra.mxu0 %v1701
      %v1807 = vpop.f32.mrf.mxu0
      %v1808 = vadd.f32 0.0, %v1807
      %v1809 = vpop.f32.mrf.mxu0
      %v1810 = vadd.f32 0.0, %v1809
      %1811 = vmatmul.bf16.gmra.mxu0 %v1702
      %v1812 = vpop.f32.mrf.mxu0
      %v1813 = vadd.f32 0.0, %v1812
      %v1814 = vpop.f32.mrf.mxu0
      %v1815 = vadd.f32 0.0, %v1814
      %1816 = vmatmul.bf16.gmra.mxu0 %v1703
      %v1817 = vpop.f32.mrf.mxu0
      %v1818 = vadd.f32 0.0, %v1817
      %v1819 = vpop.f32.mrf.mxu0
      %v1820 = vadd.f32 0.0, %v1819
      %1821 = vmatmul.bf16.gmra.mxu0 %v1704
      %v1822 = vpop.f32.mrf.mxu0
      %v1823 = vadd.f32 0.0, %v1822
      %v1824 = vpop.f32.mrf.mxu0
      %v1825 = vadd.f32 0.0, %v1824
      %1826 = vmatmul.bf16.gmra.mxu0 %v1705
      %v1827 = vpop.f32.mrf.mxu0
      %v1828 = vadd.f32 0.0, %v1827
      %v1829 = vpop.f32.mrf.mxu0
      %v1830 = vadd.f32 0.0, %v1829
      %1831 = vmatmul.bf16.gmra.mxu0 %v1706
      %v1832 = vpop.f32.mrf.mxu0
      %v1833 = vadd.f32 0.0, %v1832
      %v1834 = vpop.f32.mrf.mxu0
      %v1835 = vadd.f32 0.0, %v1834
      %1836 = vmatmul.bf16.gmra.mxu0 %v1707
      %v1837 = vpop.f32.mrf.mxu0
      %v1838 = vadd.f32 0.0, %v1837
      %v1839 = vpop.f32.mrf.mxu0
      %v1840 = vadd.f32 0.0, %v1839
      %1841 = vmatmul.bf16.gmra.mxu0 %v1708
      %v1842 = vpop.f32.mrf.mxu0
      %v1843 = vadd.f32 0.0, %v1842
      %v1844 = vpop.f32.mrf.mxu0
      %v1845 = vadd.f32 0.0, %v1844
      %1846 = vmatmul.bf16.gmra.mxu0 %v1709
      %v1847 = vpop.f32.mrf.mxu0
      %v1848 = vadd.f32 0.0, %v1847
      %v1849 = vpop.f32.mrf.mxu0
      %v1850 = vadd.f32 0.0, %v1849
      %1851 = vmatmul.bf16.gmra.mxu0 %v1710
      %v1852 = vpop.f32.mrf.mxu0
      %v1853 = vadd.f32 0.0, %v1852
      %v1854 = vpop.f32.mrf.mxu0
      %v1855 = vadd.f32 0.0, %v1854
      %1856 = vmatmul.bf16.gmra.mxu0 %v1711
      %v1857 = vpop.f32.mrf.mxu0
      %v1858 = vadd.f32 0.0, %v1857
      %v1859 = vpop.f32.mrf.mxu0
      %v1860 = vadd.f32 0.0, %v1859
      %1861 = vmatmul.bf16.gmra.mxu0 %v1712
      %v1862 = vpop.f32.mrf.mxu0
      %v1863 = vadd.f32 0.0, %v1862
      %v1864 = vpop.f32.mrf.mxu0
      %v1865 = vadd.f32 0.0, %v1864
      %1866 = vdwg.mxu0
      %v1867 = vadd.f32 %v1632, %v1788
      %v1868 = vadd.f32 %v1633, %v1790
      %v1869 = vadd.f32 %v1634, %v1793
      %v1870 = vadd.f32 %v1635, %v1795
      %v1871 = vadd.f32 %v1636, %v1798
      %v1872 = vadd.f32 %v1637, %v1800
      %v1873 = vadd.f32 %v1638, %v1803
      %v1874 = vadd.f32 %v1639, %v1805
      %v1875 = vadd.f32 %v1640, %v1808
      %v1876 = vadd.f32 %v1641, %v1810
      %v1877 = vadd.f32 %v1642, %v1813
      %v1878 = vadd.f32 %v1643, %v1815
      %v1879 = vadd.f32 %v1644, %v1818
      %v1880 = vadd.f32 %v1645, %v1820
      %v1881 = vadd.f32 %v1646, %v1823
      %v1882 = vadd.f32 %v1647, %v1825
      %v1883 = vadd.f32 %v1648, %v1828
      %v1884 = vadd.f32 %v1649, %v1830
      %v1885 = vadd.f32 %v1650, %v1833
      %v1886 = vadd.f32 %v1651, %v1835
      %v1887 = vadd.f32 %v1652, %v1838
      %v1888 = vadd.f32 %v1653, %v1840
      %v1889 = vadd.f32 %v1654, %v1843
      %v1890 = vadd.f32 %v1655, %v1845
      %v1891 = vadd.f32 %v1656, %v1848
      %v1892 = vadd.f32 %v1657, %v1850
      %v1893 = vadd.f32 %v1658, %v1853
      %v1894 = vadd.f32 %v1659, %v1855
      %v1895 = vadd.f32 %v1660, %v1858
      %v1896 = vadd.f32 %v1661, %v1860
      %v1897 = vadd.f32 %v1662, %v1863
      %v1898 = vadd.f32 %v1663, %v1865
      %v1899 = vld [vmem:[%s1664 + $0x1] sm:$0xff]
      %v1900 = vld [vmem:[%s1664 + $0x9] sm:$0xff]
      %v1901 = vld [vmem:[%s1664 + $0x19] sm:$0xff]
      %v1902 = vld [vmem:[%s1664 + $0x21] sm:$0xff]
      %v1903 = vld [vmem:[%s1664 + $0x31] sm:$0xff]
      %v1904 = vld [vmem:[%s1664 + $0x39] sm:$0xff]
      %v1905 = vld [vmem:[%s1664 + $0x49] sm:$0xff]
      %v1906 = vld [vmem:[%s1664 + $0x51] sm:$0xff]
      %v1907 = vld [vmem:[%s1664 + $0x61] sm:$0xff]
      %v1908 = vld [vmem:[%s1664 + $0x69] sm:$0xff]
      %v1909 = vld [vmem:[%s1664 + $0x79] sm:$0xff]
      %v1910 = vld [vmem:[%s1664 + $0x81] sm:$0xff]
      %v1911 = vld [vmem:[%s1664 + $0x91] sm:$0xff]
      %v1912 = vld [vmem:[%s1664 + $0x99] sm:$0xff]
      %v1913 = vld [vmem:[%s1664 + $0xa9] sm:$0xff]
      %v1914 = vld [vmem:[%s1664 + $0xb1] sm:$0xff]
      %v1915 = vld [vmem:[%s1664 + $0xc1] sm:$0xff]
      %v1916 = vld [vmem:[%s1664 + $0xc9] sm:$0xff]
      %v1917 = vld [vmem:[%s1664 + $0xd9] sm:$0xff]
      %v1918 = vld [vmem:[%s1664 + $0xe1] sm:$0xff]
      %v1919 = vld [vmem:[%s1664 + $0xf1] sm:$0xff]
      %v1920 = vld [vmem:[%s1664 + $0xf9] sm:$0xff]
      %v1921 = vld [vmem:[%s1664 + $0x109] sm:$0xff]
      %v1922 = vld [vmem:[%s1664 + $0x111] sm:$0xff]
      %v1923 = vld [vmem:[%s1664 + $0x121] sm:$0xff]
      %v1924 = vld [vmem:[%s1664 + $0x129] sm:$0xff]
      %v1925 = vld [vmem:[%s1664 + $0x139] sm:$0xff]
      %v1926 = vld [vmem:[%s1664 + $0x141] sm:$0xff]
      %v1927 = vld [vmem:[%s1664 + $0x151] sm:$0xff]
      %v1928 = vld [vmem:[%s1664 + $0x159] sm:$0xff]
      %v1929 = vld [vmem:[%s1664 + $0x169] sm:$0xff]
      %v1930 = vld [vmem:[%s1664 + $0x171] sm:$0xff]
      %v1931 = vpack.c.bf16 %v1900, %v1899
      %v1932 = vpack.c.bf16 %v1902, %v1901
      %v1933 = vpack.c.bf16 %v1904, %v1903
      %v1934 = vpack.c.bf16 %v1906, %v1905
      %v1935 = vpack.c.bf16 %v1908, %v1907
      %v1936 = vpack.c.bf16 %v1910, %v1909
      %v1937 = vpack.c.bf16 %v1912, %v1911
      %v1938 = vpack.c.bf16 %v1914, %v1913
      %v1939 = vpack.c.bf16 %v1916, %v1915
      %v1940 = vpack.c.bf16 %v1918, %v1917
      %v1941 = vpack.c.bf16 %v1920, %v1919
      %v1942 = vpack.c.bf16 %v1922, %v1921
      %v1943 = vpack.c.bf16 %v1924, %v1923
      %v1944 = vpack.c.bf16 %v1926, %v1925
      %v1945 = vpack.c.bf16 %v1928, %v1927
      %v1946 = vpack.c.bf16 %v1930, %v1929
      %s1947 = scalar_lea.vmem %s1, 448
      %v1948 = vld [vmem:[%s1947] sm:$0xf]
      %v1949 = vld [vmem:[%s1947 + $0x4] sm:$0xf]
      %v1950 = vld [vmem:[%s1947 + $0x8] sm:$0xf]
      %v1951 = vld [vmem:[%s1947 + $0xc] sm:$0xf]
      %v1952 = vld [vmem:[%s1947 + $0x10] sm:$0xf]
      %v1953 = vld [vmem:[%s1947 + $0x14] sm:$0xf]
      %v1954 = vld [vmem:[%s1947 + $0x18] sm:$0xf]
      %v1955 = vld [vmem:[%s1947 + $0x1c] sm:$0xf]
      %v1956 = vld [vmem:[%s1947 + $0x20] sm:$0xf]
      %v1957 = vld [vmem:[%s1947 + $0x24] sm:$0xf]
      %v1958 = vld [vmem:[%s1947 + $0x28] sm:$0xf]
      %v1959 = vld [vmem:[%s1947 + $0x2c] sm:$0xf]
      %v1960 = vld [vmem:[%s1947 + $0x30] sm:$0xf]
      %v1961 = vld [vmem:[%s1947 + $0x34] sm:$0xf]
      %v1962 = vld [vmem:[%s1947 + $0x38] sm:$0xf]
      %v1963 = vld [vmem:[%s1947 + $0x3c] sm:$0xf]
      %v1980 = vunpack.c.l.b16 %v1948
      %v1981 = vunpack.c.l.b16 %v1949
      %v1982 = vunpack.c.l.b16 %v1950
      %v1983 = vunpack.c.l.b16 %v1951
      %v1984 = vunpack.c.l.b16 %v1952
      %v1985 = vunpack.c.l.b16 %v1953
      %v1986 = vunpack.c.l.b16 %v1954
      %v1987 = vunpack.c.l.b16 %v1955
      %v1988 = vunpack.c.l.b16 %v1956
      %v1989 = vunpack.c.l.b16 %v1957
      %v1990 = vunpack.c.l.b16 %v1958
      %v1991 = vunpack.c.l.b16 %v1959
      %v1992 = vunpack.c.l.b16 %v1960
      %v1993 = vunpack.c.l.b16 %v1961
      %v1994 = vunpack.c.l.b16 %v1962
      %v1995 = vunpack.c.l.b16 %v1963
      %v1996 = vpack.c.b16 %v1981, %v1980
      %v1997 = vpack.c.b16 %v1983, %v1982
      %v1998 = vpack.c.b16 %v1985, %v1984
      %v1999 = vpack.c.b16 %v1987, %v1986
      %v2000 = vpack.c.b16 %v1989, %v1988
      %v2001 = vpack.c.b16 %v1991, %v1990
      %v2002 = vpack.c.b16 %v1993, %v1992
      %v2003 = vpack.c.b16 %v1995, %v1994
      %2012 = vmatpush.bf16.msra.mxu0 %v2003
      %2013 = vmatpush.bf16.msra.mxu0 %v2002
      %2014 = vmatpush.bf16.msra.mxu0 %v2001
      %2015 = vmatpush.bf16.msra.mxu0 %v2000
      %2016 = vmatpush.bf16.msra.mxu0 %v1999
      %2017 = vmatpush.bf16.msra.mxu0 %v1998
      %2018 = vmatpush.bf16.msra.mxu0 %v1997
      %2019 = vmatpush.bf16.msra.mxu0 %v1996
      %2020 = vmatmul.bf16.gmra.mxu0 %v1931
      %v2021 = vpop.f32.mrf.mxu0
      %v2022 = vadd.f32 0.0, %v2021
      %v2023 = vpop.f32.mrf.mxu0
      %v2024 = vadd.f32 0.0, %v2023
      %2025 = vmatmul.bf16.gmra.mxu0 %v1932
      %v2026 = vpop.f32.mrf.mxu0
      %v2027 = vadd.f32 0.0, %v2026
      %v2028 = vpop.f32.mrf.mxu0
      %v2029 = vadd.f32 0.0, %v2028
      %2030 = vmatmul.bf16.gmra.mxu0 %v1933
      %v2031 = vpop.f32.mrf.mxu0
      %v2032 = vadd.f32 0.0, %v2031
      %v2033 = vpop.f32.mrf.mxu0
      %v2034 = vadd.f32 0.0, %v2033
      %2035 = vmatmul.bf16.gmra.mxu0 %v1934
      %v2036 = vpop.f32.mrf.mxu0
      %v2037 = vadd.f32 0.0, %v2036
      %v2038 = vpop.f32.mrf.mxu0
      %v2039 = vadd.f32 0.0, %v2038
      %2040 = vmatmul.bf16.gmra.mxu0 %v1935
      %v2041 = vpop.f32.mrf.mxu0
      %v2042 = vadd.f32 0.0, %v2041
      %v2043 = vpop.f32.mrf.mxu0
      %v2044 = vadd.f32 0.0, %v2043
      %2045 = vmatmul.bf16.gmra.mxu0 %v1936
      %v2046 = vpop.f32.mrf.mxu0
      %v2047 = vadd.f32 0.0, %v2046
      %v2048 = vpop.f32.mrf.mxu0
      %v2049 = vadd.f32 0.0, %v2048
      %2050 = vmatmul.bf16.gmra.mxu0 %v1937
      %v2051 = vpop.f32.mrf.mxu0
      %v2052 = vadd.f32 0.0, %v2051
      %v2053 = vpop.f32.mrf.mxu0
      %v2054 = vadd.f32 0.0, %v2053
      %2055 = vmatmul.bf16.gmra.mxu0 %v1938
      %v2056 = vpop.f32.mrf.mxu0
      %v2057 = vadd.f32 0.0, %v2056
      %v2058 = vpop.f32.mrf.mxu0
      %v2059 = vadd.f32 0.0, %v2058
      %2060 = vmatmul.bf16.gmra.mxu0 %v1939
      %v2061 = vpop.f32.mrf.mxu0
      %v2062 = vadd.f32 0.0, %v2061
      %v2063 = vpop.f32.mrf.mxu0
      %v2064 = vadd.f32 0.0, %v2063
      %2065 = vmatmul.bf16.gmra.mxu0 %v1940
      %v2066 = vpop.f32.mrf.mxu0
      %v2067 = vadd.f32 0.0, %v2066
      %v2068 = vpop.f32.mrf.mxu0
      %v2069 = vadd.f32 0.0, %v2068
      %2070 = vmatmul.bf16.gmra.mxu0 %v1941
      %v2071 = vpop.f32.mrf.mxu0
      %v2072 = vadd.f32 0.0, %v2071
      %v2073 = vpop.f32.mrf.mxu0
      %v2074 = vadd.f32 0.0, %v2073
      %2075 = vmatmul.bf16.gmra.mxu0 %v1942
      %v2076 = vpop.f32.mrf.mxu0
      %v2077 = vadd.f32 0.0, %v2076
      %v2078 = vpop.f32.mrf.mxu0
      %v2079 = vadd.f32 0.0, %v2078
      %2080 = vmatmul.bf16.gmra.mxu0 %v1943
      %v2081 = vpop.f32.mrf.mxu0
      %v2082 = vadd.f32 0.0, %v2081
      %v2083 = vpop.f32.mrf.mxu0
      %v2084 = vadd.f32 0.0, %v2083
      %2085 = vmatmul.bf16.gmra.mxu0 %v1944
      %v2086 = vpop.f32.mrf.mxu0
      %v2087 = vadd.f32 0.0, %v2086
      %v2088 = vpop.f32.mrf.mxu0
      %v2089 = vadd.f32 0.0, %v2088
      %2090 = vmatmul.bf16.gmra.mxu0 %v1945
      %v2091 = vpop.f32.mrf.mxu0
      %v2092 = vadd.f32 0.0, %v2091
      %v2093 = vpop.f32.mrf.mxu0
      %v2094 = vadd.f32 0.0, %v2093
      %2095 = vmatmul.bf16.gmra.mxu0 %v1946
      %v2096 = vpop.f32.mrf.mxu0
      %v2097 = vadd.f32 0.0, %v2096
      %v2098 = vpop.f32.mrf.mxu0
      %v2099 = vadd.f32 0.0, %v2098
      %2100 = vdwg.mxu0
      %v2101 = vadd.f32 %v1867, %v2022
      %v2102 = vadd.f32 %v1868, %v2024
      %v2103 = vadd.f32 %v1869, %v2027
      %v2104 = vadd.f32 %v1870, %v2029
      %v2105 = vadd.f32 %v1871, %v2032
      %v2106 = vadd.f32 %v1872, %v2034
      %v2107 = vadd.f32 %v1873, %v2037
      %v2108 = vadd.f32 %v1874, %v2039
      %v2109 = vadd.f32 %v1875, %v2042
      %v2110 = vadd.f32 %v1876, %v2044
      %v2111 = vadd.f32 %v1877, %v2047
      %v2112 = vadd.f32 %v1878, %v2049
      %v2113 = vadd.f32 %v1879, %v2052
      %v2114 = vadd.f32 %v1880, %v2054
      %v2115 = vadd.f32 %v1881, %v2057
      %v2116 = vadd.f32 %v1882, %v2059
      %v2117 = vadd.f32 %v1883, %v2062
      %v2118 = vadd.f32 %v1884, %v2064
      %v2119 = vadd.f32 %v1885, %v2067
      %v2120 = vadd.f32 %v1886, %v2069
      %v2121 = vadd.f32 %v1887, %v2072
      %v2122 = vadd.f32 %v1888, %v2074
      %v2123 = vadd.f32 %v1889, %v2077
      %v2124 = vadd.f32 %v1890, %v2079
      %v2125 = vadd.f32 %v1891, %v2082
      %v2126 = vadd.f32 %v1892, %v2084
      %v2127 = vadd.f32 %v1893, %v2087
      %v2128 = vadd.f32 %v1894, %v2089
      %v2129 = vadd.f32 %v1895, %v2092
      %v2130 = vadd.f32 %v1896, %v2094
      %v2131 = vadd.f32 %v1897, %v2097
      %v2132 = vadd.f32 %v1898, %v2099
      %v2133 = vld [vmem:[%s1664 + $0x2] sm:$0xff]
      %v2134 = vld [vmem:[%s1664 + $0xa] sm:$0xff]
      %v2135 = vld [vmem:[%s1664 + $0x1a] sm:$0xff]
      %v2136 = vld [vmem:[%s1664 + $0x22] sm:$0xff]
      %v2137 = vld [vmem:[%s1664 + $0x32] sm:$0xff]
      %v2138 = vld [vmem:[%s1664 + $0x3a] sm:$0xff]
      %v2139 = vld [vmem:[%s1664 + $0x4a] sm:$0xff]
      %v2140 = vld [vmem:[%s1664 + $0x52] sm:$0xff]
      %v2141 = vld [vmem:[%s1664 + $0x62] sm:$0xff]
      %v2142 = vld [vmem:[%s1664 + $0x6a] sm:$0xff]
      %v2143 = vld [vmem:[%s1664 + $0x7a] sm:$0xff]
      %v2144 = vld [vmem:[%s1664 + $0x82] sm:$0xff]
      %v2145 = vld [vmem:[%s1664 + $0x92] sm:$0xff]
      %v2146 = vld [vmem:[%s1664 + $0x9a] sm:$0xff]
      %v2147 = vld [vmem:[%s1664 + $0xaa] sm:$0xff]
      %v2148 = vld [vmem:[%s1664 + $0xb2] sm:$0xff]
      %v2149 = vld [vmem:[%s1664 + $0xc2] sm:$0xff]
      %v2150 = vld [vmem:[%s1664 + $0xca] sm:$0xff]
      %v2151 = vld [vmem:[%s1664 + $0xda] sm:$0xff]
      %v2152 = vld [vmem:[%s1664 + $0xe2] sm:$0xff]
      %v2153 = vld [vmem:[%s1664 + $0xf2] sm:$0xff]
      %v2154 = vld [vmem:[%s1664 + $0xfa] sm:$0xff]
      %v2155 = vld [vmem:[%s1664 + $0x10a] sm:$0xff]
      %v2156 = vld [vmem:[%s1664 + $0x112] sm:$0xff]
      %v2157 = vld [vmem:[%s1664 + $0x122] sm:$0xff]
      %v2158 = vld [vmem:[%s1664 + $0x12a] sm:$0xff]
      %v2159 = vld [vmem:[%s1664 + $0x13a] sm:$0xff]
      %v2160 = vld [vmem:[%s1664 + $0x142] sm:$0xff]
      %v2161 = vld [vmem:[%s1664 + $0x152] sm:$0xff]
      %v2162 = vld [vmem:[%s1664 + $0x15a] sm:$0xff]
      %v2163 = vld [vmem:[%s1664 + $0x16a] sm:$0xff]
      %v2164 = vld [vmem:[%s1664 + $0x172] sm:$0xff]
      %v2165 = vpack.c.bf16 %v2134, %v2133
      %v2166 = vpack.c.bf16 %v2136, %v2135
      %v2167 = vpack.c.bf16 %v2138, %v2137
      %v2168 = vpack.c.bf16 %v2140, %v2139
      %v2169 = vpack.c.bf16 %v2142, %v2141
      %v2170 = vpack.c.bf16 %v2144, %v2143
      %v2171 = vpack.c.bf16 %v2146, %v2145
      %v2172 = vpack.c.bf16 %v2148, %v2147
      %v2173 = vpack.c.bf16 %v2150, %v2149
      %v2174 = vpack.c.bf16 %v2152, %v2151
      %v2175 = vpack.c.bf16 %v2154, %v2153
      %v2176 = vpack.c.bf16 %v2156, %v2155
      %v2177 = vpack.c.bf16 %v2158, %v2157
      %v2178 = vpack.c.bf16 %v2160, %v2159
      %v2179 = vpack.c.bf16 %v2162, %v2161
      %v2180 = vpack.c.bf16 %v2164, %v2163
      %s2181 = scalar_lea.vmem %s1, 512
      %v2182 = vld [vmem:[%s2181] sm:$0xf]
      %v2183 = vld [vmem:[%s2181 + $0x4] sm:$0xf]
      %v2184 = vld [vmem:[%s2181 + $0x8] sm:$0xf]
      %v2185 = vld [vmem:[%s2181 + $0xc] sm:$0xf]
      %v2186 = vld [vmem:[%s2181 + $0x10] sm:$0xf]
      %v2187 = vld [vmem:[%s2181 + $0x14] sm:$0xf]
      %v2188 = vld [vmem:[%s2181 + $0x18] sm:$0xf]
      %v2189 = vld [vmem:[%s2181 + $0x1c] sm:$0xf]
      %v2190 = vld [vmem:[%s2181 + $0x20] sm:$0xf]
      %v2191 = vld [vmem:[%s2181 + $0x24] sm:$0xf]
      %v2192 = vld [vmem:[%s2181 + $0x28] sm:$0xf]
      %v2193 = vld [vmem:[%s2181 + $0x2c] sm:$0xf]
      %v2194 = vld [vmem:[%s2181 + $0x30] sm:$0xf]
      %v2195 = vld [vmem:[%s2181 + $0x34] sm:$0xf]
      %v2196 = vld [vmem:[%s2181 + $0x38] sm:$0xf]
      %v2197 = vld [vmem:[%s2181 + $0x3c] sm:$0xf]
      %v2214 = vunpack.c.l.b16 %v2182
      %v2215 = vunpack.c.l.b16 %v2183
      %v2216 = vunpack.c.l.b16 %v2184
      %v2217 = vunpack.c.l.b16 %v2185
      %v2218 = vunpack.c.l.b16 %v2186
      %v2219 = vunpack.c.l.b16 %v2187
      %v2220 = vunpack.c.l.b16 %v2188
      %v2221 = vunpack.c.l.b16 %v2189
      %v2222 = vunpack.c.l.b16 %v2190
      %v2223 = vunpack.c.l.b16 %v2191
      %v2224 = vunpack.c.l.b16 %v2192
      %v2225 = vunpack.c.l.b16 %v2193
      %v2226 = vunpack.c.l.b16 %v2194
      %v2227 = vunpack.c.l.b16 %v2195
      %v2228 = vunpack.c.l.b16 %v2196
      %v2229 = vunpack.c.l.b16 %v2197
      %v2230 = vpack.c.b16 %v2215, %v2214
      %v2231 = vpack.c.b16 %v2217, %v2216
      %v2232 = vpack.c.b16 %v2219, %v2218
      %v2233 = vpack.c.b16 %v2221, %v2220
      %v2234 = vpack.c.b16 %v2223, %v2222
      %v2235 = vpack.c.b16 %v2225, %v2224
      %v2236 = vpack.c.b16 %v2227, %v2226
      %v2237 = vpack.c.b16 %v2229, %v2228
      %2246 = vmatpush.bf16.msra.mxu0 %v2237
      %2247 = vmatpush.bf16.msra.mxu0 %v2236
      %2248 = vmatpush.bf16.msra.mxu0 %v2235
      %2249 = vmatpush.bf16.msra.mxu0 %v2234
      %2250 = vmatpush.bf16.msra.mxu0 %v2233
      %2251 = vmatpush.bf16.msra.mxu0 %v2232
      %2252 = vmatpush.bf16.msra.mxu0 %v2231
      %2253 = vmatpush.bf16.msra.mxu0 %v2230
      %2254 = vmatmul.bf16.gmra.mxu0 %v2165
      %v2255 = vpop.f32.mrf.mxu0
      %v2256 = vadd.f32 0.0, %v2255
      %v2257 = vpop.f32.mrf.mxu0
      %v2258 = vadd.f32 0.0, %v2257
      %2259 = vmatmul.bf16.gmra.mxu0 %v2166
      %v2260 = vpop.f32.mrf.mxu0
      %v2261 = vadd.f32 0.0, %v2260
      %v2262 = vpop.f32.mrf.mxu0
      %v2263 = vadd.f32 0.0, %v2262
      %2264 = vmatmul.bf16.gmra.mxu0 %v2167
      %v2265 = vpop.f32.mrf.mxu0
      %v2266 = vadd.f32 0.0, %v2265
      %v2267 = vpop.f32.mrf.mxu0
      %v2268 = vadd.f32 0.0, %v2267
      %2269 = vmatmul.bf16.gmra.mxu0 %v2168
      %v2270 = vpop.f32.mrf.mxu0
      %v2271 = vadd.f32 0.0, %v2270
      %v2272 = vpop.f32.mrf.mxu0
      %v2273 = vadd.f32 0.0, %v2272
      %2274 = vmatmul.bf16.gmra.mxu0 %v2169
      %v2275 = vpop.f32.mrf.mxu0
      %v2276 = vadd.f32 0.0, %v2275
      %v2277 = vpop.f32.mrf.mxu0
      %v2278 = vadd.f32 0.0, %v2277
      %2279 = vmatmul.bf16.gmra.mxu0 %v2170
      %v2280 = vpop.f32.mrf.mxu0
      %v2281 = vadd.f32 0.0, %v2280
      %v2282 = vpop.f32.mrf.mxu0
      %v2283 = vadd.f32 0.0, %v2282
      %2284 = vmatmul.bf16.gmra.mxu0 %v2171
      %v2285 = vpop.f32.mrf.mxu0
      %v2286 = vadd.f32 0.0, %v2285
      %v2287 = vpop.f32.mrf.mxu0
      %v2288 = vadd.f32 0.0, %v2287
      %2289 = vmatmul.bf16.gmra.mxu0 %v2172
      %v2290 = vpop.f32.mrf.mxu0
      %v2291 = vadd.f32 0.0, %v2290
      %v2292 = vpop.f32.mrf.mxu0
      %v2293 = vadd.f32 0.0, %v2292
      %2294 = vmatmul.bf16.gmra.mxu0 %v2173
      %v2295 = vpop.f32.mrf.mxu0
      %v2296 = vadd.f32 0.0, %v2295
      %v2297 = vpop.f32.mrf.mxu0
      %v2298 = vadd.f32 0.0, %v2297
      %2299 = vmatmul.bf16.gmra.mxu0 %v2174
      %v2300 = vpop.f32.mrf.mxu0
      %v2301 = vadd.f32 0.0, %v2300
      %v2302 = vpop.f32.mrf.mxu0
      %v2303 = vadd.f32 0.0, %v2302
      %2304 = vmatmul.bf16.gmra.mxu0 %v2175
      %v2305 = vpop.f32.mrf.mxu0
      %v2306 = vadd.f32 0.0, %v2305
      %v2307 = vpop.f32.mrf.mxu0
      %v2308 = vadd.f32 0.0, %v2307
      %2309 = vmatmul.bf16.gmra.mxu0 %v2176
      %v2310 = vpop.f32.mrf.mxu0
      %v2311 = vadd.f32 0.0, %v2310
      %v2312 = vpop.f32.mrf.mxu0
      %v2313 = vadd.f32 0.0, %v2312
      %2314 = vmatmul.bf16.gmra.mxu0 %v2177
      %v2315 = vpop.f32.mrf.mxu0
      %v2316 = vadd.f32 0.0, %v2315
      %v2317 = vpop.f32.mrf.mxu0
      %v2318 = vadd.f32 0.0, %v2317
      %2319 = vmatmul.bf16.gmra.mxu0 %v2178
      %v2320 = vpop.f32.mrf.mxu0
      %v2321 = vadd.f32 0.0, %v2320
      %v2322 = vpop.f32.mrf.mxu0
      %v2323 = vadd.f32 0.0, %v2322
      %2324 = vmatmul.bf16.gmra.mxu0 %v2179
      %v2325 = vpop.f32.mrf.mxu0
      %v2326 = vadd.f32 0.0, %v2325
      %v2327 = vpop.f32.mrf.mxu0
      %v2328 = vadd.f32 0.0, %v2327
      %2329 = vmatmul.bf16.gmra.mxu0 %v2180
      %v2330 = vpop.f32.mrf.mxu0
      %v2331 = vadd.f32 0.0, %v2330
      %v2332 = vpop.f32.mrf.mxu0
      %v2333 = vadd.f32 0.0, %v2332
      %2334 = vdwg.mxu0
      %v2335 = vadd.f32 %v2101, %v2256
      %v2336 = vadd.f32 %v2102, %v2258
      %v2337 = vadd.f32 %v2103, %v2261
      %v2338 = vadd.f32 %v2104, %v2263
      %v2339 = vadd.f32 %v2105, %v2266
      %v2340 = vadd.f32 %v2106, %v2268
      %v2341 = vadd.f32 %v2107, %v2271
      %v2342 = vadd.f32 %v2108, %v2273
      %v2343 = vadd.f32 %v2109, %v2276
      %v2344 = vadd.f32 %v2110, %v2278
      %v2345 = vadd.f32 %v2111, %v2281
      %v2346 = vadd.f32 %v2112, %v2283
      %v2347 = vadd.f32 %v2113, %v2286
      %v2348 = vadd.f32 %v2114, %v2288
      %v2349 = vadd.f32 %v2115, %v2291
      %v2350 = vadd.f32 %v2116, %v2293
      %v2351 = vadd.f32 %v2117, %v2296
      %v2352 = vadd.f32 %v2118, %v2298
      %v2353 = vadd.f32 %v2119, %v2301
      %v2354 = vadd.f32 %v2120, %v2303
      %v2355 = vadd.f32 %v2121, %v2306
      %v2356 = vadd.f32 %v2122, %v2308
      %v2357 = vadd.f32 %v2123, %v2311
      %v2358 = vadd.f32 %v2124, %v2313
      %v2359 = vadd.f32 %v2125, %v2316
      %v2360 = vadd.f32 %v2126, %v2318
      %v2361 = vadd.f32 %v2127, %v2321
      %v2362 = vadd.f32 %v2128, %v2323
      %v2363 = vadd.f32 %v2129, %v2326
      %v2364 = vadd.f32 %v2130, %v2328
      %v2365 = vadd.f32 %v2131, %v2331
      %v2366 = vadd.f32 %v2132, %v2333
      %2367 = vst [vmem:[%s168] sm:$0xff] %v2335
      %2368 = vst [vmem:[%s168 + $0x8] sm:$0xff] %v2336
      %2369 = vst [vmem:[%s168 + $0x10] sm:$0xff] %v2337
      %2370 = vst [vmem:[%s168 + $0x18] sm:$0xff] %v2338
      %2371 = vst [vmem:[%s168 + $0x20] sm:$0xff] %v2339
      %2372 = vst [vmem:[%s168 + $0x28] sm:$0xff] %v2340
      %2373 = vst [vmem:[%s168 + $0x30] sm:$0xff] %v2341
      %2374 = vst [vmem:[%s168 + $0x38] sm:$0xff] %v2342
      %2375 = vst [vmem:[%s168 + $0x40] sm:$0xff] %v2343
      %2376 = vst [vmem:[%s168 + $0x48] sm:$0xff] %v2344
      %2377 = vst [vmem:[%s168 + $0x50] sm:$0xff] %v2345
      %2378 = vst [vmem:[%s168 + $0x58] sm:$0xff] %v2346
      %2379 = vst [vmem:[%s168 + $0x60] sm:$0xff] %v2347
      %2380 = vst [vmem:[%s168 + $0x68] sm:$0xff] %v2348
      %2381 = vst [vmem:[%s168 + $0x70] sm:$0xff] %v2349
      %2382 = vst [vmem:[%s168 + $0x78] sm:$0xff] %v2350
      %2383 = vst [vmem:[%s168 + $0x80] sm:$0xff] %v2351
      %2384 = vst [vmem:[%s168 + $0x88] sm:$0xff] %v2352
      %2385 = vst [vmem:[%s168 + $0x90] sm:$0xff] %v2353
      %2386 = vst [vmem:[%s168 + $0x98] sm:$0xff] %v2354
      %2387 = vst [vmem:[%s168 + $0xa0] sm:$0xff] %v2355
      %2388 = vst [vmem:[%s168 + $0xa8] sm:$0xff] %v2356
      %2389 = vst [vmem:[%s168 + $0xb0] sm:$0xff] %v2357
      %2390 = vst [vmem:[%s168 + $0xb8] sm:$0xff] %v2358
      %2391 = vst [vmem:[%s168 + $0xc0] sm:$0xff] %v2359
      %2392 = vst [vmem:[%s168 + $0xc8] sm:$0xff] %v2360
      %2393 = vst [vmem:[%s168 + $0xd0] sm:$0xff] %v2361
      %2394 = vst [vmem:[%s168 + $0xd8] sm:$0xff] %v2362
      %2395 = vst [vmem:[%s168 + $0xe0] sm:$0xff] %v2363
      %2396 = vst [vmem:[%s168 + $0xe8] sm:$0xff] %v2364
      %2397 = vst [vmem:[%s168 + $0xf0] sm:$0xff] %v2365
      %2398 = vst [vmem:[%s168 + $0xf8] sm:$0xff] %v2366
      %v2399 = vld [vmem:[%s3] sm:$0x1]
      %v2400 = vadd.f32 %v2335, %v2336
      %v2401 = vadd.f32 %v2400, %v2337
      %v2402 = vadd.f32 %v2401, %v2338
      %v2403 = vadd.f32 %v2402, %v2339
      %v2404 = vadd.f32 %v2403, %v2340
      %v2405 = vadd.f32 %v2404, %v2341
      %v2406 = vadd.f32 %v2405, %v2342
      %v2407 = vadd.f32 %v2406, %v2343
      %v2408 = vadd.f32 %v2407, %v2344
      %v2409 = vadd.f32 %v2408, %v2345
      %v2410 = vadd.f32 %v2409, %v2346
      %v2411 = vadd.f32 %v2410, %v2347
      %v2412 = vadd.f32 %v2411, %v2348
      %v2413 = vadd.f32 %v2412, %v2349
      %v2414 = vadd.f32 %v2413, %v2350
      %v2415 = vadd.f32 %v2414, %v2351
      %v2416 = vadd.f32 %v2415, %v2352
      %v2417 = vadd.f32 %v2416, %v2353
      %v2418 = vadd.f32 %v2417, %v2354
      %v2419 = vadd.f32 %v2418, %v2355
      %v2420 = vadd.f32 %v2419, %v2356
      %v2421 = vadd.f32 %v2420, %v2357
      %v2422 = vadd.f32 %v2421, %v2358
      %v2423 = vadd.f32 %v2422, %v2359
      %v2424 = vadd.f32 %v2423, %v2360
      %v2425 = vadd.f32 %v2424, %v2361
      %v2426 = vadd.f32 %v2425, %v2362
      %v2427 = vadd.f32 %v2426, %v2363
      %v2428 = vadd.f32 %v2427, %v2364
      %v2429 = vadd.f32 %v2428, %v2365
      %v2430 = vadd.f32 %v2429, %v2366
      %v2431 = vrot.slane %v2430, 4
      %v2432 = vadd.f32 %v2430, %v2431
      %v2433 = vrot.slane %v2432, 2
      %v2434 = vadd.f32 %v2432, %v2433
      %v2435 = vrot.slane %v2434, 1
      %v2436 = vadd.f32 %v2434, %v2435
      %v2437 = vadd.f32 %v2399, %v2436
      %2438 = vst [vmem:[%s3] sm:$0x1] %v2437
      %v2439 = vld [vmem:[%s3 + $0x1] sm:$0x1]
      %v2440 = vmul.f32 %v2335, %v2335
      %v2441 = vmul.f32 %v2336, %v2336
      %v2442 = vmul.f32 %v2337, %v2337
      %v2443 = vmul.f32 %v2338, %v2338
      %v2444 = vmul.f32 %v2339, %v2339
      %v2445 = vmul.f32 %v2340, %v2340
      %v2446 = vmul.f32 %v2341, %v2341
      %v2447 = vmul.f32 %v2342, %v2342
      %v2448 = vmul.f32 %v2343, %v2343
      %v2449 = vmul.f32 %v2344, %v2344
      %v2450 = vmul.f32 %v2345, %v2345
      %v2451 = vmul.f32 %v2346, %v2346
      %v2452 = vmul.f32 %v2347, %v2347
      %v2453 = vmul.f32 %v2348, %v2348
      %v2454 = vmul.f32 %v2349, %v2349
      %v2455 = vmul.f32 %v2350, %v2350
      %v2456 = vmul.f32 %v2351, %v2351
      %v2457 = vmul.f32 %v2352, %v2352
      %v2458 = vmul.f32 %v2353, %v2353
      %v2459 = vmul.f32 %v2354, %v2354
      %v2460 = vmul.f32 %v2355, %v2355
      %v2461 = vmul.f32 %v2356, %v2356
      %v2462 = vmul.f32 %v2357, %v2357
      %v2463 = vmul.f32 %v2358, %v2358
      %v2464 = vmul.f32 %v2359, %v2359
      %v2465 = vmul.f32 %v2360, %v2360
      %v2466 = vmul.f32 %v2361, %v2361
      %v2467 = vmul.f32 %v2362, %v2362
      %v2468 = vmul.f32 %v2363, %v2363
      %v2469 = vmul.f32 %v2364, %v2364
      %v2470 = vmul.f32 %v2365, %v2365
      %v2471 = vmul.f32 %v2366, %v2366
      %v2472 = vadd.f32 %v2440, %v2441
      %v2473 = vadd.f32 %v2472, %v2442
      %v2474 = vadd.f32 %v2473, %v2443
      %v2475 = vadd.f32 %v2474, %v2444
      %v2476 = vadd.f32 %v2475, %v2445
      %v2477 = vadd.f32 %v2476, %v2446
      %v2478 = vadd.f32 %v2477, %v2447
      %v2479 = vadd.f32 %v2478, %v2448
      %v2480 = vadd.f32 %v2479, %v2449
      %v2481 = vadd.f32 %v2480, %v2450
      %v2482 = vadd.f32 %v2481, %v2451
      %v2483 = vadd.f32 %v2482, %v2452
      %v2484 = vadd.f32 %v2483, %v2453
      %v2485 = vadd.f32 %v2484, %v2454
      %v2486 = vadd.f32 %v2485, %v2455
      %v2487 = vadd.f32 %v2486, %v2456
      %v2488 = vadd.f32 %v2487, %v2457
      %v2489 = vadd.f32 %v2488, %v2458
      %v2490 = vadd.f32 %v2489, %v2459
      %v2491 = vadd.f32 %v2490, %v2460
      %v2492 = vadd.f32 %v2491, %v2461
      %v2493 = vadd.f32 %v2492, %v2462
      %v2494 = vadd.f32 %v2493, %v2463
      %v2495 = vadd.f32 %v2494, %v2464
      %v2496 = vadd.f32 %v2495, %v2465
      %v2497 = vadd.f32 %v2496, %v2466
      %v2498 = vadd.f32 %v2497, %v2467
      %v2499 = vadd.f32 %v2498, %v2468
      %v2500 = vadd.f32 %v2499, %v2469
      %v2501 = vadd.f32 %v2500, %v2470
      %v2502 = vadd.f32 %v2501, %v2471
      %v2503 = vrot.slane %v2502, 4
      %v2504 = vadd.f32 %v2502, %v2503
      %v2505 = vrot.slane %v2504, 2
      %v2506 = vadd.f32 %v2504, %v2505
      %v2507 = vrot.slane %v2506, 1
      %v2508 = vadd.f32 %v2506, %v2507
      %v2509 = vadd.f32 %v2439, %v2508
      %2510 = vst [vmem:[%s3 + $0x1] sm:$0x1] %v2509
      %p2511 = scmp.lt.s32.totalorder %s15, 1
      %s2512 = scalar_select %p2511, %s15, 1
      %s2513 = smul.addr %s2512, 32
      %s2514 = smul.addr %s2513, 8
      %s2515 = scalar_lea.vmem %s2, %s2514
      // Predicated region
      $region33: #{vgg_block_forward.3} parent=27 // pred_check
        %p2516 = pneg %p80
      $region34: #{vgg_block_forward.3} parent=27 // pred_check_branch
        %2518 = sbr.rel (%p2516) target = $region36
      $region35: #{vgg_block_forward.3} parent=27 // pred_region
        _
      $region36: #{vgg_block_forward.3} parent=27 // pred_fallthru
        _
      // Predicated region
      $region37: #{vgg_block_forward.3} parent=27 // pred_check
        %p2519 = pneg %p101
      $region38: #{vgg_block_forward.3} parent=27 // pred_check_branch
        %2521 = sbr.rel (%p2519) target = $region40
      $region39: #{vgg_block_forward.3} parent=27 // pred_region
        _
      $region40: #{vgg_block_forward.3} parent=27 // pred_fallthru
        _
      // Predicated region
      $region41: #{vgg_block_forward.3} parent=27 // pred_check
        %p2522 = pneg %p101
      $region42: #{vgg_block_forward.3} parent=27 // pred_check_branch
        %2524 = sbr.rel (%p2522) target = $region44
      $region43: #{vgg_block_forward.3} parent=27 // pred_region
        _
      $region44: #{vgg_block_forward.3} parent=27 // pred_fallthru
        _
    $region28: #{vgg_block_forward.3} parent=5 // pred_fallthru
      _
    %p2525 = scmp.le.s32.totalorder 2, %s10
    // Predicated region
    $region45: #{vgg_block_forward.3} parent=5 // pred_check
      %p2526 = pneg %p2525
    $region46: #{vgg_block_forward.3} parent=5 // pred_check_branch
      %2528 = sbr.rel (%p2526) target = $region48
    $region47: #{vgg_block_forward.3} parent=5 // pred_region
      %s2529 = ssub.s32 %s10, 2
      // Predicated region
      $region49: #{vgg_block_forward.3} parent=47 // pred_check
        %p2530 = pneg %p86
      $region50: #{vgg_block_forward.3} parent=47 // pred_check_branch
        %2532 = sbr.rel (%p2530) target = $region52
      $region51: #{vgg_block_forward.3} parent=47 // pred_region
        %p2533 = scmp.lt.s32.totalorder %s16, 1
        %s2534 = scalar_select %p2533, %s16, 1
        %s2535 = smul.addr %s2534, 32
        %s2536 = smul.addr %s2535, 8
        %s2537 = scalar_lea.vmem %s2, %s2536
      $region52: #{vgg_block_forward.3} parent=47 // pred_fallthru
        _
    $region48: #{vgg_block_forward.3} parent=5 // pred_fallthru
      _
  $region6: #{vgg_block_forward.3} parent=0 // loop_footer
    %s14 = sadd.s32 1, %s10
  $region7: #{vgg_block_forward.3} parent=0 // loop_footer_branch
    %9 = sbr.rel target = $region3
  $region8: #{vgg_block_forward.3} parent=0 // loop_exit
    _

// kernel: vgg_block_forward.4
$region0: #{vgg_block_forward.4}
  #allocation0 [shape = 'u32[]', space=smem, size = 0x4, offset = 0x4, fixed_abs, tag = 'smem constant byte address 0x4 - core index']
  #allocation1 [shape = 'u32[72,128]{1,0:T(1,128)}', space=vmem, size = 0x9000, scoped, tag = 'internal scratch']
  #allocation2 [shape = 'f32[18,18,128]{2,1,0:T(8,128)}', space=vmem, size = 0x36000, scoped, tag = 'scratch operand']
  %s0 = inlined_call_operand.vmem [shape: f32[2,16,16,128], index: 0, kind: input, shape index: {}]
  %s1 = inlined_call_operand.vmem [shape: bf16[9,128,128], index: 1, kind: input, shape index: {}]
  %s2 = inlined_call_operand.vmem [shape: f32[1,128], index: 2, kind: input, shape index: {}]
  %s3 = inlined_call_operand.vmem [shape: f32[1,128], index: 3, kind: input, shape index: {}]
  %s4 = inlined_call_operand.vmem [shape: f32[2,16,16,128], index: 4, kind: output, shape index: {0}]
  %s5 = inlined_call_operand.vmem [shape: f32[2,128], index: 5, kind: output, shape index: {1}]
  %6 = xla_tuple %s4, %s5
  %s7 = sld [smem:[#allocation0]]
  $region61: #{vgg_block_forward.4} parent=0
    _
  %s9 = ssub.s32 1, %s7
  %s10 = scalar_select 0, %s9, %s7
  loop: start=0, step=1, limit=4
  $region2: #{vgg_block_forward.4} parent=0 // loop_pre_header
    _
  $region3: #{vgg_block_forward.4} parent=0 // loop_header
    %s12 = sphi 0, %s16
    %p13 = scmp.ge.s32.totalorder %s12, 4
    %s22 = sphi 0, %s24
    %s25 = sphi 0, %s22
    %s26 = sphi 0, %s25
    %s42 = sphi 0, %s26
    %s46 = sphi 0, %s46
    %s48 = sphi 0, %s46
    %s49 = sphi 0, %s48
    %s63 = sphi 0, %s49
    %s67 = sphi 0, %s67
    %s69 = sphi 0, %s67
    %s70 = sphi 0, %s69
    %s84 = sphi 0, %s70
    %s88 = sphi 0, %s88
    %s90 = sphi 0, %s88
    %s91 = sphi 0, %s90
    %s105 = sphi 0, %s91
    %s111 = sphi 0, %s113
    %s114 = sphi 0, %s111
    %s115 = sphi 0, %s114
    %s131 = sphi 0, %s115
    %s135 = sphi 0, %s135
    %s137 = sphi 0, %s135
    %s138 = sphi 0, %s137
    %s152 = sphi 0, %s138
  $region4: #{vgg_block_forward.4} parent=0 // loop_header_branch
    %15 = sbr.rel (%p13) target = $region8
  $region5: #{vgg_block_forward.4} parent=0 // loop_body
    %s17 = ssub.s32 %s12, 1
    %s18 = ssub.s32 %s12, 2
    %s19 = sadd.s32 %s12, 1
    %s20 = ssub.s32 %s12, %s19
    %p21 = scmp.eq.s32.totalorder %s20, 0
    %s23 = sadd.s32 %s22, 1
    %s24 = scalar_select %p21, %s22, %s23
    %p27 = pneg %p21
    %p28 = scmp.eq.s32.totalorder %s12, 1
    %p29 = por %p27, %p28
    %p30 = scmp.ne.s32.totalorder %s22, %s25
    %p31 = scmp.eq.s32.totalorder %s12, 0
    %p32 = por %p30, %p31
    %p33 = scmp.ne.s32.totalorder %s22, %s25
    %p34 = scmp.eq.s32.totalorder %s17, 1
    %p35 = por %p33, %p34
    %p36 = scmp.ne.s32.totalorder %s25, %s26
    %p37 = scmp.eq.s32.totalorder %s17, 0
    %p38 = por %p36, %p37
    %p39 = scmp.ne.s32.totalorder %s25, %s26
    %p40 = scmp.eq.s32.totalorder %s18, 1
    %p41 = por %p39, %p40
    %p43 = scmp.ne.s32.totalorder %s26, %s42
    %p44 = scmp.eq.s32.totalorder %s18, 0
    %p45 = por %p43, %p44
    %s47 = sadd.s32 %s46, 1
    %p50 = scmp.eq.s32.totalorder %s12, 1
    %p51 = scmp.ne.s32.totalorder %s46, %s48
    %p52 = scmp.eq.s32.totalorder %s12, 0
    %p53 = por %p51, %p52
    %p54 = scmp.ne.s32.totalorder %s46, %s48
    %p55 = scmp.eq.s32.totalorder %s17, 1
    %p56 = por %p54, %p55
    %p57 = scmp.ne.s32.totalorder %s48, %s49
    %p58 = scmp.eq.s32.totalorder %s17, 0
    %p59 = por %p57, %p58
    %p60 = scmp.ne.s32.totalorder %s48, %s49
    %p61 = scmp.eq.s32.totalorder %s18, 1
    %p62 = por %p60, %p61
    %p64 = scmp.ne.s32.totalorder %s49, %s63
    %p65 = scmp.eq.s32.totalorder %s18, 0
    %p66 = por %p64, %p65
    %s68 = sadd.s32 %s67, 1
    %p71 = scmp.eq.s32.totalorder %s12, 1
    %p72 = scmp.ne.s32.totalorder %s67, %s69
    %p73 = scmp.eq.s32.totalorder %s12, 0
    %p74 = por %p72, %p73
    %p75 = scmp.ne.s32.totalorder %s67, %s69
    %p76 = scmp.eq.s32.totalorder %s17, 1
    %p77 = por %p75, %p76
    %p78 = scmp.ne.s32.totalorder %s69, %s70
    %p79 = scmp.eq.s32.totalorder %s17, 0
    %p80 = por %p78, %p79
    %p81 = scmp.ne.s32.totalorder %s69, %s70
    %p82 = scmp.eq.s32.totalorder %s18, 1
    %p83 = por %p81, %p82
    %p85 = scmp.ne.s32.totalorder %s70, %s84
    %p86 = scmp.eq.s32.totalorder %s18, 0
    %p87 = por %p85, %p86
    %s89 = sadd.s32 %s88, 1
    %p92 = scmp.eq.s32.totalorder %s12, 1
    %p93 = scmp.ne.s32.totalorder %s88, %s90
    %p94 = scmp.eq.s32.totalorder %s12, 0
    %p95 = por %p93, %p94
    %p96 = scmp.ne.s32.totalorder %s88, %s90
    %p97 = scmp.eq.s32.totalorder %s17, 1
    %p98 = por %p96, %p97
    %p99 = scmp.ne.s32.totalorder %s90, %s91
    %p100 = scmp.eq.s32.totalorder %s17, 0
    %p101 = por %p99, %p100
    %p102 = scmp.ne.s32.totalorder %s90, %s91
    %p103 = scmp.eq.s32.totalorder %s18, 1
    %p104 = por %p102, %p103
    %p106 = scmp.ne.s32.totalorder %s91, %s105
    %p107 = scmp.eq.s32.totalorder %s18, 0
    %p108 = por %p106, %p107
    %s109 = ssub.s32 %s12, %s19
    %p110 = scmp.eq.s32.totalorder %s109, 0
    %s112 = sadd.s32 %s111, 1
    %s113 = scalar_select %p110, %s111, %s112
    %p116 = pneg %p110
    %p117 = scmp.eq.s32.totalorder %s12, 1
    %p118 = por %p116, %p117
    %p119 = scmp.ne.s32.totalorder %s111, %s114
    %p120 = scmp.eq.s32.totalorder %s12, 0
    %p121 = por %p119, %p120
    %p122 = scmp.ne.s32.totalorder %s111, %s114
    %p123 = scmp.eq.s32.totalorder %s17, 1
    %p124 = por %p122, %p123
    %p125 = scmp.ne.s32.totalorder %s114, %s115
    %p126 = scmp.eq.s32.totalorder %s17, 0
    %p127 = por %p125, %p126
    %p128 = scmp.ne.s32.totalorder %s114, %s115
    %p129 = scmp.eq.s32.totalorder %s18, 1
    %p130 = por %p128, %p129
    %p132 = scmp.ne.s32.totalorder %s115, %s131
    %p133 = scmp.eq.s32.totalorder %s18, 0
    %p134 = por %p132, %p133
    %s136 = sadd.s32 %s135, 1
    %p139 = scmp.eq.s32.totalorder %s12, 1
    %p140 = scmp.ne.s32.totalorder %s135, %s137
    %p141 = scmp.eq.s32.totalorder %s12, 0
    %p142 = por %p140, %p141
    %p143 = scmp.ne.s32.totalorder %s135, %s137
    %p144 = scmp.eq.s32.totalorder %s17, 1
    %p145 = por %p143, %p144
    %p146 = scmp.ne.s32.totalorder %s137, %s138
    %p147 = scmp.eq.s32.totalorder %s17, 0
    %p148 = por %p146, %p147
    %p149 = scmp.ne.s32.totalorder %s137, %s138
    %p150 = scmp.eq.s32.totalorder %s18, 1
    %p151 = por %p149, %p150
    %p153 = scmp.ne.s32.totalorder %s138, %s152
    %p154 = scmp.eq.s32.totalorder %s18, 0
    %p155 = por %p153, %p154
    %p156 = scmp.le.s32.totalorder 1, %s12
    %p157 = scmp.lt.s32.totalorder %s12, 3
    %p158 = pnand %p156, %p157
    %p159 = pneg %p158
    // Predicated region
    $region9: #{vgg_block_forward.4} parent=5 // pred_check
      _
    $region10: #{vgg_block_forward.4} parent=5 // pred_check_branch
      %161 = sbr.rel (%p158) target = $region12
    $region11: #{vgg_block_forward.4} parent=5 // pred_region
      %s162 = ssub.s32 %s12, 1
      // Predicated region
      $region13: #{vgg_block_forward.4} parent=11 // pred_check
        %p163 = pneg %p59
      $region14: #{vgg_block_forward.4} parent=11 // pred_check_branch
        %165 = sbr.rel (%p163) target = $region16
      $region15: #{vgg_block_forward.4} parent=11 // pred_region
        _
      $region16: #{vgg_block_forward.4} parent=11 // pred_fallthru
        _
      // Predicated region
      $region17: #{vgg_block_forward.4} parent=11 // pred_check
        %p166 = pneg %p80
      $region18: #{vgg_block_forward.4} parent=11 // pred_check_branch
        %168 = sbr.rel (%p166) target = $region20
      $region19: #{vgg_block_forward.4} parent=11 // pred_region
        _
      $region20: #{vgg_block_forward.4} parent=11 // pred_fallthru
        _
      // Predicated region
      $region21: #{vgg_block_forward.4} parent=11 // pred_check
        %p169 = pneg %p101
      $region22: #{vgg_block_forward.4} parent=11 // pred_check_branch
        %171 = sbr.rel (%p169) target = $region24
      $region23: #{vgg_block_forward.4} parent=11 // pred_region
        _
      $region24: #{vgg_block_forward.4} parent=11 // pred_fallthru
        _
    $region12: #{vgg_block_forward.4} parent=5 // pred_fallthru
      _
    %p172 = scmp.lt.s32.totalorder %s12, 2
    // Predicated region
    $region25: #{vgg_block_forward.4} parent=5 // pred_check
      %p173 = pneg %p172
    $region26: #{vgg_block_forward.4} parent=5 // pred_check_branch
      %175 = sbr.rel (%p173) target = $region28
    $region27: #{vgg_block_forward.4} parent=5 // pred_region
      // Predicated region
      $region29: #{vgg_block_forward.4} parent=27 // pred_check
        %p176 = pneg %p32
      $region30: #{vgg_block_forward.4} parent=27 // pred_check_branch
        %178 = sbr.rel (%p176) target = $region32
      $region31: #{vgg_block_forward.4} parent=27 // pred_region
        %p179 = scmp.lt.s32.totalorder %s12, 1
        %s180 = scalar_select %p179, %s12, 1
        %s181 = smul.addr %s180, 32
        %s182 = smul.addr %s181, 8
        %s183 = scalar_lea.vmem %s0, %s182
      $region32: #{vgg_block_forward.4} parent=27 // pred_fallthru
        _
    $region28: #{vgg_block_forward.4} parent=5 // pred_fallthru
      _
    %p184 = scmp.le.s32.totalorder 1, %s12
    %p185 = scmp.lt.s32.totalorder %s12, 3
    %p186 = pnand %p184, %p185
    %p187 = pneg %p186
    // Predicated region
    $region33: #{vgg_block_forward.4} parent=5 // pred_check
      _
    $region34: #{vgg_block_forward.4} parent=5 // pred_check_branch
      %189 = sbr.rel (%p186) target = $region36
    $region35: #{vgg_block_forward.4} parent=5 // pred_region
      %s190 = ssub.s32 %s12, 1
      %p191 = scmp.lt.s32.totalorder %s17, 1
      %s192 = scalar_select %p191, %s17, 1
      %s193 = smul.addr %s192, 32
      %s194 = smul.addr %s193, 8
      %s195 = scalar_lea.vmem %s0, %s194
      %p196 = pneg %p38
      %p197 = pneg %p35
      %p198 = pneg %p59
      %p199 = pneg %p56
      %p200 = pneg %p80
      %p201 = pneg %p77
      %p202 = pneg %p101
      %p203 = pneg %p98
      %p204 = pneg %p127
      %p205 = pneg %p124
      %p206 = scmp.lt.s32.totalorder %s17, 1
      %s207 = scalar_select %p206, %s17, 1
      %s208 = smul.addr %s207, 32
      %s209 = smul.addr %s208, 8
      %s210 = scalar_lea.vmem %s4, %s209
      %p211 = pneg %p148
      %p212 = pneg %p145
      %p213 = scmp.lt.s32.totalorder %s17, 1
      %s214 = scalar_select %p213, %s17, 1
      %s215 = smul.addr %s214, 32
      %s216 = smul.addr %s215, 8
      %s217 = scalar_lea.vmem %s0, %s216
      %p218 = scmp.lt.s32.totalorder %s17, 1
      %s219 = scalar_select %p218, %s17, 1
      %s220 = smul.addr %s219, 32
      %s221 = smul.addr %s220, 8
      %s222 = scalar_lea.vmem %s4, %s221
      %p223 = scmp.eq.s32.totalorder %s17, 0
      // Predicated region
      $region37: #{vgg_block_forward.4} parent=35 // pred_check
        %p224 = pneg %p223
      $region38: #{vgg_block_forward.4} parent=35 // pred_check_branch
        %226 = sbr.rel (%p224) target = $region40
      $region39: #{vgg_block_forward.4} parent=35 // pred_region
        %227 = vst [vmem:[#allocation2] sm:$0xff] 0.0
        %228 = vst [vmem:[#allocation2 + $0x8] sm:$0xff] 0.0
        %229 = vst [vmem:[#allocation2 + $0x10] sm:$0x3] 0.0
        %230 = vst [vmem:[#allocation2 + $0x18] sm:$0xff] 0.0
        %231 = vst [vmem:[#allocation2 + $0x20] sm:$0xff] 0.0
        %232 = vst [vmem:[#allocation2 + $0x28] sm:$0x3] 0.0
        %233 = vst [vmem:[#allocation2 + $0x30] sm:$0xff] 0.0
        %234 = vst [vmem:[#allocation2 + $0x38] sm:$0xff] 0.0
        %235 = vst [vmem:[#allocation2 + $0x40] sm:$0x3] 0.0
        %236 = vst [vmem:[#allocation2 + $0x48] sm:$0xff] 0.0
        %237 = vst [vmem:[#allocation2 + $0x50] sm:$0xff] 0.0
        %238 = vst [vmem:[#allocation2 + $0x58] sm:$0x3] 0.0
        %239 = vst [vmem:[#allocation2 + $0x60] sm:$0xff] 0.0
        %240 = vst [vmem:[#allocation2 + $0x68] sm:$0xff] 0.0
        %241 = vst [vmem:[#allocation2 + $0x70] sm:$0x3] 0.0
        %242 = vst [vmem:[#allocation2 + $0x78] sm:$0xff] 0.0
        %243 = vst [vmem:[#allocation2 + $0x80] sm:$0xff] 0.0
        %244 = vst [vmem:[#allocation2 + $0x88] sm:$0x3] 0.0
        %245 = vst [vmem:[#allocation2 + $0x90] sm:$0xff] 0.0
        %246 = vst [vmem:[#allocation2 + $0x98] sm:$0xff] 0.0
        %247 = vst [vmem:[#allocation2 + $0xa0] sm:$0x3] 0.0
        %248 = vst [vmem:[#allocation2 + $0xa8] sm:$0xff] 0.0
        %249 = vst [vmem:[#allocation2 + $0xb0] sm:$0xff] 0.0
        %250 = vst [vmem:[#allocation2 + $0xb8] sm:$0x3] 0.0
        %251 = vst [vmem:[#allocation2 + $0xc0] sm:$0xff] 0.0
        %252 = vst [vmem:[#allocation2 + $0xc8] sm:$0xff] 0.0
        %253 = vst [vmem:[#allocation2 + $0xd0] sm:$0x3] 0.0
        %254 = vst [vmem:[#allocation2 + $0xd8] sm:$0xff] 0.0
        %255 = vst [vmem:[#allocation2 + $0xe0] sm:$0xff] 0.0
        %256 = vst [vmem:[#allocation2 + $0xe8] sm:$0x3] 0.0
        %257 = vst [vmem:[#allocation2 + $0xf0] sm:$0xff] 0.0
        %258 = vst [vmem:[#allocation2 + $0xf8] sm:$0xff] 0.0
        %259 = vst [vmem:[#allocation2 + $0x100] sm:$0x3] 0.0
        %260 = vst [vmem:[#allocation2 + $0x108] sm:$0xff] 0.0
        %261 = vst [vmem:[#allocation2 + $0x110] sm:$0xff] 0.0
        %262 = vst [vmem:[#allocation2 + $0x118] sm:$0x3] 0.0
        %263 = vst [vmem:[#allocation2 + $0x120] sm:$0xff] 0.0
        %264 = vst [vmem:[#allocation2 + $0x128] sm:$0xff] 0.0
        %265 = vst [vmem:[#allocation2 + $0x130] sm:$0x3] 0.0
        %266 = vst [vmem:[#allocation2 + $0x138] sm:$0xff] 0.0
        %267 = vst [vmem:[#allocation2 + $0x140] sm:$0xff] 0.0
        %268 = vst [vmem:[#allocation2 + $0x148] sm:$0x3] 0.0
        %269 = vst [vmem:[#allocation2 + $0x150] sm:$0xff] 0.0
        %270 = vst [vmem:[#allocation2 + $0x158] sm:$0xff] 0.0
        %271 = vst [vmem:[#allocation2 + $0x160] sm:$0x3] 0.0
        %272 = vst [vmem:[#allocation2 + $0x168] sm:$0xff] 0.0
        %273 = vst [vmem:[#allocation2 + $0x170] sm:$0xff] 0.0
        %274 = vst [vmem:[#allocation2 + $0x178] sm:$0x3] 0.0
        %275 = vst [vmem:[#allocation2 + $0x180] sm:$0xff] 0.0
        %276 = vst [vmem:[#allocation2 + $0x188] sm:$0xff] 0.0
        %277 = vst [vmem:[#allocation2 + $0x190] sm:$0x3] 0.0
        %278 = vst [vmem:[#allocation2 + $0x198] sm:$0xff] 0.0
        %279 = vst [vmem:[#allocation2 + $0x1a0] sm:$0xff] 0.0
        %280 = vst [vmem:[#allocation2 + $0x1a8] sm:$0x3] 0.0
        %281 = vst [vmem:[%s5] sm:$0x3] 0.0
      $region40: #{vgg_block_forward.4} parent=35 // pred_fallthru
        _
      %v282 = vld [vmem:[%s217] sm:$0xff]
      %v283 = vld [vmem:[%s217 + $0x8] sm:$0xff]
      %v284 = vld [vmem:[%s217 + $0x10] sm:$0xff]
      %v285 = vld [vmem:[%s217 + $0x18] sm:$0xff]
      %v286 = vld [vmem:[%s217 + $0x20] sm:$0xff]
      %v287 = vld [vmem:[%s217 + $0x28] sm:$0xff]
      %v288 = vld [vmem:[%s217 + $0x30] sm:$0xff]
      %v289 = vld [vmem:[%s217 + $0x38] sm:$0xff]
      %v290 = vld [vmem:[%s217 + $0x40] sm:$0xff]
      %v291 = vld [vmem:[%s217 + $0x48] sm:$0xff]
      %v292 = vld [vmem:[%s217 + $0x50] sm:$0xff]
      %v293 = vld [vmem:[%s217 + $0x58] sm:$0xff]
      %v294 = vld [vmem:[%s217 + $0x60] sm:$0xff]
      %v295 = vld [vmem:[%s217 + $0x68] sm:$0xff]
      %v296 = vld [vmem:[%s217 + $0x70] sm:$0xff]
      %v297 = vld [vmem:[%s217 + $0x78] sm:$0xff]
      %v298 = vld [vmem:[%s217 + $0x80] sm:$0xff]
      %v299 = vld [vmem:[%s217 + $0x88] sm:$0xff]
      %v300 = vld [vmem:[%s217 + $0x90] sm:$0xff]
      %v301 = vld [vmem:[%s217 + $0x98] sm:$0xff]
      %v302 = vld [vmem:[%s217 + $0xa0] sm:$0xff]
      %v303 = vld [vmem:[%s217 + $0xa8] sm:$0xff]
      %v304 = vld [vmem:[%s217 + $0xb0] sm:$0xff]
      %v305 = vld [vmem:[%s217 + $0xb8] sm:$0xff]
      %v306 = vld [vmem:[%s217 + $0xc0] sm:$0xff]
      %v307 = vld [vmem:[%s217 + $0xc8] sm:$0xff]
      %v308 = vld [vmem:[%s217 + $0xd0] sm:$0xff]
      %v309 = vld [vmem:[%s217 + $0xd8] sm:$0xff]
      %v310 = vld [vmem:[%s217 + $0xe0] sm:$0xff]
      %v311 = vld [vmem:[%s217 + $0xe8] sm:$0xff]
      %v312 = vld [vmem:[%s217 + $0xf0] sm:$0xff]
      %v313 = vld [vmem:[%s217 + $0xf8] sm:$0xff]
      %v314 = vld [vmem:[%s2] sm:$0x1]
      %v316 = vperm.slane %v314, 0
      %v318 = vmul.f32 %v282, %v316
      %v319 = vmul.f32 %v283, %v316
      %v320 = vmul.f32 %v284, %v316
      %v321 = vmul.f32 %v285, %v316
      %v322 = vmul.f32 %v286, %v316
      %v323 = vmul.f32 %v287, %v316
      %v324 = vmul.f32 %v288, %v316
      %v325 = vmul.f32 %v289, %v316
      %v326 = vmul.f32 %v290, %v316
      %v327 = vmul.f32 %v291, %v316
      %v328 = vmul.f32 %v292, %v316
      %v329 = vmul.f32 %v293, %v316
      %v330 = vmul.f32 %v294, %v316
      %v331 = vmul.f32 %v295, %v316
      %v332 = vmul.f32 %v296, %v316
      %v333 = vmul.f32 %v297, %v316
      %v334 = vmul.f32 %v298, %v316
      %v335 = vmul.f32 %v299, %v316
      %v336 = vmul.f32 %v300, %v316
      %v337 = vmul.f32 %v301, %v316
      %v338 = vmul.f32 %v302, %v316
      %v339 = vmul.f32 %v303, %v316
      %v340 = vmul.f32 %v304, %v316
      %v341 = vmul.f32 %v305, %v316
      %v342 = vmul.f32 %v306, %v316
      %v343 = vmul.f32 %v307, %v316
      %v344 = vmul.f32 %v308, %v316
      %v345 = vmul.f32 %v309, %v316
      %v346 = vmul.f32 %v310, %v316
      %v347 = vmul.f32 %v311, %v316
      %v348 = vmul.f32 %v312, %v316
      %v349 = vmul.f32 %v313, %v316
      %v350 = vld [vmem:[%s3] sm:$0x1]
      %v352 = vperm.slane %v350, 0
      %v354 = vadd.f32 %v318, %v352
      %v355 = vadd.f32 %v319, %v352
      %v356 = vadd.f32 %v320, %v352
      %v357 = vadd.f32 %v321, %v352
      %v358 = vadd.f32 %v322, %v352
      %v359 = vadd.f32 %v323, %v352
      %v360 = vadd.f32 %v324, %v352
      %v361 = vadd.f32 %v325, %v352
      %v362 = vadd.f32 %v326, %v352
      %v363 = vadd.f32 %v327, %v352
      %v364 = vadd.f32 %v328, %v352
      %v365 = vadd.f32 %v329, %v352
      %v366 = vadd.f32 %v330, %v352
      %v367 = vadd.f32 %v331, %v352
      %v368 = vadd.f32 %v332, %v352
      %v369 = vadd.f32 %v333, %v352
      %v370 = vadd.f32 %v334, %v352
      %v371 = vadd.f32 %v335, %v352
      %v372 = vadd.f32 %v336, %v352
      %v373 = vadd.f32 %v337, %v352
      %v374 = vadd.f32 %v338, %v352
      %v375 = vadd.f32 %v339, %v352
      %v376 = vadd.f32 %v340, %v352
      %v377 = vadd.f32 %v341, %v352
      %v378 = vadd.f32 %v342, %v352
      %v379 = vadd.f32 %v343, %v352
      %v380 = vadd.f32 %v344, %v352
      %v381 = vadd.f32 %v345, %v352
      %v382 = vadd.f32 %v346, %v352
      %v383 = vadd.f32 %v347, %v352
      %v384 = vadd.f32 %v348, %v352
      %v385 = vadd.f32 %v349, %v352
      %v386 = vmax.f32 %v354, 0.0
      %v387 = vmax.f32 %v355, 0.0
      %v388 = vmax.f32 %v356, 0.0
      %v389 = vmax.f32 %v357, 0.0
      %v390 = vmax.f32 %v358, 0.0
      %v391 = vmax.f32 %v359, 0.0
      %v392 = vmax.f32 %v360, 0.0
      %v393 = vmax.f32 %v361, 0.0
      %v394 = vmax.f32 %v362, 0.0
      %v395 = vmax.f32 %v363, 0.0
      %v396 = vmax.f32 %v364, 0.0
      %v397 = vmax.f32 %v365, 0.0
      %v398 = vmax.f32 %v366, 0.0
      %v399 = vmax.f32 %v367, 0.0
      %v400 = vmax.f32 %v368, 0.0
      %v401 = vmax.f32 %v369, 0.0
      %v402 = vmax.f32 %v370, 0.0
      %v403 = vmax.f32 %v371, 0.0
      %v404 = vmax.f32 %v372, 0.0
      %v405 = vmax.f32 %v373, 0.0
      %v406 = vmax.f32 %v374, 0.0
      %v407 = vmax.f32 %v375, 0.0
      %v408 = vmax.f32 %v376, 0.0
      %v409 = vmax.f32 %v377, 0.0
      %v410 = vmax.f32 %v378, 0.0
      %v411 = vmax.f32 %v379, 0.0
      %v412 = vmax.f32 %v380, 0.0
      %v413 = vmax.f32 %v381, 0.0
      %v414 = vmax.f32 %v382, 0.0
      %v415 = vmax.f32 %v383, 0.0
      %v416 = vmax.f32 %v384, 0.0
      %v417 = vmax.f32 %v385, 0.0
      %s418 = scalar_lea.vmem [#allocation2], 24
      %419 = vst [vmem:[%s418 + $0x1] sm:$0xff] %v386
      %420 = vst [vmem:[%s418 + $0x9] sm:$0xff] %v387
      %421 = vst [vmem:[%s418 + $0x19] sm:$0xff] %v388
      %422 = vst [vmem:[%s418 + $0x21] sm:$0xff] %v389
      %423 = vst [vmem:[%s418 + $0x31] sm:$0xff] %v390
      %424 = vst [vmem:[%s418 + $0x39] sm:$0xff] %v391
      %425 = vst [vmem:[%s418 + $0x49] sm:$0xff] %v392
      %426 = vst [vmem:[%s418 + $0x51] sm:$0xff] %v393
      %427 = vst [vmem:[%s418 + $0x61] sm:$0xff] %v394
      %428 = vst [vmem:[%s418 + $0x69] sm:$0xff] %v395
      %429 = vst [vmem:[%s418 + $0x79] sm:$0xff] %v396
      %430 = vst [vmem:[%s418 + $0x81] sm:$0xff] %v397
      %431 = vst [vmem:[%s418 + $0x91] sm:$0xff] %v398
      %432 = vst [vmem:[%s418 + $0x99] sm:$0xff] %v399
      %433 = vst [vmem:[%s418 + $0xa9] sm:$0xff] %v400
      %434 = vst [vmem:[%s418 + $0xb1] sm:$0xff] %v401
      %435 = vst [vmem:[%s418 + $0xc1] sm:$0xff] %v402
      %436 = vst [vmem:[%s418 + $0xc9] sm:$0xff] %v403
      %437 = vst [vmem:[%s418 + $0xd9] sm:$0xff] %v404
      %438 = vst [vmem:[%s418 + $0xe1] sm:$0xff] %v405
      %439 = vst [vmem:[%s418 + $0xf1] sm:$0xff] %v406
      %440 = vst [vmem:[%s418 + $0xf9] sm:$0xff] %v407
      %441 = vst [vmem:[%s418 + $0x109] sm:$0xff] %v408
      %442 = vst [vmem:[%s418 + $0x111] sm:$0xff] %v409
      %443 = vst [vmem:[%s418 + $0x121] sm:$0xff] %v410
      %444 = vst [vmem:[%s418 + $0x129] sm:$0xff] %v411
      %445 = vst [vmem:[%s418 + $0x139] sm:$0xff] %v412
      %446 = vst [vmem:[%s418 + $0x141] sm:$0xff] %v413
      %447 = vst [vmem:[%s418 + $0x151] sm:$0xff] %v414
      %448 = vst [vmem:[%s418 + $0x159] sm:$0xff] %v415
      %449 = vst [vmem:[%s418 + $0x169] sm:$0xff] %v416
      %450 = vst [vmem:[%s418 + $0x171] sm:$0xff] %v417
      %v451 = vld [vmem:[#allocation2] sm:$0xff]
      %v452 = vld [vmem:[#allocation2 + $0x8] sm:$0xff]
      %v453 = vld [vmem:[#allocation2 + $0x18] sm:$0xff]
      %v454 = vld [vmem:[#allocation2 + $0x20] sm:$0xff]
      %v455 = vld [vmem:[#allocation2 + $0x30] sm:$0xff]
      %v456 = vld [vmem:[#allocation2 + $0x38] sm:$0xff]
      %v457 = vld [vmem:[#allocation2 + $0x48] sm:$0xff]
      %v458 = vld [vmem:[#allocation2 + $0x50] sm:$0xff]
      %v459 = vld [vmem:[#allocation2 + $0x60] sm:$0xff]
      %v460 = vld [vmem:[#allocation2 + $0x68] sm:$0xff]
      %v461 = vld [vmem:[#allocation2 + $0x78] sm:$0xff]
      %v462 = vld [vmem:[#allocation2 + $0x80] sm:$0xff]
      %v463 = vld [vmem:[#allocation2 + $0x90] sm:$0xff]
      %v464 = vld [vmem:[#allocation2 + $0x98] sm:$0xff]
      %v465 = vld [vmem:[#allocation2 + $0xa8] sm:$0xff]
      %v466 = vld [vmem:[#allocation2 + $0xb0] sm:$0xff]
      %v467 = vld [vmem:[#allocation2 + $0xc0] sm:$0xff]
      %v468 = vld [vmem:[#allocation2 + $0xc8] sm:$0xff]
      %v469 = vld [vmem:[#allocation2 + $0xd8] sm:$0xff]
      %v470 = vld [vmem:[#allocation2 + $0xe0] sm:$0xff]
      %v471 = vld [vmem:[#allocation2 + $0xf0] sm:$0xff]
      %v472 = vld [vmem:[#allocation2 + $0xf8] sm:$0xff]
      %v473 = vld [vmem:[#allocation2 + $0x108] sm:$0xff]
      %v474 = vld [vmem:[#allocation2 + $0x110] sm:$0xff]
      %v475 = vld [vmem:[#allocation2 + $0x120] sm:$0xff]
      %v476 = vld [vmem:[#allocation2 + $0x128] sm:$0xff]
      %v477 = vld [vmem:[#allocation2 + $0x138] sm:$0xff]
      %v478 = vld [vmem:[#allocation2 + $0x140] sm:$0xff]
      %v479 = vld [vmem:[#allocation2 + $0x150] sm:$0xff]
      %v480 = vld [vmem:[#allocation2 + $0x158] sm:$0xff]
      %v481 = vld [vmem:[#allocation2 + $0x168] sm:$0xff]
      %v482 = vld [vmem:[#allocation2 + $0x170] sm:$0xff]
      %v483 = vpack.c.bf16 %v452, %v451
      %v484 = vpack.c.bf16 %v454, %v453
      %v485 = vpack.c.bf16 %v456, %v455
      %v486 = vpack.c.bf16 %v458, %v457
      %v487 = vpack.c.bf16 %v460, %v459
      %v488 = vpack.c.bf16 %v462, %v461
      %v489 = vpack.c.bf16 %v464, %v463
      %v490 = vpack.c.bf16 %v466, %v465
      %v491 = vpack.c.bf16 %v468, %v467
      %v492 = vpack.c.bf16 %v470, %v469
      %v493 = vpack.c.bf16 %v472, %v471
      %v494 = vpack.c.bf16 %v474, %v473
      %v495 = vpack.c.bf16 %v476, %v475
      %v496 = vpack.c.bf16 %v478, %v477
      %v497 = vpack.c.bf16 %v480, %v479
      %v498 = vpack.c.bf16 %v482, %v481
      %v499 = vld [vmem:[%s1] sm:$0xf]
      %v500 = vld [vmem:[%s1 + $0x4] sm:$0xf]
      %v501 = vld [vmem:[%s1 + $0x8] sm:$0xf]
      %v502 = vld [vmem:[%s1 + $0xc] sm:$0xf]
      %v503 = vld [vmem:[%s1 + $0x10] sm:$0xf]
      %v504 = vld [vmem:[%s1 + $0x14] sm:$0xf]
      %v505 = vld [vmem:[%s1 + $0x18] sm:$0xf]
      %v506 = vld [vmem:[%s1 + $0x1c] sm:$0xf]
      %v507 = vld [vmem:[%s1 + $0x20] sm:$0xf]
      %v508 = vld [vmem:[%s1 + $0x24] sm:$0xf]
      %v509 = vld [vmem:[%s1 + $0x28] sm:$0xf]
      %v510 = vld [vmem:[%s1 + $0x2c] sm:$0xf]
      %v511 = vld [vmem:[%s1 + $0x30] sm:$0xf]
      %v512 = vld [vmem:[%s1 + $0x34] sm:$0xf]
      %v513 = vld [vmem:[%s1 + $0x38] sm:$0xf]
      %v514 = vld [vmem:[%s1 + $0x3c] sm:$0xf]
      %v515 = vld [vmem:[#allocation2 + $0x1] sm:$0xff]
      %v516 = vld [vmem:[#allocation2 + $0x9] sm:$0xff]
      %v517 = vld [vmem:[#allocation2 + $0x19] sm:$0xff]
      %v518 = vld [vmem:[#allocation2 + $0x21] sm:$0xff]
      %v519 = vld [vmem:[#allocation2 + $0x31] sm:$0xff]
      %v520 = vld [vmem:[#allocation2 + $0x39] sm:$0xff]
      %v521 = vld [vmem:[#allocation2 + $0x49] sm:$0xff]
      %v522 = vld [vmem:[#allocation2 + $0x51] sm:$0xff]
      %v523 = vld [vmem:[#allocation2 + $0x61] sm:$0xff]
      %v524 = vld [vmem:[#allocation2 + $0x69] sm:$0xff]
      %v525 = vld [vmem:[#allocation2 + $0x79] sm:$0xff]
      %v526 = vld [vmem:[#allocation2 + $0x81] sm:$0xff]
      %v527 = vld [vmem:[#allocation2 + $0x91] sm:$0xff]
      %v528 = vld [vmem:[#allocation2 + $0x99] sm:$0xff]
      %v529 = vld [vmem:[#allocation2 + $0xa9] sm:$0xff]
      %v530 = vld [vmem:[#allocation2 + $0xb1] sm:$0xff]
      %v531 = vld [vmem:[#allocation2 + $0xc1] sm:$0xff]
      %v532 = vld [vmem:[#allocation2 + $0xc9] sm:$0xff]
      %v533 = vld [vmem:[#allocation2 + $0xd9] sm:$0xff]
      %v534 = vld [vmem:[#allocation2 + $0xe1] sm:$0xff]
      %v535 = vld [vmem:[#allocation2 + $0xf1] sm:$0xff]
      %v536 = vld [vmem:[#allocation2 + $0xf9] sm:$0xff]
      %v537 = vld [vmem:[#allocation2 + $0x109] sm:$0xff]
      %v538 = vld [vmem:[#allocation2 + $0x111] sm:$0xff]
      %v539 = vld [vmem:[#allocation2 + $0x121] sm:$0xff]
      %v540 = vld [vmem:[#allocation2 + $0x129] sm:$0xff]
      %v541 = vld [vmem:[#allocation2 + $0x139] sm:$0xff]
      %v542 = vld [vmem:[#allocation2 + $0x141] sm:$0xff]
      %v543 = vld [vmem:[#allocation2 + $0x151] sm:$0xff]
      %v544 = vld [vmem:[#allocation2 + $0x159] sm:$0xff]
      %v545 = vld [vmem:[#allocation2 + $0x169] sm:$0xff]
      %v546 = vld [vmem:[#allocation2 + $0x171] sm:$0xff]
      %v547 = vpack.c.bf16 %v516, %v515
      %v548 = vpack.c.bf16 %v518, %v517
      %v549 = vpack.c.bf16 %v520, %v519
      %v550 = vpack.c.bf16 %v522, %v521
      %v551 = vpack.c.bf16 %v524, %v523
      %v552 = vpack.c.bf16 %v526, %v525
      %v553 = vpack.c.bf16 %v528, %v527
      %v554 = vpack.c.bf16 %v530, %v529
      %v555 = vpack.c.bf16 %v532, %v531
      %v556 = vpack.c.bf16 %v534, %v533
      %v557 = vpack.c.bf16 %v536, %v535
      %v558 = vpack.c.bf16 %v538, %v537
      %v559 = vpack.c.bf16 %v540, %v539
      %v560 = vpack.c.bf16 %v542, %v541
      %v561 = vpack.c.bf16 %v544, %v543
      %v562 = vpack.c.bf16 %v546, %v545
      %s563 = scalar_lea.vmem %s1, 64
      %v564 = vld [vmem:[%s563] sm:$0xf]
      %v565 = vld [vmem:[%s563 + $0x4] sm:$0xf]
      %v566 = vld [vmem:[%s563 + $0x8] sm:$0xf]
      %v567 = vld [vmem:[%s563 + $0xc] sm:$0xf]
      %v568 = vld [vmem:[%s563 + $0x10] sm:$0xf]
      %v569 = vld [vmem:[%s563 + $0x14] sm:$0xf]
      %v570 = vld [vmem:[%s563 + $0x18] sm:$0xf]
      %v571 = vld [vmem:[%s563 + $0x1c] sm:$0xf]
      %v572 = vld [vmem:[%s563 + $0x20] sm:$0xf]
      %v573 = vld [vmem:[%s563 + $0x24] sm:$0xf]
      %v574 = vld [vmem:[%s563 + $0x28] sm:$0xf]
      %v575 = vld [vmem:[%s563 + $0x2c] sm:$0xf]
      %v576 = vld [vmem:[%s563 + $0x30] sm:$0xf]
      %v577 = vld [vmem:[%s563 + $0x34] sm:$0xf]
      %v578 = vld [vmem:[%s563 + $0x38] sm:$0xf]
      %v579 = vld [vmem:[%s563 + $0x3c] sm:$0xf]
      %v596 = vunpack.c.l.b16 %v564
      %v597 = vunpack.c.l.b16 %v565
      %v598 = vunpack.c.l.b16 %v566
      %v599 = vunpack.c.l.b16 %v567
      %v600 = vunpack.c.l.b16 %v568
      %v601 = vunpack.c.l.b16 %v569
      %v602 = vunpack.c.l.b16 %v570
      %v603 = vunpack.c.l.b16 %v571
      %v604 = vunpack.c.l.b16 %v572
      %v605 = vunpack.c.l.b16 %v573
      %v606 = vunpack.c.l.b16 %v574
      %v607 = vunpack.c.l.b16 %v575
      %v608 = vunpack.c.l.b16 %v576
      %v609 = vunpack.c.l.b16 %v577
      %v610 = vunpack.c.l.b16 %v578
      %v611 = vunpack.c.l.b16 %v579
      %v612 = vpack.c.b16 %v597, %v596
      %v613 = vpack.c.b16 %v599, %v598
      %v614 = vpack.c.b16 %v601, %v600
      %v615 = vpack.c.b16 %v603, %v602
      %v616 = vpack.c.b16 %v605, %v604
      %v617 = vpack.c.b16 %v607, %v606
      %v618 = vpack.c.b16 %v609, %v608
      %v619 = vpack.c.b16 %v611, %v610
      %628 = vmatpush.bf16.msra.mxu0 %v619
      %629 = vmatpush.bf16.msra.mxu0 %v618
      %630 = vmatpush.bf16.msra.mxu0 %v617
      %631 = vmatpush.bf16.msra.mxu0 %v616
      %632 = vmatpush.bf16.msra.mxu0 %v615
      %633 = vmatpush.bf16.msra.mxu0 %v614
      %634 = vmatpush.bf16.msra.mxu0 %v613
      %635 = vmatpush.bf16.msra.mxu0 %v612
      %636 = vmatmul.bf16.gmra.mxu0 %v547
      %v637 = vpop.f32.mrf.mxu0
      %v638 = vadd.f32 0.0, %v637
      %v639 = vpop.f32.mrf.mxu0
      %v640 = vadd.f32 0.0, %v639
      %641 = vmatmul.bf16.gmra.mxu0 %v548
      %v642 = vpop.f32.mrf.mxu0
      %v643 = vadd.f32 0.0, %v642
      %v644 = vpop.f32.mrf.mxu0
      %v645 = vadd.f32 0.0, %v644
      %646 = vmatmul.bf16.gmra.mxu0 %v549
      %v647 = vpop.f32.mrf.mxu0
      %v648 = vadd.f32 0.0, %v647
      %v649 = vpop.f32.mrf.mxu0
      %v650 = vadd.f32 0.0, %v649
      %651 = vmatmul.bf16.gmra.mxu0 %v550
      %v652 = vpop.f32.mrf.mxu0
      %v653 = vadd.f32 0.0, %v652
      %v654 = vpop.f32.mrf.mxu0
      %v655 = vadd.f32 0.0, %v654
      %656 = vmatmul.bf16.gmra.mxu0 %v551
      %v657 = vpop.f32.mrf.mxu0
      %v658 = vadd.f32 0.0, %v657
      %v659 = vpop.f32.mrf.mxu0
      %v660 = vadd.f32 0.0, %v659
      %661 = vmatmul.bf16.gmra.mxu0 %v552
      %v662 = vpop.f32.mrf.mxu0
      %v663 = vadd.f32 0.0, %v662
      %v664 = vpop.f32.mrf.mxu0
      %v665 = vadd.f32 0.0, %v664
      %666 = vmatmul.bf16.gmra.mxu0 %v553
      %v667 = vpop.f32.mrf.mxu0
      %v668 = vadd.f32 0.0, %v667
      %v669 = vpop.f32.mrf.mxu0
      %v670 = vadd.f32 0.0, %v669
      %671 = vmatmul.bf16.gmra.mxu0 %v554
      %v672 = vpop.f32.mrf.mxu0
      %v673 = vadd.f32 0.0, %v672
      %v674 = vpop.f32.mrf.mxu0
      %v675 = vadd.f32 0.0, %v674
      %676 = vmatmul.bf16.gmra.mxu0 %v555
      %v677 = vpop.f32.mrf.mxu0
      %v678 = vadd.f32 0.0, %v677
      %v679 = vpop.f32.mrf.mxu0
      %v680 = vadd.f32 0.0, %v679
      %681 = vmatmul.bf16.gmra.mxu0 %v556
      %v682 = vpop.f32.mrf.mxu0
      %v683 = vadd.f32 0.0, %v682
      %v684 = vpop.f32.mrf.mxu0
      %v685 = vadd.f32 0.0, %v684
      %686 = vmatmul.bf16.gmra.mxu0 %v557
      %v687 = vpop.f32.mrf.mxu0
      %v688 = vadd.f32 0.0, %v687
      %v689 = vpop.f32.mrf.mxu0
      %v690 = vadd.f32 0.0, %v689
      %691 = vmatmul.bf16.gmra.mxu0 %v558
      %v692 = vpop.f32.mrf.mxu0
      %v693 = vadd.f32 0.0, %v692
      %v694 = vpop.f32.mrf.mxu0
      %v695 = vadd.f32 0.0, %v694
      %696 = vmatmul.bf16.gmra.mxu0 %v559
      %v697 = vpop.f32.mrf.mxu0
      %v698 = vadd.f32 0.0, %v697
      %v699 = vpop.f32.mrf.mxu0
      %v700 = vadd.f32 0.0, %v699
      %701 = vmatmul.bf16.gmra.mxu0 %v560
      %v702 = vpop.f32.mrf.mxu0
      %v703 = vadd.f32 0.0, %v702
      %v704 = vpop.f32.mrf.mxu0
      %v705 = vadd.f32 0.0, %v704
      %706 = vmatmul.bf16.gmra.mxu0 %v561
      %v707 = vpop.f32.mrf.mxu0
      %v708 = vadd.f32 0.0, %v707
      %v709 = vpop.f32.mrf.mxu0
      %v710 = vadd.f32 0.0, %v709
      %711 = vmatmul.bf16.gmra.mxu0 %v562
      %v712 = vpop.f32.mrf.mxu0
      %v713 = vadd.f32 0.0, %v712
      %v714 = vpop.f32.mrf.mxu0
      %v715 = vadd.f32 0.0, %v714
      %716 = vdwg.mxu0
      %v733 = vunpack.c.l.b16 %v499
      %v734 = vunpack.c.l.b16 %v500
      %v735 = vunpack.c.l.b16 %v501
      %v736 = vunpack.c.l.b16 %v502
      %v737 = vunpack.c.l.b16 %v503
      %v738 = vunpack.c.l.b16 %v504
      %v739 = vunpack.c.l.b16 %v505
      %v740 = vunpack.c.l.b16 %v506
      %v741 = vunpack.c.l.b16 %v507
      %v742 = vunpack.c.l.b16 %v508
      %v743 = vunpack.c.l.b16 %v509
      %v744 = vunpack.c.l.b16 %v510
      %v745 = vunpack.c.l.b16 %v511
      %v746 = vunpack.c.l.b16 %v512
      %v747 = vunpack.c.l.b16 %v513
      %v748 = vunpack.c.l.b16 %v514
      %v749 = vpack.c.b16 %v734, %v733
      %v750 = vpack.c.b16 %v736, %v735
      %v751 = vpack.c.b16 %v738, %v737
      %v752 = vpack.c.b16 %v740, %v739
      %v753 = vpack.c.b16 %v742, %v741
      %v754 = vpack.c.b16 %v744, %v743
      %v755 = vpack.c.b16 %v746, %v745
      %v756 = vpack.c.b16 %v748, %v747
      %765 = vmatpush.bf16.msra.mxu0 %v756
      %766 = vmatpush.bf16.msra.mxu0 %v755
      %767 = vmatpush.bf16.msra.mxu0 %v754
      %768 = vmatpush.bf16.msra.mxu0 %v753
      %769 = vmatpush.bf16.msra.mxu0 %v752
      %770 = vmatpush.bf16.msra.mxu0 %v751
      %771 = vmatpush.bf16.msra.mxu0 %v750
      %772 = vmatpush.bf16.msra.mxu0 %v749
      %773 = vmatmul.bf16.gmra.mxu0 %v483
      %v774 = vpop.f32.mrf.mxu0
      %v775 = vadd.f32 %v638, %v774
      %v776 = vpop.f32.mrf.mxu0
      %v777 = vadd.f32 %v640, %v776
      %778 = vmatmul.bf16.gmra.mxu0 %v484
      %v779 = vpop.f32.mrf.mxu0
      %v780 = vadd.f32 %v643, %v779
      %v781 = vpop.f32.mrf.mxu0
      %v782 = vadd.f32 %v645, %v781
      %783 = vmatmul.bf16.gmra.mxu0 %v485
      %v784 = vpop.f32.mrf.mxu0
      %v785 = vadd.f32 %v648, %v784
      %v786 = vpop.f32.mrf.mxu0
      %v787 = vadd.f32 %v650, %v786
      %788 = vmatmul.bf16.gmra.mxu0 %v486
      %v789 = vpop.f32.mrf.mxu0
      %v790 = vadd.f32 %v653, %v789
      %v791 = vpop.f32.mrf.mxu0
      %v792 = vadd.f32 %v655, %v791
      %793 = vmatmul.bf16.gmra.mxu0 %v487
      %v794 = vpop.f32.mrf.mxu0
      %v795 = vadd.f32 %v658, %v794
      %v796 = vpop.f32.mrf.mxu0
      %v797 = vadd.f32 %v660, %v796
      %798 = vmatmul.bf16.gmra.mxu0 %v488
      %v799 = vpop.f32.mrf.mxu0
      %v800 = vadd.f32 %v663, %v799
      %v801 = vpop.f32.mrf.mxu0
      %v802 = vadd.f32 %v665, %v801
      %803 = vmatmul.bf16.gmra.mxu0 %v489
      %v804 = vpop.f32.mrf.mxu0
      %v805 = vadd.f32 %v668, %v804
      %v806 = vpop.f32.mrf.mxu0
      %v807 = vadd.f32 %v670, %v806
      %808 = vmatmul.bf16.gmra.mxu0 %v490
      %v809 = vpop.f32.mrf.mxu0
      %v810 = vadd.f32 %v673, %v809
      %v811 = vpop.f32.mrf.mxu0
      %v812 = vadd.f32 %v675, %v811
      %813 = vmatmul.bf16.gmra.mxu0 %v491
      %v814 = vpop.f32.mrf.mxu0
      %v815 = vadd.f32 %v678, %v814
      %v816 = vpop.f32.mrf.mxu0
      %v817 = vadd.f32 %v680, %v816
      %818 = vmatmul.bf16.gmra.mxu0 %v492
      %v819 = vpop.f32.mrf.mxu0
      %v820 = vadd.f32 %v683, %v819
      %v821 = vpop.f32.mrf.mxu0
      %v822 = vadd.f32 %v685, %v821
      %823 = vmatmul.bf16.gmra.mxu0 %v493
      %v824 = vpop.f32.mrf.mxu0
      %v825 = vadd.f32 %v688, %v824
      %v826 = vpop.f32.mrf.mxu0
      %v827 = vadd.f32 %v690, %v826
      %828 = vmatmul.bf16.gmra.mxu0 %v494
      %v829 = vpop.f32.mrf.mxu0
      %v830 = vadd.f32 %v693, %v829
      %v831 = vpop.f32.mrf.mxu0
      %v832 = vadd.f32 %v695, %v831
      %833 = vmatmul.bf16.gmra.mxu0 %v495
      %v834 = vpop.f32.mrf.mxu0
      %v835 = vadd.f32 %v698, %v834
      %v836 = vpop.f32.mrf.mxu0
      %v837 = vadd.f32 %v700, %v836
      %838 = vmatmul.bf16.gmra.mxu0 %v496
      %v839 = vpop.f32.mrf.mxu0
      %v840 = vadd.f32 %v703, %v839
      %v841 = vpop.f32.mrf.mxu0
      %v842 = vadd.f32 %v705, %v841
      %843 = vmatmul.bf16.gmra.mxu0 %v497
      %v844 = vpop.f32.mrf.mxu0
      %v845 = vadd.f32 %v708, %v844
      %v846 = vpop.f32.mrf.mxu0
      %v847 = vadd.f32 %v710, %v846
      %848 = vmatmul.bf16.gmra.mxu0 %v498
      %v849 = vpop.f32.mrf.mxu0
      %v850 = vadd.f32 %v713, %v849
      %v851 = vpop.f32.mrf.mxu0
      %v852 = vadd.f32 %v715, %v851
      %853 = vdwg.mxu0
      %v854 = vld [vmem:[#allocation2 + $0x2] sm:$0xff]
      %v855 = vld [vmem:[#allocation2 + $0xa] sm:$0xff]
      %v856 = vld [vmem:[#allocation2 + $0x1a] sm:$0xff]
      %v857 = vld [vmem:[#allocation2 + $0x22] sm:$0xff]
      %v858 = vld [vmem:[#allocation2 + $0x32] sm:$0xff]
      %v859 = vld [vmem:[#allocation2 + $0x3a] sm:$0xff]
      %v860 = vld [vmem:[#allocation2 + $0x4a] sm:$0xff]
      %v861 = vld [vmem:[#allocation2 + $0x52] sm:$0xff]
      %v862 = vld [vmem:[#allocation2 + $0x62] sm:$0xff]
      %v863 = vld [vmem:[#allocation2 + $0x6a] sm:$0xff]
      %v864 = vld [vmem:[#allocation2 + $0x7a] sm:$0xff]
      %v865 = vld [vmem:[#allocation2 + $0x82] sm:$0xff]
      %v866 = vld [vmem:[#allocation2 + $0x92] sm:$0xff]
      %v867 = vld [vmem:[#allocation2 + $0x9a] sm:$0xff]
      %v868 = vld [vmem:[#allocation2 + $0xaa] sm:$0xff]
      %v869 = vld [vmem:[#allocation2 + $0xb2] sm:$0xff]
      %v870 = vld [vmem:[#allocation2 + $0xc2] sm:$0xff]
      %v871 = vld [vmem:[#allocation2 + $0xca] sm:$0xff]
      %v872 = vld [vmem:[#allocation2 + $0xda] sm:$0xff]
      %v873 = vld [vmem:[#allocation2 + $0xe2] sm:$0xff]
      %v874 = vld [vmem:[#allocation2 + $0xf2] sm:$0xff]
      %v875 = vld [vmem:[#allocation2 + $0xfa] sm:$0xff]
      %v876 = vld [vmem:[#allocation2 + $0x10a] sm:$0xff]
      %v877 = vld [vmem:[#allocation2 + $0x112] sm:$0xff]
      %v878 = vld [vmem:[#allocation2 + $0x122] sm:$0xff]
      %v879 = vld [vmem:[#allocation2 + $0x12a] sm:$0xff]
      %v880 = vld [vmem:[#allocation2 + $0x13a] sm:$0xff]
      %v881 = vld [vmem:[#allocation2 + $0x142] sm:$0xff]
      %v882 = vld [vmem:[#allocation2 + $0x152] sm:$0xff]
      %v883 = vld [vmem:[#allocation2 + $0x15a] sm:$0xff]
      %v884 = vld [vmem:[#allocation2 + $0x16a] sm:$0xff]
      %v885 = vld [vmem:[#allocation2 + $0x172] sm:$0xff]
      %v886 = vpack.c.bf16 %v855, %v854
      %v887 = vpack.c.bf16 %v857, %v856
      %v888 = vpack.c.bf16 %v859, %v858
      %v889 = vpack.c.bf16 %v861, %v860
      %v890 = vpack.c.bf16 %v863, %v862
      %v891 = vpack.c.bf16 %v865, %v864
      %v892 = vpack.c.bf16 %v867, %v866
      %v893 = vpack.c.bf16 %v869, %v868
      %v894 = vpack.c.bf16 %v871, %v870
      %v895 = vpack.c.bf16 %v873, %v872
      %v896 = vpack.c.bf16 %v875, %v874
      %v897 = vpack.c.bf16 %v877, %v876
      %v898 = vpack.c.bf16 %v879, %v878
      %v899 = vpack.c.bf16 %v881, %v880
      %v900 = vpack.c.bf16 %v883, %v882
      %v901 = vpack.c.bf16 %v885, %v884
      %s902 = scalar_lea.vmem %s1, 128
      %v903 = vld [vmem:[%s902] sm:$0xf]
      %v904 = vld [vmem:[%s902 + $0x4] sm:$0xf]
      %v905 = vld [vmem:[%s902 + $0x8] sm:$0xf]
      %v906 = vld [vmem:[%s902 + $0xc] sm:$0xf]
      %v907 = vld [vmem:[%s902 + $0x10] sm:$0xf]
      %v908 = vld [vmem:[%s902 + $0x14] sm:$0xf]
      %v909 = vld [vmem:[%s902 + $0x18] sm:$0xf]
      %v910 = vld [vmem:[%s902 + $0x1c] sm:$0xf]
      %v911 = vld [vmem:[%s902 + $0x20] sm:$0xf]
      %v912 = vld [vmem:[%s902 + $0x24] sm:$0xf]
      %v913 = vld [vmem:[%s902 + $0x28] sm:$0xf]
      %v914 = vld [vmem:[%s902 + $0x2c] sm:$0xf]
      %v915 = vld [vmem:[%s902 + $0x30] sm:$0xf]
      %v916 = vld [vmem:[%s902 + $0x34] sm:$0xf]
      %v917 = vld [vmem:[%s902 + $0x38] sm:$0xf]
      %v918 = vld [vmem:[%s902 + $0x3c] sm:$0xf]
      %v935 = vunpack.c.l.b16 %v903
      %v936 = vunpack.c.l.b16 %v904
      %v937 = vunpack.c.l.b16 %v905
      %v938 = vunpack.c.l.b16 %v906
      %v939 = vunpack.c.l.b16 %v907
      %v940 = vunpack.c.l.b16 %v908
      %v941 = vunpack.c.l.b16 %v909
      %v942 = vunpack.c.l.b16 %v910
      %v943 = vunpack.c.l.b16 %v911
      %v944 = vunpack.c.l.b16 %v912
      %v945 = vunpack.c.l.b16 %v913
      %v946 = vunpack.c.l.b16 %v914
      %v947 = vunpack.c.l.b16 %v915
      %v948 = vunpack.c.l.b16 %v916
      %v949 = vunpack.c.l.b16 %v917
      %v950 = vunpack.c.l.b16 %v918
      %v951 = vpack.c.b16 %v936, %v935
      %v952 = vpack.c.b16 %v938, %v937
      %v953 = vpack.c.b16 %v940, %v939
      %v954 = vpack.c.b16 %v942, %v941
      %v955 = vpack.c.b16 %v944, %v943
      %v956 = vpack.c.b16 %v946, %v945
      %v957 = vpack.c.b16 %v948, %v947
      %v958 = vpack.c.b16 %v950, %v949
      %967 = vmatpush.bf16.msra.mxu0 %v958
      %968 = vmatpush.bf16.msra.mxu0 %v957
      %969 = vmatpush.bf16.msra.mxu0 %v956
      %970 = vmatpush.bf16.msra.mxu0 %v955
      %971 = vmatpush.bf16.msra.mxu0 %v954
      %972 = vmatpush.bf16.msra.mxu0 %v953
      %973 = vmatpush.bf16.msra.mxu0 %v952
      %974 = vmatpush.bf16.msra.mxu0 %v951
      %975 = vmatmul.bf16.gmra.mxu0 %v886
      %v976 = vpop.f32.mrf.mxu0
      %v977 = vadd.f32 0.0, %v976
      %v978 = vpop.f32.mrf.mxu0
      %v979 = vadd.f32 0.0, %v978
      %980 = vmatmul.bf16.gmra.mxu0 %v887
      %v981 = vpop.f32.mrf.mxu0
      %v982 = vadd.f32 0.0, %v981
      %v983 = vpop.f32.mrf.mxu0
      %v984 = vadd.f32 0.0, %v983
      %985 = vmatmul.bf16.gmra.mxu0 %v888
      %v986 = vpop.f32.mrf.mxu0
      %v987 = vadd.f32 0.0, %v986
      %v988 = vpop.f32.mrf.mxu0
      %v989 = vadd.f32 0.0, %v988
      %990 = vmatmul.bf16.gmra.mxu0 %v889
      %v991 = vpop.f32.mrf.mxu0
      %v992 = vadd.f32 0.0, %v991
      %v993 = vpop.f32.mrf.mxu0
      %v994 = vadd.f32 0.0, %v993
      %995 = vmatmul.bf16.gmra.mxu0 %v890
      %v996 = vpop.f32.mrf.mxu0
      %v997 = vadd.f32 0.0, %v996
      %v998 = vpop.f32.mrf.mxu0
      %v999 = vadd.f32 0.0, %v998
      %1000 = vmatmul.bf16.gmra.mxu0 %v891
      %v1001 = vpop.f32.mrf.mxu0
      %v1002 = vadd.f32 0.0, %v1001
      %v1003 = vpop.f32.mrf.mxu0
      %v1004 = vadd.f32 0.0, %v1003
      %1005 = vmatmul.bf16.gmra.mxu0 %v892
      %v1006 = vpop.f32.mrf.mxu0
      %v1007 = vadd.f32 0.0, %v1006
      %v1008 = vpop.f32.mrf.mxu0
      %v1009 = vadd.f32 0.0, %v1008
      %1010 = vmatmul.bf16.gmra.mxu0 %v893
      %v1011 = vpop.f32.mrf.mxu0
      %v1012 = vadd.f32 0.0, %v1011
      %v1013 = vpop.f32.mrf.mxu0
      %v1014 = vadd.f32 0.0, %v1013
      %1015 = vmatmul.bf16.gmra.mxu0 %v894
      %v1016 = vpop.f32.mrf.mxu0
      %v1017 = vadd.f32 0.0, %v1016
      %v1018 = vpop.f32.mrf.mxu0
      %v1019 = vadd.f32 0.0, %v1018
      %1020 = vmatmul.bf16.gmra.mxu0 %v895
      %v1021 = vpop.f32.mrf.mxu0
      %v1022 = vadd.f32 0.0, %v1021
      %v1023 = vpop.f32.mrf.mxu0
      %v1024 = vadd.f32 0.0, %v1023
      %1025 = vmatmul.bf16.gmra.mxu0 %v896
      %v1026 = vpop.f32.mrf.mxu0
      %v1027 = vadd.f32 0.0, %v1026
      %v1028 = vpop.f32.mrf.mxu0
      %v1029 = vadd.f32 0.0, %v1028
      %1030 = vmatmul.bf16.gmra.mxu0 %v897
      %v1031 = vpop.f32.mrf.mxu0
      %v1032 = vadd.f32 0.0, %v1031
      %v1033 = vpop.f32.mrf.mxu0
      %v1034 = vadd.f32 0.0, %v1033
      %1035 = vmatmul.bf16.gmra.mxu0 %v898
      %v1036 = vpop.f32.mrf.mxu0
      %v1037 = vadd.f32 0.0, %v1036
      %v1038 = vpop.f32.mrf.mxu0
      %v1039 = vadd.f32 0.0, %v1038
      %1040 = vmatmul.bf16.gmra.mxu0 %v899
      %v1041 = vpop.f32.mrf.mxu0
      %v1042 = vadd.f32 0.0, %v1041
      %v1043 = vpop.f32.mrf.mxu0
      %v1044 = vadd.f32 0.0, %v1043
      %1045 = vmatmul.bf16.gmra.mxu0 %v900
      %v1046 = vpop.f32.mrf.mxu0
      %v1047 = vadd.f32 0.0, %v1046
      %v1048 = vpop.f32.mrf.mxu0
      %v1049 = vadd.f32 0.0, %v1048
      %1050 = vmatmul.bf16.gmra.mxu0 %v901
      %v1051 = vpop.f32.mrf.mxu0
      %v1052 = vadd.f32 0.0, %v1051
      %v1053 = vpop.f32.mrf.mxu0
      %v1054 = vadd.f32 0.0, %v1053
      %1055 = vdwg.mxu0
      %v1056 = vadd.f32 %v775, %v977
      %v1057 = vadd.f32 %v777, %v979
      %v1058 = vadd.f32 %v780, %v982
      %v1059 = vadd.f32 %v782, %v984
      %v1060 = vadd.f32 %v785, %v987
      %v1061 = vadd.f32 %v787, %v989
      %v1062 = vadd.f32 %v790, %v992
      %v1063 = vadd.f32 %v792, %v994
      %v1064 = vadd.f32 %v795, %v997
      %v1065 = vadd.f32 %v797, %v999
      %v1066 = vadd.f32 %v800, %v1002
      %v1067 = vadd.f32 %v802, %v1004
      %v1068 = vadd.f32 %v805, %v1007
      %v1069 = vadd.f32 %v807, %v1009
      %v1070 = vadd.f32 %v810, %v1012
      %v1071 = vadd.f32 %v812, %v1014
      %v1072 = vadd.f32 %v815, %v1017
      %v1073 = vadd.f32 %v817, %v1019
      %v1074 = vadd.f32 %v820, %v1022
      %v1075 = vadd.f32 %v822, %v1024
      %v1076 = vadd.f32 %v825, %v1027
      %v1077 = vadd.f32 %v827, %v1029
      %v1078 = vadd.f32 %v830, %v1032
      %v1079 = vadd.f32 %v832, %v1034
      %v1080 = vadd.f32 %v835, %v1037
      %v1081 = vadd.f32 %v837, %v1039
      %v1082 = vadd.f32 %v840, %v1042
      %v1083 = vadd.f32 %v842, %v1044
      %v1084 = vadd.f32 %v845, %v1047
      %v1085 = vadd.f32 %v847, %v1049
      %v1086 = vadd.f32 %v850, %v1052
      %v1087 = vadd.f32 %v852, %v1054
      %v1088 = vld [vmem:[%s418] sm:$0xff]
      %v1089 = vld [vmem:[%s418 + $0x8] sm:$0xff]
      %v1090 = vld [vmem:[%s418 + $0x18] sm:$0xff]
      %v1091 = vld [vmem:[%s418 + $0x20] sm:$0xff]
      %v1092 = vld [vmem:[%s418 + $0x30] sm:$0xff]
      %v1093 = vld [vmem:[%s418 + $0x38] sm:$0xff]
      %v1094 = vld [vmem:[%s418 + $0x48] sm:$0xff]
      %v1095 = vld [vmem:[%s418 + $0x50] sm:$0xff]
      %v1096 = vld [vmem:[%s418 + $0x60] sm:$0xff]
      %v1097 = vld [vmem:[%s418 + $0x68] sm:$0xff]
      %v1098 = vld [vmem:[%s418 + $0x78] sm:$0xff]
      %v1099 = vld [vmem:[%s418 + $0x80] sm:$0xff]
      %v1100 = vld [vmem:[%s418 + $0x90] sm:$0xff]
      %v1101 = vld [vmem:[%s418 + $0x98] sm:$0xff]
      %v1102 = vld [vmem:[%s418 + $0xa8] sm:$0xff]
      %v1103 = vld [vmem:[%s418 + $0xb0] sm:$0xff]
      %v1104 = vld [vmem:[%s418 + $0xc0] sm:$0xff]
      %v1105 = vld [vmem:[%s418 + $0xc8] sm:$0xff]
      %v1106 = vld [vmem:[%s418 + $0xd8] sm:$0xff]
      %v1107 = vld [vmem:[%s418 + $0xe0] sm:$0xff]
      %v1108 = vld [vmem:[%s418 + $0xf0] sm:$0xff]
      %v1109 = vld [vmem:[%s418 + $0xf8] sm:$0xff]
      %v1110 = vld [vmem:[%s418 + $0x108] sm:$0xff]
      %v1111 = vld [vmem:[%s418 + $0x110] sm:$0xff]
      %v1112 = vld [vmem:[%s418 + $0x120] sm:$0xff]
      %v1113 = vld [vmem:[%s418 + $0x128] sm:$0xff]
      %v1114 = vld [vmem:[%s418 + $0x138] sm:$0xff]
      %v1115 = vld [vmem:[%s418 + $0x140] sm:$0xff]
      %v1116 = vld [vmem:[%s418 + $0x150] sm:$0xff]
      %v1117 = vld [vmem:[%s418 + $0x158] sm:$0xff]
      %v1118 = vld [vmem:[%s418 + $0x168] sm:$0xff]
      %v1119 = vld [vmem:[%s418 + $0x170] sm:$0xff]
      %v1120 = vpack.c.bf16 %v1089, %v1088
      %v1121 = vpack.c.bf16 %v1091, %v1090
      %v1122 = vpack.c.bf16 %v1093, %v1092
      %v1123 = vpack.c.bf16 %v1095, %v1094
      %v1124 = vpack.c.bf16 %v1097, %v1096
      %v1125 = vpack.c.bf16 %v1099, %v1098
      %v1126 = vpack.c.bf16 %v1101, %v1100
      %v1127 = vpack.c.bf16 %v1103, %v1102
      %v1128 = vpack.c.bf16 %v1105, %v1104
      %v1129 = vpack.c.bf16 %v1107, %v1106
      %v1130 = vpack.c.bf16 %v1109, %v1108
      %v1131 = vpack.c.bf16 %v1111, %v1110
      %v1132 = vpack.c.bf16 %v1113, %v1112
      %v1133 = vpack.c.bf16 %v1115, %v1114
      %v1134 = vpack.c.bf16 %v1117, %v1116
      %v1135 = vpack.c.bf16 %v1119, %v1118
      %s1136 = scalar_lea.vmem %s1, 192
      %v1137 = vld [vmem:[%s1136] sm:$0xf]
      %v1138 = vld [vmem:[%s1136 + $0x4] sm:$0xf]
      %v1139 = vld [vmem:[%s1136 + $0x8] sm:$0xf]
      %v1140 = vld [vmem:[%s1136 + $0xc] sm:$0xf]
      %v1141 = vld [vmem:[%s1136 + $0x10] sm:$0xf]
      %v1142 = vld [vmem:[%s1136 + $0x14] sm:$0xf]
      %v1143 = vld [vmem:[%s1136 + $0x18] sm:$0xf]
      %v1144 = vld [vmem:[%s1136 + $0x1c] sm:$0xf]
      %v1145 = vld [vmem:[%s1136 + $0x20] sm:$0xf]
      %v1146 = vld [vmem:[%s1136 + $0x24] sm:$0xf]
      %v1147 = vld [vmem:[%s1136 + $0x28] sm:$0xf]
      %v1148 = vld [vmem:[%s1136 + $0x2c] sm:$0xf]
      %v1149 = vld [vmem:[%s1136 + $0x30] sm:$0xf]
      %v1150 = vld [vmem:[%s1136 + $0x34] sm:$0xf]
      %v1151 = vld [vmem:[%s1136 + $0x38] sm:$0xf]
      %v1152 = vld [vmem:[%s1136 + $0x3c] sm:$0xf]
      %v1169 = vunpack.c.l.b16 %v1137
      %v1170 = vunpack.c.l.b16 %v1138
      %v1171 = vunpack.c.l.b16 %v1139
      %v1172 = vunpack.c.l.b16 %v1140
      %v1173 = vunpack.c.l.b16 %v1141
      %v1174 = vunpack.c.l.b16 %v1142
      %v1175 = vunpack.c.l.b16 %v1143
      %v1176 = vunpack.c.l.b16 %v1144
      %v1177 = vunpack.c.l.b16 %v1145
      %v1178 = vunpack.c.l.b16 %v1146
      %v1179 = vunpack.c.l.b16 %v1147
      %v1180 = vunpack.c.l.b16 %v1148
      %v1181 = vunpack.c.l.b16 %v1149
      %v1182 = vunpack.c.l.b16 %v1150
      %v1183 = vunpack.c.l.b16 %v1151
      %v1184 = vunpack.c.l.b16 %v1152
      %v1185 = vpack.c.b16 %v1170, %v1169
      %v1186 = vpack.c.b16 %v1172, %v1171
      %v1187 = vpack.c.b16 %v1174, %v1173
      %v1188 = vpack.c.b16 %v1176, %v1175
      %v1189 = vpack.c.b16 %v1178, %v1177
      %v1190 = vpack.c.b16 %v1180, %v1179
      %v1191 = vpack.c.b16 %v1182, %v1181
      %v1192 = vpack.c.b16 %v1184, %v1183
      %1201 = vmatpush.bf16.msra.mxu0 %v1192
      %1202 = vmatpush.bf16.msra.mxu0 %v1191
      %1203 = vmatpush.bf16.msra.mxu0 %v1190
      %1204 = vmatpush.bf16.msra.mxu0 %v1189
      %1205 = vmatpush.bf16.msra.mxu0 %v1188
      %1206 = vmatpush.bf16.msra.mxu0 %v1187
      %1207 = vmatpush.bf16.msra.mxu0 %v1186
      %1208 = vmatpush.bf16.msra.mxu0 %v1185
      %1209 = vmatmul.bf16.gmra.mxu0 %v1120
      %v1210 = vpop.f32.mrf.mxu0
      %v1211 = vadd.f32 0.0, %v1210
      %v1212 = vpop.f32.mrf.mxu0
      %v1213 = vadd.f32 0.0, %v1212
      %1214 = vmatmul.bf16.gmra.mxu0 %v1121
      %v1215 = vpop.f32.mrf.mxu0
      %v1216 = vadd.f32 0.0, %v1215
      %v1217 = vpop.f32.mrf.mxu0
      %v1218 = vadd.f32 0.0, %v1217
      %1219 = vmatmul.bf16.gmra.mxu0 %v1122
      %v1220 = vpop.f32.mrf.mxu0
      %v1221 = vadd.f32 0.0, %v1220
      %v1222 = vpop.f32.mrf.mxu0
      %v1223 = vadd.f32 0.0, %v1222
      %1224 = vmatmul.bf16.gmra.mxu0 %v1123
      %v1225 = vpop.f32.mrf.mxu0
      %v1226 = vadd.f32 0.0, %v1225
      %v1227 = vpop.f32.mrf.mxu0
      %v1228 = vadd.f32 0.0, %v1227
      %1229 = vmatmul.bf16.gmra.mxu0 %v1124
      %v1230 = vpop.f32.mrf.mxu0
      %v1231 = vadd.f32 0.0, %v1230
      %v1232 = vpop.f32.mrf.mxu0
      %v1233 = vadd.f32 0.0, %v1232
      %1234 = vmatmul.bf16.gmra.mxu0 %v1125
      %v1235 = vpop.f32.mrf.mxu0
      %v1236 = vadd.f32 0.0, %v1235
      %v1237 = vpop.f32.mrf.mxu0
      %v1238 = vadd.f32 0.0, %v1237
      %1239 = vmatmul.bf16.gmra.mxu0 %v1126
      %v1240 = vpop.f32.mrf.mxu0
      %v1241 = vadd.f32 0.0, %v1240
      %v1242 = vpop.f32.mrf.mxu0
      %v1243 = vadd.f32 0.0, %v1242
      %1244 = vmatmul.bf16.gmra.mxu0 %v1127
      %v1245 = vpop.f32.mrf.mxu0
      %v1246 = vadd.f32 0.0, %v1245
      %v1247 = vpop.f32.mrf.mxu0
      %v1248 = vadd.f32 0.0, %v1247
      %1249 = vmatmul.bf16.gmra.mxu0 %v1128
      %v1250 = vpop.f32.mrf.mxu0
      %v1251 = vadd.f32 0.0, %v1250
      %v1252 = vpop.f32.mrf.mxu0
      %v1253 = vadd.f32 0.0, %v1252
      %1254 = vmatmul.bf16.gmra.mxu0 %v1129
      %v1255 = vpop.f32.mrf.mxu0
      %v1256 = vadd.f32 0.0, %v1255
      %v1257 = vpop.f32.mrf.mxu0
      %v1258 = vadd.f32 0.0, %v1257
      %1259 = vmatmul.bf16.gmra.mxu0 %v1130
      %v1260 = vpop.f32.mrf.mxu0
      %v1261 = vadd.f32 0.0, %v1260
      %v1262 = vpop.f32.mrf.mxu0
      %v1263 = vadd.f32 0.0, %v1262
      %1264 = vmatmul.bf16.gmra.mxu0 %v1131
      %v1265 = vpop.f32.mrf.mxu0
      %v1266 = vadd.f32 0.0, %v1265
      %v1267 = vpop.f32.mrf.mxu0
      %v1268 = vadd.f32 0.0, %v1267
      %1269 = vmatmul.bf16.gmra.mxu0 %v1132
      %v1270 = vpop.f32.mrf.mxu0
      %v1271 = vadd.f32 0.0, %v1270
      %v1272 = vpop.f32.mrf.mxu0
      %v1273 = vadd.f32 0.0, %v1272
      %1274 = vmatmul.bf16.gmra.mxu0 %v1133
      %v1275 = vpop.f32.mrf.mxu0
      %v1276 = vadd.f32 0.0, %v1275
      %v1277 = vpop.f32.mrf.mxu0
      %v1278 = vadd.f32 0.0, %v1277
      %1279 = vmatmul.bf16.gmra.mxu0 %v1134
      %v1280 = vpop.f32.mrf.mxu0
      %v1281 = vadd.f32 0.0, %v1280
      %v1282 = vpop.f32.mrf.mxu0
      %v1283 = vadd.f32 0.0, %v1282
      %1284 = vmatmul.bf16.gmra.mxu0 %v1135
      %v1285 = vpop.f32.mrf.mxu0
      %v1286 = vadd.f32 0.0, %v1285
      %v1287 = vpop.f32.mrf.mxu0
      %v1288 = vadd.f32 0.0, %v1287
      %1289 = vdwg.mxu0
      %v1290 = vadd.f32 %v1056, %v1211
      %v1291 = vadd.f32 %v1057, %v1213
      %v1292 = vadd.f32 %v1058, %v1216
      %v1293 = vadd.f32 %v1059, %v1218
      %v1294 = vadd.f32 %v1060, %v1221
      %v1295 = vadd.f32 %v1061, %v1223
      %v1296 = vadd.f32 %v1062, %v1226
      %v1297 = vadd.f32 %v1063, %v1228
      %v1298 = vadd.f32 %v1064, %v1231
      %v1299 = vadd.f32 %v1065, %v1233
      %v1300 = vadd.f32 %v1066, %v1236
      %v1301 = vadd.f32 %v1067, %v1238
      %v1302 = vadd.f32 %v1068, %v1241
      %v1303 = vadd.f32 %v1069, %v1243
      %v1304 = vadd.f32 %v1070, %v1246
      %v1305 = vadd.f32 %v1071, %v1248
      %v1306 = vadd.f32 %v1072, %v1251
      %v1307 = vadd.f32 %v1073, %v1253
      %v1308 = vadd.f32 %v1074, %v1256
      %v1309 = vadd.f32 %v1075, %v1258
      %v1310 = vadd.f32 %v1076, %v1261
      %v1311 = vadd.f32 %v1077, %v1263
      %v1312 = vadd.f32 %v1078, %v1266
      %v1313 = vadd.f32 %v1079, %v1268
      %v1314 = vadd.f32 %v1080, %v1271
      %v1315 = vadd.f32 %v1081, %v1273
      %v1316 = vadd.f32 %v1082, %v1276
      %v1317 = vadd.f32 %v1083, %v1278
      %v1318 = vadd.f32 %v1084, %v1281
      %v1319 = vadd.f32 %v1085, %v1283
      %v1320 = vadd.f32 %v1086, %v1286
      %v1321 = vadd.f32 %v1087, %v1288
      %v1322 = vld [vmem:[%s418 + $0x1] sm:$0xff]
      %v1323 = vld [vmem:[%s418 + $0x9] sm:$0xff]
      %v1324 = vld [vmem:[%s418 + $0x19] sm:$0xff]
      %v1325 = vld [vmem:[%s418 + $0x21] sm:$0xff]
      %v1326 = vld [vmem:[%s418 + $0x31] sm:$0xff]
      %v1327 = vld [vmem:[%s418 + $0x39] sm:$0xff]
      %v1328 = vld [vmem:[%s418 + $0x49] sm:$0xff]
      %v1329 = vld [vmem:[%s418 + $0x51] sm:$0xff]
      %v1330 = vld [vmem:[%s418 + $0x61] sm:$0xff]
      %v1331 = vld [vmem:[%s418 + $0x69] sm:$0xff]
      %v1332 = vld [vmem:[%s418 + $0x79] sm:$0xff]
      %v1333 = vld [vmem:[%s418 + $0x81] sm:$0xff]
      %v1334 = vld [vmem:[%s418 + $0x91] sm:$0xff]
      %v1335 = vld [vmem:[%s418 + $0x99] sm:$0xff]
      %v1336 = vld [vmem:[%s418 + $0xa9] sm:$0xff]
      %v1337 = vld [vmem:[%s418 + $0xb1] sm:$0xff]
      %v1338 = vld [vmem:[%s418 + $0xc1] sm:$0xff]
      %v1339 = vld [vmem:[%s418 + $0xc9] sm:$0xff]
      %v1340 = vld [vmem:[%s418 + $0xd9] sm:$0xff]
      %v1341 = vld [vmem:[%s418 + $0xe1] sm:$0xff]
      %v1342 = vld [vmem:[%s418 + $0xf1] sm:$0xff]
      %v1343 = vld [vmem:[%s418 + $0xf9] sm:$0xff]
      %v1344 = vld [vmem:[%s418 + $0x109] sm:$0xff]
      %v1345 = vld [vmem:[%s418 + $0x111] sm:$0xff]
      %v1346 = vld [vmem:[%s418 + $0x121] sm:$0xff]
      %v1347 = vld [vmem:[%s418 + $0x129] sm:$0xff]
      %v1348 = vld [vmem:[%s418 + $0x139] sm:$0xff]
      %v1349 = vld [vmem:[%s418 + $0x141] sm:$0xff]
      %v1350 = vld [vmem:[%s418 + $0x151] sm:$0xff]
      %v1351 = vld [vmem:[%s418 + $0x159] sm:$0xff]
      %v1352 = vld [vmem:[%s418 + $0x169] sm:$0xff]
      %v1353 = vld [vmem:[%s418 + $0x171] sm:$0xff]
      %v1354 = vpack.c.bf16 %v1323, %v1322
      %v1355 = vpack.c.bf16 %v1325, %v1324
      %v1356 = vpack.c.bf16 %v1327, %v1326
      %v1357 = vpack.c.bf16 %v1329, %v1328
      %v1358 = vpack.c.bf16 %v1331, %v1330
      %v1359 = vpack.c.bf16 %v1333, %v1332
      %v1360 = vpack.c.bf16 %v1335, %v1334
      %v1361 = vpack.c.bf16 %v1337, %v1336
      %v1362 = vpack.c.bf16 %v1339, %v1338
      %v1363 = vpack.c.bf16 %v1341, %v1340
      %v1364 = vpack.c.bf16 %v1343, %v1342
      %v1365 = vpack.c.bf16 %v1345, %v1344
      %v1366 = vpack.c.bf16 %v1347, %v1346
      %v1367 = vpack.c.bf16 %v1349, %v1348
      %v1368 = vpack.c.bf16 %v1351, %v1350
      %v1369 = vpack.c.bf16 %v1353, %v1352
      %s1370 = scalar_lea.vmem %s1, 256
      %v1371 = vld [vmem:[%s1370] sm:$0xf]
      %v1372 = vld [vmem:[%s1370 + $0x4] sm:$0xf]
      %v1373 = vld [vmem:[%s1370 + $0x8] sm:$0xf]
      %v1374 = vld [vmem:[%s1370 + $0xc] sm:$0xf]
      %v1375 = vld [vmem:[%s1370 + $0x10] sm:$0xf]
      %v1376 = vld [vmem:[%s1370 + $0x14] sm:$0xf]
      %v1377 = vld [vmem:[%s1370 + $0x18] sm:$0xf]
      %v1378 = vld [vmem:[%s1370 + $0x1c] sm:$0xf]
      %v1379 = vld [vmem:[%s1370 + $0x20] sm:$0xf]
      %v1380 = vld [vmem:[%s1370 + $0x24] sm:$0xf]
      %v1381 = vld [vmem:[%s1370 + $0x28] sm:$0xf]
      %v1382 = vld [vmem:[%s1370 + $0x2c] sm:$0xf]
      %v1383 = vld [vmem:[%s1370 + $0x30] sm:$0xf]
      %v1384 = vld [vmem:[%s1370 + $0x34] sm:$0xf]
      %v1385 = vld [vmem:[%s1370 + $0x38] sm:$0xf]
      %v1386 = vld [vmem:[%s1370 + $0x3c] sm:$0xf]
      %v1403 = vunpack.c.l.b16 %v1371
      %v1404 = vunpack.c.l.b16 %v1372
      %v1405 = vunpack.c.l.b16 %v1373
      %v1406 = vunpack.c.l.b16 %v1374
      %v1407 = vunpack.c.l.b16 %v1375
      %v1408 = vunpack.c.l.b16 %v1376
      %v1409 = vunpack.c.l.b16 %v1377
      %v1410 = vunpack.c.l.b16 %v1378
      %v1411 = vunpack.c.l.b16 %v1379
      %v1412 = vunpack.c.l.b16 %v1380
      %v1413 = vunpack.c.l.b16 %v1381
      %v1414 = vunpack.c.l.b16 %v1382
      %v1415 = vunpack.c.l.b16 %v1383
      %v1416 = vunpack.c.l.b16 %v1384
      %v1417 = vunpack.c.l.b16 %v1385
      %v1418 = vunpack.c.l.b16 %v1386
      %v1419 = vpack.c.b16 %v1404, %v1403
      %v1420 = vpack.c.b16 %v1406, %v1405
      %v1421 = vpack.c.b16 %v1408, %v1407
      %v1422 = vpack.c.b16 %v1410, %v1409
      %v1423 = vpack.c.b16 %v1412, %v1411
      %v1424 = vpack.c.b16 %v1414, %v1413
      %v1425 = vpack.c.b16 %v1416, %v1415
      %v1426 = vpack.c.b16 %v1418, %v1417
      %1435 = vmatpush.bf16.msra.mxu0 %v1426
      %1436 = vmatpush.bf16.msra.mxu0 %v1425
      %1437 = vmatpush.bf16.msra.mxu0 %v1424
      %1438 = vmatpush.bf16.msra.mxu0 %v1423
      %1439 = vmatpush.bf16.msra.mxu0 %v1422
      %1440 = vmatpush.bf16.msra.mxu0 %v1421
      %1441 = vmatpush.bf16.msra.mxu0 %v1420
      %1442 = vmatpush.bf16.msra.mxu0 %v1419
      %1443 = vmatmul.bf16.gmra.mxu0 %v1354
      %v1444 = vpop.f32.mrf.mxu0
      %v1445 = vadd.f32 0.0, %v1444
      %v1446 = vpop.f32.mrf.mxu0
      %v1447 = vadd.f32 0.0, %v1446
      %1448 = vmatmul.bf16.gmra.mxu0 %v1355
      %v1449 = vpop.f32.mrf.mxu0
      %v1450 = vadd.f32 0.0, %v1449
      %v1451 = vpop.f32.mrf.mxu0
      %v1452 = vadd.f32 0.0, %v1451
      %1453 = vmatmul.bf16.gmra.mxu0 %v1356
      %v1454 = vpop.f32.mrf.mxu0
      %v1455 = vadd.f32 0.0, %v1454
      %v1456 = vpop.f32.mrf.mxu0
      %v1457 = vadd.f32 0.0, %v1456
      %1458 = vmatmul.bf16.gmra.mxu0 %v1357
      %v1459 = vpop.f32.mrf.mxu0
      %v1460 = vadd.f32 0.0, %v1459
      %v1461 = vpop.f32.mrf.mxu0
      %v1462 = vadd.f32 0.0, %v1461
      %1463 = vmatmul.bf16.gmra.mxu0 %v1358
      %v1464 = vpop.f32.mrf.mxu0
      %v1465 = vadd.f32 0.0, %v1464
      %v1466 = vpop.f32.mrf.mxu0
      %v1467 = vadd.f32 0.0, %v1466
      %1468 = vmatmul.bf16.gmra.mxu0 %v1359
      %v1469 = vpop.f32.mrf.mxu0
      %v1470 = vadd.f32 0.0, %v1469
      %v1471 = vpop.f32.mrf.mxu0
      %v1472 = vadd.f32 0.0, %v1471
      %1473 = vmatmul.bf16.gmra.mxu0 %v1360
      %v1474 = vpop.f32.mrf.mxu0
      %v1475 = vadd.f32 0.0, %v1474
      %v1476 = vpop.f32.mrf.mxu0
      %v1477 = vadd.f32 0.0, %v1476
      %1478 = vmatmul.bf16.gmra.mxu0 %v1361
      %v1479 = vpop.f32.mrf.mxu0
      %v1480 = vadd.f32 0.0, %v1479
      %v1481 = vpop.f32.mrf.mxu0
      %v1482 = vadd.f32 0.0, %v1481
      %1483 = vmatmul.bf16.gmra.mxu0 %v1362
      %v1484 = vpop.f32.mrf.mxu0
      %v1485 = vadd.f32 0.0, %v1484
      %v1486 = vpop.f32.mrf.mxu0
      %v1487 = vadd.f32 0.0, %v1486
      %1488 = vmatmul.bf16.gmra.mxu0 %v1363
      %v1489 = vpop.f32.mrf.mxu0
      %v1490 = vadd.f32 0.0, %v1489
      %v1491 = vpop.f32.mrf.mxu0
      %v1492 = vadd.f32 0.0, %v1491
      %1493 = vmatmul.bf16.gmra.mxu0 %v1364
      %v1494 = vpop.f32.mrf.mxu0
      %v1495 = vadd.f32 0.0, %v1494
      %v1496 = vpop.f32.mrf.mxu0
      %v1497 = vadd.f32 0.0, %v1496
      %1498 = vmatmul.bf16.gmra.mxu0 %v1365
      %v1499 = vpop.f32.mrf.mxu0
      %v1500 = vadd.f32 0.0, %v1499
      %v1501 = vpop.f32.mrf.mxu0
      %v1502 = vadd.f32 0.0, %v1501
      %1503 = vmatmul.bf16.gmra.mxu0 %v1366
      %v1504 = vpop.f32.mrf.mxu0
      %v1505 = vadd.f32 0.0, %v1504
      %v1506 = vpop.f32.mrf.mxu0
      %v1507 = vadd.f32 0.0, %v1506
      %1508 = vmatmul.bf16.gmra.mxu0 %v1367
      %v1509 = vpop.f32.mrf.mxu0
      %v1510 = vadd.f32 0.0, %v1509
      %v1511 = vpop.f32.mrf.mxu0
      %v1512 = vadd.f32 0.0, %v1511
      %1513 = vmatmul.bf16.gmra.mxu0 %v1368
      %v1514 = vpop.f32.mrf.mxu0
      %v1515 = vadd.f32 0.0, %v1514
      %v1516 = vpop.f32.mrf.mxu0
      %v1517 = vadd.f32 0.0, %v1516
      %1518 = vmatmul.bf16.gmra.mxu0 %v1369
      %v1519 = vpop.f32.mrf.mxu0
      %v1520 = vadd.f32 0.0, %v1519
      %v1521 = vpop.f32.mrf.mxu0
      %v1522 = vadd.f32 0.0, %v1521
      %1523 = vdwg.mxu0
      %v1524 = vadd.f32 %v1290, %v1445
      %v1525 = vadd.f32 %v1291, %v1447
      %v1526 = vadd.f32 %v1292, %v1450
      %v1527 = vadd.f32 %v1293, %v1452
      %v1528 = vadd.f32 %v1294, %v1455
      %v1529 = vadd.f32 %v1295, %v1457
      %v1530 = vadd.f32 %v1296, %v1460
      %v1531 = vadd.f32 %v1297, %v1462
      %v1532 = vadd.f32 %v1298, %v1465
      %v1533 = vadd.f32 %v1299, %v1467
      %v1534 = vadd.f32 %v1300, %v1470
      %v1535 = vadd.f32 %v1301, %v1472
      %v1536 = vadd.f32 %v1302, %v1475
      %v1537 = vadd.f32 %v1303, %v1477
      %v1538 = vadd.f32 %v1304, %v1480
      %v1539 = vadd.f32 %v1305, %v1482
      %v1540 = vadd.f32 %v1306, %v1485
      %v1541 = vadd.f32 %v1307, %v1487
      %v1542 = vadd.f32 %v1308, %v1490
      %v1543 = vadd.f32 %v1309, %v1492
      %v1544 = vadd.f32 %v1310, %v1495
      %v1545 = vadd.f32 %v1311, %v1497
      %v1546 = vadd.f32 %v1312, %v1500
      %v1547 = vadd.f32 %v1313, %v1502
      %v1548 = vadd.f32 %v1314, %v1505
      %v1549 = vadd.f32 %v1315, %v1507
      %v1550 = vadd.f32 %v1316, %v1510
      %v1551 = vadd.f32 %v1317, %v1512
      %v1552 = vadd.f32 %v1318, %v1515
      %v1553 = vadd.f32 %v1319, %v1517
      %v1554 = vadd.f32 %v1320, %v1520
      %v1555 = vadd.f32 %v1321, %v1522
      %v1556 = vld [vmem:[%s418 + $0x2] sm:$0xff]
      %v1557 = vld [vmem:[%s418 + $0xa] sm:$0xff]
      %v1558 = vld [vmem:[%s418 + $0x1a] sm:$0xff]
      %v1559 = vld [vmem:[%s418 + $0x22] sm:$0xff]
      %v1560 = vld [vmem:[%s418 + $0x32] sm:$0xff]
      %v1561 = vld [vmem:[%s418 + $0x3a] sm:$0xff]
      %v1562 = vld [vmem:[%s418 + $0x4a] sm:$0xff]
      %v1563 = vld [vmem:[%s418 + $0x52] sm:$0xff]
      %v1564 = vld [vmem:[%s418 + $0x62] sm:$0xff]
      %v1565 = vld [vmem:[%s418 + $0x6a] sm:$0xff]
      %v1566 = vld [vmem:[%s418 + $0x7a] sm:$0xff]
      %v1567 = vld [vmem:[%s418 + $0x82] sm:$0xff]
      %v1568 = vld [vmem:[%s418 + $0x92] sm:$0xff]
      %v1569 = vld [vmem:[%s418 + $0x9a] sm:$0xff]
      %v1570 = vld [vmem:[%s418 + $0xaa] sm:$0xff]
      %v1571 = vld [vmem:[%s418 + $0xb2] sm:$0xff]
      %v1572 = vld [vmem:[%s418 + $0xc2] sm:$0xff]
      %v1573 = vld [vmem:[%s418 + $0xca] sm:$0xff]
      %v1574 = vld [vmem:[%s418 + $0xda] sm:$0xff]
      %v1575 = vld [vmem:[%s418 + $0xe2] sm:$0xff]
      %v1576 = vld [vmem:[%s418 + $0xf2] sm:$0xff]
      %v1577 = vld [vmem:[%s418 + $0xfa] sm:$0xff]
      %v1578 = vld [vmem:[%s418 + $0x10a] sm:$0xff]
      %v1579 = vld [vmem:[%s418 + $0x112] sm:$0xff]
      %v1580 = vld [vmem:[%s418 + $0x122] sm:$0xff]
      %v1581 = vld [vmem:[%s418 + $0x12a] sm:$0xff]
      %v1582 = vld [vmem:[%s418 + $0x13a] sm:$0xff]
      %v1583 = vld [vmem:[%s418 + $0x142] sm:$0xff]
      %v1584 = vld [vmem:[%s418 + $0x152] sm:$0xff]
      %v1585 = vld [vmem:[%s418 + $0x15a] sm:$0xff]
      %v1586 = vld [vmem:[%s418 + $0x16a] sm:$0xff]
      %v1587 = vld [vmem:[%s418 + $0x172] sm:$0xff]
      %v1588 = vpack.c.bf16 %v1557, %v1556
      %v1589 = vpack.c.bf16 %v1559, %v1558
      %v1590 = vpack.c.bf16 %v1561, %v1560
      %v1591 = vpack.c.bf16 %v1563, %v1562
      %v1592 = vpack.c.bf16 %v1565, %v1564
      %v1593 = vpack.c.bf16 %v1567, %v1566
      %v1594 = vpack.c.bf16 %v1569, %v1568
      %v1595 = vpack.c.bf16 %v1571, %v1570
      %v1596 = vpack.c.bf16 %v1573, %v1572
      %v1597 = vpack.c.bf16 %v1575, %v1574
      %v1598 = vpack.c.bf16 %v1577, %v1576
      %v1599 = vpack.c.bf16 %v1579, %v1578
      %v1600 = vpack.c.bf16 %v1581, %v1580
      %v1601 = vpack.c.bf16 %v1583, %v1582
      %v1602 = vpack.c.bf16 %v1585, %v1584
      %v1603 = vpack.c.bf16 %v1587, %v1586
      %s1604 = scalar_lea.vmem %s1, 320
      %v1605 = vld [vmem:[%s1604] sm:$0xf]
      %v1606 = vld [vmem:[%s1604 + $0x4] sm:$0xf]
      %v1607 = vld [vmem:[%s1604 + $0x8] sm:$0xf]
      %v1608 = vld [vmem:[%s1604 + $0xc] sm:$0xf]
      %v1609 = vld [vmem:[%s1604 + $0x10] sm:$0xf]
      %v1610 = vld [vmem:[%s1604 + $0x14] sm:$0xf]
      %v1611 = vld [vmem:[%s1604 + $0x18] sm:$0xf]
      %v1612 = vld [vmem:[%s1604 + $0x1c] sm:$0xf]
      %v1613 = vld [vmem:[%s1604 + $0x20] sm:$0xf]
      %v1614 = vld [vmem:[%s1604 + $0x24] sm:$0xf]
      %v1615 = vld [vmem:[%s1604 + $0x28] sm:$0xf]
      %v1616 = vld [vmem:[%s1604 + $0x2c] sm:$0xf]
      %v1617 = vld [vmem:[%s1604 + $0x30] sm:$0xf]
      %v1618 = vld [vmem:[%s1604 + $0x34] sm:$0xf]
      %v1619 = vld [vmem:[%s1604 + $0x38] sm:$0xf]
      %v1620 = vld [vmem:[%s1604 + $0x3c] sm:$0xf]
      %v1637 = vunpack.c.l.b16 %v1605
      %v1638 = vunpack.c.l.b16 %v1606
      %v1639 = vunpack.c.l.b16 %v1607
      %v1640 = vunpack.c.l.b16 %v1608
      %v1641 = vunpack.c.l.b16 %v1609
      %v1642 = vunpack.c.l.b16 %v1610
      %v1643 = vunpack.c.l.b16 %v1611
      %v1644 = vunpack.c.l.b16 %v1612
      %v1645 = vunpack.c.l.b16 %v1613
      %v1646 = vunpack.c.l.b16 %v1614
      %v1647 = vunpack.c.l.b16 %v1615
      %v1648 = vunpack.c.l.b16 %v1616
      %v1649 = vunpack.c.l.b16 %v1617
      %v1650 = vunpack.c.l.b16 %v1618
      %v1651 = vunpack.c.l.b16 %v1619
      %v1652 = vunpack.c.l.b16 %v1620
      %v1653 = vpack.c.b16 %v1638, %v1637
      %v1654 = vpack.c.b16 %v1640, %v1639
      %v1655 = vpack.c.b16 %v1642, %v1641
      %v1656 = vpack.c.b16 %v1644, %v1643
      %v1657 = vpack.c.b16 %v1646, %v1645
      %v1658 = vpack.c.b16 %v1648, %v1647
      %v1659 = vpack.c.b16 %v1650, %v1649
      %v1660 = vpack.c.b16 %v1652, %v1651
      %1669 = vmatpush.bf16.msra.mxu0 %v1660
      %1670 = vmatpush.bf16.msra.mxu0 %v1659
      %1671 = vmatpush.bf16.msra.mxu0 %v1658
      %1672 = vmatpush.bf16.msra.mxu0 %v1657
      %1673 = vmatpush.bf16.msra.mxu0 %v1656
      %1674 = vmatpush.bf16.msra.mxu0 %v1655
      %1675 = vmatpush.bf16.msra.mxu0 %v1654
      %1676 = vmatpush.bf16.msra.mxu0 %v1653
      %1677 = vmatmul.bf16.gmra.mxu0 %v1588
      %v1678 = vpop.f32.mrf.mxu0
      %v1679 = vadd.f32 0.0, %v1678
      %v1680 = vpop.f32.mrf.mxu0
      %v1681 = vadd.f32 0.0, %v1680
      %1682 = vmatmul.bf16.gmra.mxu0 %v1589
      %v1683 = vpop.f32.mrf.mxu0
      %v1684 = vadd.f32 0.0, %v1683
      %v1685 = vpop.f32.mrf.mxu0
      %v1686 = vadd.f32 0.0, %v1685
      %1687 = vmatmul.bf16.gmra.mxu0 %v1590
      %v1688 = vpop.f32.mrf.mxu0
      %v1689 = vadd.f32 0.0, %v1688
      %v1690 = vpop.f32.mrf.mxu0
      %v1691 = vadd.f32 0.0, %v1690
      %1692 = vmatmul.bf16.gmra.mxu0 %v1591
      %v1693 = vpop.f32.mrf.mxu0
      %v1694 = vadd.f32 0.0, %v1693
      %v1695 = vpop.f32.mrf.mxu0
      %v1696 = vadd.f32 0.0, %v1695
      %1697 = vmatmul.bf16.gmra.mxu0 %v1592
      %v1698 = vpop.f32.mrf.mxu0
      %v1699 = vadd.f32 0.0, %v1698
      %v1700 = vpop.f32.mrf.mxu0
      %v1701 = vadd.f32 0.0, %v1700
      %1702 = vmatmul.bf16.gmra.mxu0 %v1593
      %v1703 = vpop.f32.mrf.mxu0
      %v1704 = vadd.f32 0.0, %v1703
      %v1705 = vpop.f32.mrf.mxu0
      %v1706 = vadd.f32 0.0, %v1705
      %1707 = vmatmul.bf16.gmra.mxu0 %v1594
      %v1708 = vpop.f32.mrf.mxu0
      %v1709 = vadd.f32 0.0, %v1708
      %v1710 = vpop.f32.mrf.mxu0
      %v1711 = vadd.f32 0.0, %v1710
      %1712 = vmatmul.bf16.gmra.mxu0 %v1595
      %v1713 = vpop.f32.mrf.mxu0
      %v1714 = vadd.f32 0.0, %v1713
      %v1715 = vpop.f32.mrf.mxu0
      %v1716 = vadd.f32 0.0, %v1715
      %1717 = vmatmul.bf16.gmra.mxu0 %v1596
      %v1718 = vpop.f32.mrf.mxu0
      %v1719 = vadd.f32 0.0, %v1718
      %v1720 = vpop.f32.mrf.mxu0
      %v1721 = vadd.f32 0.0, %v1720
      %1722 = vmatmul.bf16.gmra.mxu0 %v1597
      %v1723 = vpop.f32.mrf.mxu0
      %v1724 = vadd.f32 0.0, %v1723
      %v1725 = vpop.f32.mrf.mxu0
      %v1726 = vadd.f32 0.0, %v1725
      %1727 = vmatmul.bf16.gmra.mxu0 %v1598
      %v1728 = vpop.f32.mrf.mxu0
      %v1729 = vadd.f32 0.0, %v1728
      %v1730 = vpop.f32.mrf.mxu0
      %v1731 = vadd.f32 0.0, %v1730
      %1732 = vmatmul.bf16.gmra.mxu0 %v1599
      %v1733 = vpop.f32.mrf.mxu0
      %v1734 = vadd.f32 0.0, %v1733
      %v1735 = vpop.f32.mrf.mxu0
      %v1736 = vadd.f32 0.0, %v1735
      %1737 = vmatmul.bf16.gmra.mxu0 %v1600
      %v1738 = vpop.f32.mrf.mxu0
      %v1739 = vadd.f32 0.0, %v1738
      %v1740 = vpop.f32.mrf.mxu0
      %v1741 = vadd.f32 0.0, %v1740
      %1742 = vmatmul.bf16.gmra.mxu0 %v1601
      %v1743 = vpop.f32.mrf.mxu0
      %v1744 = vadd.f32 0.0, %v1743
      %v1745 = vpop.f32.mrf.mxu0
      %v1746 = vadd.f32 0.0, %v1745
      %1747 = vmatmul.bf16.gmra.mxu0 %v1602
      %v1748 = vpop.f32.mrf.mxu0
      %v1749 = vadd.f32 0.0, %v1748
      %v1750 = vpop.f32.mrf.mxu0
      %v1751 = vadd.f32 0.0, %v1750
      %1752 = vmatmul.bf16.gmra.mxu0 %v1603
      %v1753 = vpop.f32.mrf.mxu0
      %v1754 = vadd.f32 0.0, %v1753
      %v1755 = vpop.f32.mrf.mxu0
      %v1756 = vadd.f32 0.0, %v1755
      %1757 = vdwg.mxu0
      %v1758 = vadd.f32 %v1524, %v1679
      %v1759 = vadd.f32 %v1525, %v1681
      %v1760 = vadd.f32 %v1526, %v1684
      %v1761 = vadd.f32 %v1527, %v1686
      %v1762 = vadd.f32 %v1528, %v1689
      %v1763 = vadd.f32 %v1529, %v1691
      %v1764 = vadd.f32 %v1530, %v1694
      %v1765 = vadd.f32 %v1531, %v1696
      %v1766 = vadd.f32 %v1532, %v1699
      %v1767 = vadd.f32 %v1533, %v1701
      %v1768 = vadd.f32 %v1534, %v1704
      %v1769 = vadd.f32 %v1535, %v1706
      %v1770 = vadd.f32 %v1536, %v1709
      %v1771 = vadd.f32 %v1537, %v1711
      %v1772 = vadd.f32 %v1538, %v1714
      %v1773 = vadd.f32 %v1539, %v1716
      %v1774 = vadd.f32 %v1540, %v1719
      %v1775 = vadd.f32 %v1541, %v1721
      %v1776 = vadd.f32 %v1542, %v1724
      %v1777 = vadd.f32 %v1543, %v1726
      %v1778 = vadd.f32 %v1544, %v1729
      %v1779 = vadd.f32 %v1545, %v1731
      %v1780 = vadd.f32 %v1546, %v1734
      %v1781 = vadd.f32 %v1547, %v1736
      %v1782 = vadd.f32 %v1548, %v1739
      %v1783 = vadd.f32 %v1549, %v1741
      %v1784 = vadd.f32 %v1550, %v1744
      %v1785 = vadd.f32 %v1551, %v1746
      %v1786 = vadd.f32 %v1552, %v1749
      %v1787 = vadd.f32 %v1553, %v1751
      %v1788 = vadd.f32 %v1554, %v1754
      %v1789 = vadd.f32 %v1555, %v1756
      %s1790 = scalar_lea.vmem [#allocation2], 48
      %v1791 = vld [vmem:[%s1790] sm:$0xff]
      %v1792 = vld [vmem:[%s1790 + $0x8] sm:$0xff]
      %v1793 = vld [vmem:[%s1790 + $0x18] sm:$0xff]
      %v1794 = vld [vmem:[%s1790 + $0x20] sm:$0xff]
      %v1795 = vld [vmem:[%s1790 + $0x30] sm:$0xff]
      %v1796 = vld [vmem:[%s1790 + $0x38] sm:$0xff]
      %v1797 = vld [vmem:[%s1790 + $0x48] sm:$0xff]
      %v1798 = vld [vmem:[%s1790 + $0x50] sm:$0xff]
      %v1799 = vld [vmem:[%s1790 + $0x60] sm:$0xff]
      %v1800 = vld [vmem:[%s1790 + $0x68] sm:$0xff]
      %v1801 = vld [vmem:[%s1790 + $0x78] sm:$0xff]
      %v1802 = vld [vmem:[%s1790 + $0x80] sm:$0xff]
      %v1803 = vld [vmem:[%s1790 + $0x90] sm:$0xff]
      %v1804 = vld [vmem:[%s1790 + $0x98] sm:$0xff]
      %v1805 = vld [vmem:[%s1790 + $0xa8] sm:$0xff]
      %v1806 = vld [vmem:[%s1790 + $0xb0] sm:$0xff]
      %v1807 = vld [vmem:[%s1790 + $0xc0] sm:$0xff]
      %v1808 = vld [vmem:[%s1790 + $0xc8] sm:$0xff]
      %v1809 = vld [vmem:[%s1790 + $0xd8] sm:$0xff]
      %v1810 = vld [vmem:[%s1790 + $0xe0] sm:$0xff]
      %v1811 = vld [vmem:[%s1790 + $0xf0] sm:$0xff]
      %v1812 = vld [vmem:[%s1790 + $0xf8] sm:$0xff]
      %v1813 = vld [vmem:[%s1790 + $0x108] sm:$0xff]
      %v1814 = vld [vmem:[%s1790 + $0x110] sm:$0xff]
      %v1815 = vld [vmem:[%s1790 + $0x120] sm:$0xff]
      %v1816 = vld [vmem:[%s1790 + $0x128] sm:$0xff]
      %v1817 = vld [vmem:[%s1790 + $0x138] sm:$0xff]
      %v1818 = vld [vmem:[%s1790 + $0x140] sm:$0xff]
      %v1819 = vld [vmem:[%s1790 + $0x150] sm:$0xff]
      %v1820 = vld [vmem:[%s1790 + $0x158] sm:$0xff]
      %v1821 = vld [vmem:[%s1790 + $0x168] sm:$0xff]
      %v1822 = vld [vmem:[%s1790 + $0x170] sm:$0xff]
      %v1823 = vpack.c.bf16 %v1792, %v1791
      %v1824 = vpack.c.bf16 %v1794, %v1793
      %v1825 = vpack.c.bf16 %v1796, %v1795
      %v1826 = vpack.c.bf16 %v1798, %v1797
      %v1827 = vpack.c.bf16 %v1800, %v1799
      %v1828 = vpack.c.bf16 %v1802, %v1801
      %v1829 = vpack.c.bf16 %v1804, %v1803
      %v1830 = vpack.c.bf16 %v1806, %v1805
      %v1831 = vpack.c.bf16 %v1808, %v1807
      %v1832 = vpack.c.bf16 %v1810, %v1809
      %v1833 = vpack.c.bf16 %v1812, %v1811
      %v1834 = vpack.c.bf16 %v1814, %v1813
      %v1835 = vpack.c.bf16 %v1816, %v1815
      %v1836 = vpack.c.bf16 %v1818, %v1817
      %v1837 = vpack.c.bf16 %v1820, %v1819
      %v1838 = vpack.c.bf16 %v1822, %v1821
      %s1839 = scalar_lea.vmem %s1, 384
      %v1840 = vld [vmem:[%s1839] sm:$0xf]
      %v1841 = vld [vmem:[%s1839 + $0x4] sm:$0xf]
      %v1842 = vld [vmem:[%s1839 + $0x8] sm:$0xf]
      %v1843 = vld [vmem:[%s1839 + $0xc] sm:$0xf]
      %v1844 = vld [vmem:[%s1839 + $0x10] sm:$0xf]
      %v1845 = vld [vmem:[%s1839 + $0x14] sm:$0xf]
      %v1846 = vld [vmem:[%s1839 + $0x18] sm:$0xf]
      %v1847 = vld [vmem:[%s1839 + $0x1c] sm:$0xf]
      %v1848 = vld [vmem:[%s1839 + $0x20] sm:$0xf]
      %v1849 = vld [vmem:[%s1839 + $0x24] sm:$0xf]
      %v1850 = vld [vmem:[%s1839 + $0x28] sm:$0xf]
      %v1851 = vld [vmem:[%s1839 + $0x2c] sm:$0xf]
      %v1852 = vld [vmem:[%s1839 + $0x30] sm:$0xf]
      %v1853 = vld [vmem:[%s1839 + $0x34] sm:$0xf]
      %v1854 = vld [vmem:[%s1839 + $0x38] sm:$0xf]
      %v1855 = vld [vmem:[%s1839 + $0x3c] sm:$0xf]
      %v1872 = vunpack.c.l.b16 %v1840
      %v1873 = vunpack.c.l.b16 %v1841
      %v1874 = vunpack.c.l.b16 %v1842
      %v1875 = vunpack.c.l.b16 %v1843
      %v1876 = vunpack.c.l.b16 %v1844
      %v1877 = vunpack.c.l.b16 %v1845
      %v1878 = vunpack.c.l.b16 %v1846
      %v1879 = vunpack.c.l.b16 %v1847
      %v1880 = vunpack.c.l.b16 %v1848
      %v1881 = vunpack.c.l.b16 %v1849
      %v1882 = vunpack.c.l.b16 %v1850
      %v1883 = vunpack.c.l.b16 %v1851
      %v1884 = vunpack.c.l.b16 %v1852
      %v1885 = vunpack.c.l.b16 %v1853
      %v1886 = vunpack.c.l.b16 %v1854
      %v1887 = vunpack.c.l.b16 %v1855
      %v1888 = vpack.c.b16 %v1873, %v1872
      %v1889 = vpack.c.b16 %v1875, %v1874
      %v1890 = vpack.c.b16 %v1877, %v1876
      %v1891 = vpack.c.b16 %v1879, %v1878
      %v1892 = vpack.c.b16 %v1881, %v1880
      %v1893 = vpack.c.b16 %v1883, %v1882
      %v1894 = vpack.c.b16 %v1885, %v1884
      %v1895 = vpack.c.b16 %v1887, %v1886
      %1904 = vmatpush.bf16.msra.mxu0 %v1895
      %1905 = vmatpush.bf16.msra.mxu0 %v1894
      %1906 = vmatpush.bf16.msra.mxu0 %v1893
      %1907 = vmatpush.bf16.msra.mxu0 %v1892
      %1908 = vmatpush.bf16.msra.mxu0 %v1891
      %1909 = vmatpush.bf16.msra.mxu0 %v1890
      %1910 = vmatpush.bf16.msra.mxu0 %v1889
      %1911 = vmatpush.bf16.msra.mxu0 %v1888
      %1912 = vmatmul.bf16.gmra.mxu0 %v1823
      %v1913 = vpop.f32.mrf.mxu0
      %v1914 = vadd.f32 0.0, %v1913
      %v1915 = vpop.f32.mrf.mxu0
      %v1916 = vadd.f32 0.0, %v1915
      %1917 = vmatmul.bf16.gmra.mxu0 %v1824
      %v1918 = vpop.f32.mrf.mxu0
      %v1919 = vadd.f32 0.0, %v1918
      %v1920 = vpop.f32.mrf.mxu0
      %v1921 = vadd.f32 0.0, %v1920
      %1922 = vmatmul.bf16.gmra.mxu0 %v1825
      %v1923 = vpop.f32.mrf.mxu0
      %v1924 = vadd.f32 0.0, %v1923
      %v1925 = vpop.f32.mrf.mxu0
      %v1926 = vadd.f32 0.0, %v1925
      %1927 = vmatmul.bf16.gmra.mxu0 %v1826
      %v1928 = vpop.f32.mrf.mxu0
      %v1929 = vadd.f32 0.0, %v1928
      %v1930 = vpop.f32.mrf.mxu0
      %v1931 = vadd.f32 0.0, %v1930
      %1932 = vmatmul.bf16.gmra.mxu0 %v1827
      %v1933 = vpop.f32.mrf.mxu0
      %v1934 = vadd.f32 0.0, %v1933
      %v1935 = vpop.f32.mrf.mxu0
      %v1936 = vadd.f32 0.0, %v1935
      %1937 = vmatmul.bf16.gmra.mxu0 %v1828
      %v1938 = vpop.f32.mrf.mxu0
      %v1939 = vadd.f32 0.0, %v1938
      %v1940 = vpop.f32.mrf.mxu0
      %v1941 = vadd.f32 0.0, %v1940
      %1942 = vmatmul.bf16.gmra.mxu0 %v1829
      %v1943 = vpop.f32.mrf.mxu0
      %v1944 = vadd.f32 0.0, %v1943
      %v1945 = vpop.f32.mrf.mxu0
      %v1946 = vadd.f32 0.0, %v1945
      %1947 = vmatmul.bf16.gmra.mxu0 %v1830
      %v1948 = vpop.f32.mrf.mxu0
      %v1949 = vadd.f32 0.0, %v1948
      %v1950 = vpop.f32.mrf.mxu0
      %v1951 = vadd.f32 0.0, %v1950
      %1952 = vmatmul.bf16.gmra.mxu0 %v1831
      %v1953 = vpop.f32.mrf.mxu0
      %v1954 = vadd.f32 0.0, %v1953
      %v1955 = vpop.f32.mrf.mxu0
      %v1956 = vadd.f32 0.0, %v1955
      %1957 = vmatmul.bf16.gmra.mxu0 %v1832
      %v1958 = vpop.f32.mrf.mxu0
      %v1959 = vadd.f32 0.0, %v1958
      %v1960 = vpop.f32.mrf.mxu0
      %v1961 = vadd.f32 0.0, %v1960
      %1962 = vmatmul.bf16.gmra.mxu0 %v1833
      %v1963 = vpop.f32.mrf.mxu0
      %v1964 = vadd.f32 0.0, %v1963
      %v1965 = vpop.f32.mrf.mxu0
      %v1966 = vadd.f32 0.0, %v1965
      %1967 = vmatmul.bf16.gmra.mxu0 %v1834
      %v1968 = vpop.f32.mrf.mxu0
      %v1969 = vadd.f32 0.0, %v1968
      %v1970 = vpop.f32.mrf.mxu0
      %v1971 = vadd.f32 0.0, %v1970
      %1972 = vmatmul.bf16.gmra.mxu0 %v1835
      %v1973 = vpop.f32.mrf.mxu0
      %v1974 = vadd.f32 0.0, %v1973
      %v1975 = vpop.f32.mrf.mxu0
      %v1976 = vadd.f32 0.0, %v1975
      %1977 = vmatmul.bf16.gmra.mxu0 %v1836
      %v1978 = vpop.f32.mrf.mxu0
      %v1979 = vadd.f32 0.0, %v1978
      %v1980 = vpop.f32.mrf.mxu0
      %v1981 = vadd.f32 0.0, %v1980
      %1982 = vmatmul.bf16.gmra.mxu0 %v1837
      %v1983 = vpop.f32.mrf.mxu0
      %v1984 = vadd.f32 0.0, %v1983
      %v1985 = vpop.f32.mrf.mxu0
      %v1986 = vadd.f32 0.0, %v1985
      %1987 = vmatmul.bf16.gmra.mxu0 %v1838
      %v1988 = vpop.f32.mrf.mxu0
      %v1989 = vadd.f32 0.0, %v1988
      %v1990 = vpop.f32.mrf.mxu0
      %v1991 = vadd.f32 0.0, %v1990
      %1992 = vdwg.mxu0
      %v1993 = vadd.f32 %v1758, %v1914
      %v1994 = vadd.f32 %v1759, %v1916
      %v1995 = vadd.f32 %v1760, %v1919
      %v1996 = vadd.f32 %v1761, %v1921
      %v1997 = vadd.f32 %v1762, %v1924
      %v1998 = vadd.f32 %v1763, %v1926
      %v1999 = vadd.f32 %v1764, %v1929
      %v2000 = vadd.f32 %v1765, %v1931
      %v2001 = vadd.f32 %v1766, %v1934
      %v2002 = vadd.f32 %v1767, %v1936
      %v2003 = vadd.f32 %v1768, %v1939
      %v2004 = vadd.f32 %v1769, %v1941
      %v2005 = vadd.f32 %v1770, %v1944
      %v2006 = vadd.f32 %v1771, %v1946
      %v2007 = vadd.f32 %v1772, %v1949
      %v2008 = vadd.f32 %v1773, %v1951
      %v2009 = vadd.f32 %v1774, %v1954
      %v2010 = vadd.f32 %v1775, %v1956
      %v2011 = vadd.f32 %v1776, %v1959
      %v2012 = vadd.f32 %v1777, %v1961
      %v2013 = vadd.f32 %v1778, %v1964
      %v2014 = vadd.f32 %v1779, %v1966
      %v2015 = vadd.f32 %v1780, %v1969
      %v2016 = vadd.f32 %v1781, %v1971
      %v2017 = vadd.f32 %v1782, %v1974
      %v2018 = vadd.f32 %v1783, %v1976
      %v2019 = vadd.f32 %v1784, %v1979
      %v2020 = vadd.f32 %v1785, %v1981
      %v2021 = vadd.f32 %v1786, %v1984
      %v2022 = vadd.f32 %v1787, %v1986
      %v2023 = vadd.f32 %v1788, %v1989
      %v2024 = vadd.f32 %v1789, %v1991
      %v2025 = vld [vmem:[%s1790 + $0x1] sm:$0xff]
      %v2026 = vld [vmem:[%s1790 + $0x9] sm:$0xff]
      %v2027 = vld [vmem:[%s1790 + $0x19] sm:$0xff]
      %v2028 = vld [vmem:[%s1790 + $0x21] sm:$0xff]
      %v2029 = vld [vmem:[%s1790 + $0x31] sm:$0xff]
      %v2030 = vld [vmem:[%s1790 + $0x39] sm:$0xff]
      %v2031 = vld [vmem:[%s1790 + $0x49] sm:$0xff]
      %v2032 = vld [vmem:[%s1790 + $0x51] sm:$0xff]
      %v2033 = vld [vmem:[%s1790 + $0x61] sm:$0xff]
      %v2034 = vld [vmem:[%s1790 + $0x69] sm:$0xff]
      %v2035 = vld [vmem:[%s1790 + $0x79] sm:$0xff]
      %v2036 = vld [vmem:[%s1790 + $0x81] sm:$0xff]
      %v2037 = vld [vmem:[%s1790 + $0x91] sm:$0xff]
      %v2038 = vld [vmem:[%s1790 + $0x99] sm:$0xff]
      %v2039 = vld [vmem:[%s1790 + $0xa9] sm:$0xff]
      %v2040 = vld [vmem:[%s1790 + $0xb1] sm:$0xff]
      %v2041 = vld [vmem:[%s1790 + $0xc1] sm:$0xff]
      %v2042 = vld [vmem:[%s1790 + $0xc9] sm:$0xff]
      %v2043 = vld [vmem:[%s1790 + $0xd9] sm:$0xff]
      %v2044 = vld [vmem:[%s1790 + $0xe1] sm:$0xff]
      %v2045 = vld [vmem:[%s1790 + $0xf1] sm:$0xff]
      %v2046 = vld [vmem:[%s1790 + $0xf9] sm:$0xff]
      %v2047 = vld [vmem:[%s1790 + $0x109] sm:$0xff]
      %v2048 = vld [vmem:[%s1790 + $0x111] sm:$0xff]
      %v2049 = vld [vmem:[%s1790 + $0x121] sm:$0xff]
      %v2050 = vld [vmem:[%s1790 + $0x129] sm:$0xff]
      %v2051 = vld [vmem:[%s1790 + $0x139] sm:$0xff]
      %v2052 = vld [vmem:[%s1790 + $0x141] sm:$0xff]
      %v2053 = vld [vmem:[%s1790 + $0x151] sm:$0xff]
      %v2054 = vld [vmem:[%s1790 + $0x159] sm:$0xff]
      %v2055 = vld [vmem:[%s1790 + $0x169] sm:$0xff]
      %v2056 = vld [vmem:[%s1790 + $0x171] sm:$0xff]
      %v2057 = vpack.c.bf16 %v2026, %v2025
      %v2058 = vpack.c.bf16 %v2028, %v2027
      %v2059 = vpack.c.bf16 %v2030, %v2029
      %v2060 = vpack.c.bf16 %v2032, %v2031
      %v2061 = vpack.c.bf16 %v2034, %v2033
      %v2062 = vpack.c.bf16 %v2036, %v2035
      %v2063 = vpack.c.bf16 %v2038, %v2037
      %v2064 = vpack.c.bf16 %v2040, %v2039
      %v2065 = vpack.c.bf16 %v2042, %v2041
      %v2066 = vpack.c.bf16 %v2044, %v2043
      %v2067 = vpack.c.bf16 %v2046, %v2045
      %v2068 = vpack.c.bf16 %v2048, %v2047
      %v2069 = vpack.c.bf16 %v2050, %v2049
      %v2070 = vpack.c.bf16 %v2052, %v2051
      %v2071 = vpack.c.bf16 %v2054, %v2053
      %v2072 = vpack.c.bf16 %v2056, %v2055
      %s2073 = scalar_lea.vmem %s1, 448
      %v2074 = vld [vmem:[%s2073] sm:$0xf]
      %v2075 = vld [vmem:[%s2073 + $0x4] sm:$0xf]
      %v2076 = vld [vmem:[%s2073 + $0x8] sm:$0xf]
      %v2077 = vld [vmem:[%s2073 + $0xc] sm:$0xf]
      %v2078 = vld [vmem:[%s2073 + $0x10] sm:$0xf]
      %v2079 = vld [vmem:[%s2073 + $0x14] sm:$0xf]
      %v2080 = vld [vmem:[%s2073 + $0x18] sm:$0xf]
      %v2081 = vld [vmem:[%s2073 + $0x1c] sm:$0xf]
      %v2082 = vld [vmem:[%s2073 + $0x20] sm:$0xf]
      %v2083 = vld [vmem:[%s2073 + $0x24] sm:$0xf]
      %v2084 = vld [vmem:[%s2073 + $0x28] sm:$0xf]
      %v2085 = vld [vmem:[%s2073 + $0x2c] sm:$0xf]
      %v2086 = vld [vmem:[%s2073 + $0x30] sm:$0xf]
      %v2087 = vld [vmem:[%s2073 + $0x34] sm:$0xf]
      %v2088 = vld [vmem:[%s2073 + $0x38] sm:$0xf]
      %v2089 = vld [vmem:[%s2073 + $0x3c] sm:$0xf]
      %v2106 = vunpack.c.l.b16 %v2074
      %v2107 = vunpack.c.l.b16 %v2075
      %v2108 = vunpack.c.l.b16 %v2076
      %v2109 = vunpack.c.l.b16 %v2077
      %v2110 = vunpack.c.l.b16 %v2078
      %v2111 = vunpack.c.l.b16 %v2079
      %v2112 = vunpack.c.l.b16 %v2080
      %v2113 = vunpack.c.l.b16 %v2081
      %v2114 = vunpack.c.l.b16 %v2082
      %v2115 = vunpack.c.l.b16 %v2083
      %v2116 = vunpack.c.l.b16 %v2084
      %v2117 = vunpack.c.l.b16 %v2085
      %v2118 = vunpack.c.l.b16 %v2086
      %v2119 = vunpack.c.l.b16 %v2087
      %v2120 = vunpack.c.l.b16 %v2088
      %v2121 = vunpack.c.l.b16 %v2089
      %v2122 = vpack.c.b16 %v2107, %v2106
      %v2123 = vpack.c.b16 %v2109, %v2108
      %v2124 = vpack.c.b16 %v2111, %v2110
      %v2125 = vpack.c.b16 %v2113, %v2112
      %v2126 = vpack.c.b16 %v2115, %v2114
      %v2127 = vpack.c.b16 %v2117, %v2116
      %v2128 = vpack.c.b16 %v2119, %v2118
      %v2129 = vpack.c.b16 %v2121, %v2120
      %2138 = vmatpush.bf16.msra.mxu0 %v2129
      %2139 = vmatpush.bf16.msra.mxu0 %v2128
      %2140 = vmatpush.bf16.msra.mxu0 %v2127
      %2141 = vmatpush.bf16.msra.mxu0 %v2126
      %2142 = vmatpush.bf16.msra.mxu0 %v2125
      %2143 = vmatpush.bf16.msra.mxu0 %v2124
      %2144 = vmatpush.bf16.msra.mxu0 %v2123
      %2145 = vmatpush.bf16.msra.mxu0 %v2122
      %2146 = vmatmul.bf16.gmra.mxu0 %v2057
      %v2147 = vpop.f32.mrf.mxu0
      %v2148 = vadd.f32 0.0, %v2147
      %v2149 = vpop.f32.mrf.mxu0
      %v2150 = vadd.f32 0.0, %v2149
      %2151 = vmatmul.bf16.gmra.mxu0 %v2058
      %v2152 = vpop.f32.mrf.mxu0
      %v2153 = vadd.f32 0.0, %v2152
      %v2154 = vpop.f32.mrf.mxu0
      %v2155 = vadd.f32 0.0, %v2154
      %2156 = vmatmul.bf16.gmra.mxu0 %v2059
      %v2157 = vpop.f32.mrf.mxu0
      %v2158 = vadd.f32 0.0, %v2157
      %v2159 = vpop.f32.mrf.mxu0
      %v2160 = vadd.f32 0.0, %v2159
      %2161 = vmatmul.bf16.gmra.mxu0 %v2060
      %v2162 = vpop.f32.mrf.mxu0
      %v2163 = vadd.f32 0.0, %v2162
      %v2164 = vpop.f32.mrf.mxu0
      %v2165 = vadd.f32 0.0, %v2164
      %2166 = vmatmul.bf16.gmra.mxu0 %v2061
      %v2167 = vpop.f32.mrf.mxu0
      %v2168 = vadd.f32 0.0, %v2167
      %v2169 = vpop.f32.mrf.mxu0
      %v2170 = vadd.f32 0.0, %v2169
      %2171 = vmatmul.bf16.gmra.mxu0 %v2062
      %v2172 = vpop.f32.mrf.mxu0
      %v2173 = vadd.f32 0.0, %v2172
      %v2174 = vpop.f32.mrf.mxu0
      %v2175 = vadd.f32 0.0, %v2174
      %2176 = vmatmul.bf16.gmra.mxu0 %v2063
      %v2177 = vpop.f32.mrf.mxu0
      %v2178 = vadd.f32 0.0, %v2177
      %v2179 = vpop.f32.mrf.mxu0
      %v2180 = vadd.f32 0.0, %v2179
      %2181 = vmatmul.bf16.gmra.mxu0 %v2064
      %v2182 = vpop.f32.mrf.mxu0
      %v2183 = vadd.f32 0.0, %v2182
      %v2184 = vpop.f32.mrf.mxu0
      %v2185 = vadd.f32 0.0, %v2184
      %2186 = vmatmul.bf16.gmra.mxu0 %v2065
      %v2187 = vpop.f32.mrf.mxu0
      %v2188 = vadd.f32 0.0, %v2187
      %v2189 = vpop.f32.mrf.mxu0
      %v2190 = vadd.f32 0.0, %v2189
      %2191 = vmatmul.bf16.gmra.mxu0 %v2066
      %v2192 = vpop.f32.mrf.mxu0
      %v2193 = vadd.f32 0.0, %v2192
      %v2194 = vpop.f32.mrf.mxu0
      %v2195 = vadd.f32 0.0, %v2194
      %2196 = vmatmul.bf16.gmra.mxu0 %v2067
      %v2197 = vpop.f32.mrf.mxu0
      %v2198 = vadd.f32 0.0, %v2197
      %v2199 = vpop.f32.mrf.mxu0
      %v2200 = vadd.f32 0.0, %v2199
      %2201 = vmatmul.bf16.gmra.mxu0 %v2068
      %v2202 = vpop.f32.mrf.mxu0
      %v2203 = vadd.f32 0.0, %v2202
      %v2204 = vpop.f32.mrf.mxu0
      %v2205 = vadd.f32 0.0, %v2204
      %2206 = vmatmul.bf16.gmra.mxu0 %v2069
      %v2207 = vpop.f32.mrf.mxu0
      %v2208 = vadd.f32 0.0, %v2207
      %v2209 = vpop.f32.mrf.mxu0
      %v2210 = vadd.f32 0.0, %v2209
      %2211 = vmatmul.bf16.gmra.mxu0 %v2070
      %v2212 = vpop.f32.mrf.mxu0
      %v2213 = vadd.f32 0.0, %v2212
      %v2214 = vpop.f32.mrf.mxu0
      %v2215 = vadd.f32 0.0, %v2214
      %2216 = vmatmul.bf16.gmra.mxu0 %v2071
      %v2217 = vpop.f32.mrf.mxu0
      %v2218 = vadd.f32 0.0, %v2217
      %v2219 = vpop.f32.mrf.mxu0
      %v2220 = vadd.f32 0.0, %v2219
      %2221 = vmatmul.bf16.gmra.mxu0 %v2072
      %v2222 = vpop.f32.mrf.mxu0
      %v2223 = vadd.f32 0.0, %v2222
      %v2224 = vpop.f32.mrf.mxu0
      %v2225 = vadd.f32 0.0, %v2224
      %2226 = vdwg.mxu0
      %v2227 = vadd.f32 %v1993, %v2148
      %v2228 = vadd.f32 %v1994, %v2150
      %v2229 = vadd.f32 %v1995, %v2153
      %v2230 = vadd.f32 %v1996, %v2155
      %v2231 = vadd.f32 %v1997, %v2158
      %v2232 = vadd.f32 %v1998, %v2160
      %v2233 = vadd.f32 %v1999, %v2163
      %v2234 = vadd.f32 %v2000, %v2165
      %v2235 = vadd.f32 %v2001, %v2168
      %v2236 = vadd.f32 %v2002, %v2170
      %v2237 = vadd.f32 %v2003, %v2173
      %v2238 = vadd.f32 %v2004, %v2175
      %v2239 = vadd.f32 %v2005, %v2178
      %v2240 = vadd.f32 %v2006, %v2180
      %v2241 = vadd.f32 %v2007, %v2183
      %v2242 = vadd.f32 %v2008, %v2185
      %v2243 = vadd.f32 %v2009, %v2188
      %v2244 = vadd.f32 %v2010, %v2190
      %v2245 = vadd.f32 %v2011, %v2193
      %v2246 = vadd.f32 %v2012, %v2195
      %v2247 = vadd.f32 %v2013, %v2198
      %v2248 = vadd.f32 %v2014, %v2200
      %v2249 = vadd.f32 %v2015, %v2203
      %v2250 = vadd.f32 %v2016, %v2205
      %v2251 = vadd.f32 %v2017, %v2208
      %v2252 = vadd.f32 %v2018, %v2210
      %v2253 = vadd.f32 %v2019, %v2213
      %v2254 = vadd.f32 %v2020, %v2215
      %v2255 = vadd.f32 %v2021, %v2218
      %v2256 = vadd.f32 %v2022, %v2220
      %v2257 = vadd.f32 %v2023, %v2223
      %v2258 = vadd.f32 %v2024, %v2225
      %v2259 = vld [vmem:[%s1790 + $0x2] sm:$0xff]
      %v2260 = vld [vmem:[%s1790 + $0xa] sm:$0xff]
      %v2261 = vld [vmem:[%s1790 + $0x1a] sm:$0xff]
      %v2262 = vld [vmem:[%s1790 + $0x22] sm:$0xff]
      %v2263 = vld [vmem:[%s1790 + $0x32] sm:$0xff]
      %v2264 = vld [vmem:[%s1790 + $0x3a] sm:$0xff]
      %v2265 = vld [vmem:[%s1790 + $0x4a] sm:$0xff]
      %v2266 = vld [vmem:[%s1790 + $0x52] sm:$0xff]
      %v2267 = vld [vmem:[%s1790 + $0x62] sm:$0xff]
      %v2268 = vld [vmem:[%s1790 + $0x6a] sm:$0xff]
      %v2269 = vld [vmem:[%s1790 + $0x7a] sm:$0xff]
      %v2270 = vld [vmem:[%s1790 + $0x82] sm:$0xff]
      %v2271 = vld [vmem:[%s1790 + $0x92] sm:$0xff]
      %v2272 = vld [vmem:[%s1790 + $0x9a] sm:$0xff]
      %v2273 = vld [vmem:[%s1790 + $0xaa] sm:$0xff]
      %v2274 = vld [vmem:[%s1790 + $0xb2] sm:$0xff]
      %v2275 = vld [vmem:[%s1790 + $0xc2] sm:$0xff]
      %v2276 = vld [vmem:[%s1790 + $0xca] sm:$0xff]
      %v2277 = vld [vmem:[%s1790 + $0xda] sm:$0xff]
      %v2278 = vld [vmem:[%s1790 + $0xe2] sm:$0xff]
      %v2279 = vld [vmem:[%s1790 + $0xf2] sm:$0xff]
      %v2280 = vld [vmem:[%s1790 + $0xfa] sm:$0xff]
      %v2281 = vld [vmem:[%s1790 + $0x10a] sm:$0xff]
      %v2282 = vld [vmem:[%s1790 + $0x112] sm:$0xff]
      %v2283 = vld [vmem:[%s1790 + $0x122] sm:$0xff]
      %v2284 = vld [vmem:[%s1790 + $0x12a] sm:$0xff]
      %v2285 = vld [vmem:[%s1790 + $0x13a] sm:$0xff]
      %v2286 = vld [vmem:[%s1790 + $0x142] sm:$0xff]
      %v2287 = vld [vmem:[%s1790 + $0x152] sm:$0xff]
      %v2288 = vld [vmem:[%s1790 + $0x15a] sm:$0xff]
      %v2289 = vld [vmem:[%s1790 + $0x16a] sm:$0xff]
      %v2290 = vld [vmem:[%s1790 + $0x172] sm:$0xff]
      %v2291 = vpack.c.bf16 %v2260, %v2259
      %v2292 = vpack.c.bf16 %v2262, %v2261
      %v2293 = vpack.c.bf16 %v2264, %v2263
      %v2294 = vpack.c.bf16 %v2266, %v2265
      %v2295 = vpack.c.bf16 %v2268, %v2267
      %v2296 = vpack.c.bf16 %v2270, %v2269
      %v2297 = vpack.c.bf16 %v2272, %v2271
      %v2298 = vpack.c.bf16 %v2274, %v2273
      %v2299 = vpack.c.bf16 %v2276, %v2275
      %v2300 = vpack.c.bf16 %v2278, %v2277
      %v2301 = vpack.c.bf16 %v2280, %v2279
      %v2302 = vpack.c.bf16 %v2282, %v2281
      %v2303 = vpack.c.bf16 %v2284, %v2283
      %v2304 = vpack.c.bf16 %v2286, %v2285
      %v2305 = vpack.c.bf16 %v2288, %v2287
      %v2306 = vpack.c.bf16 %v2290, %v2289
      %s2307 = scalar_lea.vmem %s1, 512
      %v2308 = vld [vmem:[%s2307] sm:$0xf]
      %v2309 = vld [vmem:[%s2307 + $0x4] sm:$0xf]
      %v2310 = vld [vmem:[%s2307 + $0x8] sm:$0xf]
      %v2311 = vld [vmem:[%s2307 + $0xc] sm:$0xf]
      %v2312 = vld [vmem:[%s2307 + $0x10] sm:$0xf]
      %v2313 = vld [vmem:[%s2307 + $0x14] sm:$0xf]
      %v2314 = vld [vmem:[%s2307 + $0x18] sm:$0xf]
      %v2315 = vld [vmem:[%s2307 + $0x1c] sm:$0xf]
      %v2316 = vld [vmem:[%s2307 + $0x20] sm:$0xf]
      %v2317 = vld [vmem:[%s2307 + $0x24] sm:$0xf]
      %v2318 = vld [vmem:[%s2307 + $0x28] sm:$0xf]
      %v2319 = vld [vmem:[%s2307 + $0x2c] sm:$0xf]
      %v2320 = vld [vmem:[%s2307 + $0x30] sm:$0xf]
      %v2321 = vld [vmem:[%s2307 + $0x34] sm:$0xf]
      %v2322 = vld [vmem:[%s2307 + $0x38] sm:$0xf]
      %v2323 = vld [vmem:[%s2307 + $0x3c] sm:$0xf]
      %v2340 = vunpack.c.l.b16 %v2308
      %v2341 = vunpack.c.l.b16 %v2309
      %v2342 = vunpack.c.l.b16 %v2310
      %v2343 = vunpack.c.l.b16 %v2311
      %v2344 = vunpack.c.l.b16 %v2312
      %v2345 = vunpack.c.l.b16 %v2313
      %v2346 = vunpack.c.l.b16 %v2314
      %v2347 = vunpack.c.l.b16 %v2315
      %v2348 = vunpack.c.l.b16 %v2316
      %v2349 = vunpack.c.l.b16 %v2317
      %v2350 = vunpack.c.l.b16 %v2318
      %v2351 = vunpack.c.l.b16 %v2319
      %v2352 = vunpack.c.l.b16 %v2320
      %v2353 = vunpack.c.l.b16 %v2321
      %v2354 = vunpack.c.l.b16 %v2322
      %v2355 = vunpack.c.l.b16 %v2323
      %v2356 = vpack.c.b16 %v2341, %v2340
      %v2357 = vpack.c.b16 %v2343, %v2342
      %v2358 = vpack.c.b16 %v2345, %v2344
      %v2359 = vpack.c.b16 %v2347, %v2346
      %v2360 = vpack.c.b16 %v2349, %v2348
      %v2361 = vpack.c.b16 %v2351, %v2350
      %v2362 = vpack.c.b16 %v2353, %v2352
      %v2363 = vpack.c.b16 %v2355, %v2354
      %2372 = vmatpush.bf16.msra.mxu0 %v2363
      %2373 = vmatpush.bf16.msra.mxu0 %v2362
      %2374 = vmatpush.bf16.msra.mxu0 %v2361
      %2375 = vmatpush.bf16.msra.mxu0 %v2360
      %2376 = vmatpush.bf16.msra.mxu0 %v2359
      %2377 = vmatpush.bf16.msra.mxu0 %v2358
      %2378 = vmatpush.bf16.msra.mxu0 %v2357
      %2379 = vmatpush.bf16.msra.mxu0 %v2356
      %2380 = vmatmul.bf16.gmra.mxu0 %v2291
      %v2381 = vpop.f32.mrf.mxu0
      %v2382 = vadd.f32 0.0, %v2381
      %v2383 = vpop.f32.mrf.mxu0
      %v2384 = vadd.f32 0.0, %v2383
      %2385 = vmatmul.bf16.gmra.mxu0 %v2292
      %v2386 = vpop.f32.mrf.mxu0
      %v2387 = vadd.f32 0.0, %v2386
      %v2388 = vpop.f32.mrf.mxu0
      %v2389 = vadd.f32 0.0, %v2388
      %2390 = vmatmul.bf16.gmra.mxu0 %v2293
      %v2391 = vpop.f32.mrf.mxu0
      %v2392 = vadd.f32 0.0, %v2391
      %v2393 = vpop.f32.mrf.mxu0
      %v2394 = vadd.f32 0.0, %v2393
      %2395 = vmatmul.bf16.gmra.mxu0 %v2294
      %v2396 = vpop.f32.mrf.mxu0
      %v2397 = vadd.f32 0.0, %v2396
      %v2398 = vpop.f32.mrf.mxu0
      %v2399 = vadd.f32 0.0, %v2398
      %2400 = vmatmul.bf16.gmra.mxu0 %v2295
      %v2401 = vpop.f32.mrf.mxu0
      %v2402 = vadd.f32 0.0, %v2401
      %v2403 = vpop.f32.mrf.mxu0
      %v2404 = vadd.f32 0.0, %v2403
      %2405 = vmatmul.bf16.gmra.mxu0 %v2296
      %v2406 = vpop.f32.mrf.mxu0
      %v2407 = vadd.f32 0.0, %v2406
      %v2408 = vpop.f32.mrf.mxu0
      %v2409 = vadd.f32 0.0, %v2408
      %2410 = vmatmul.bf16.gmra.mxu0 %v2297
      %v2411 = vpop.f32.mrf.mxu0
      %v2412 = vadd.f32 0.0, %v2411
      %v2413 = vpop.f32.mrf.mxu0
      %v2414 = vadd.f32 0.0, %v2413
      %2415 = vmatmul.bf16.gmra.mxu0 %v2298
      %v2416 = vpop.f32.mrf.mxu0
      %v2417 = vadd.f32 0.0, %v2416
      %v2418 = vpop.f32.mrf.mxu0
      %v2419 = vadd.f32 0.0, %v2418
      %2420 = vmatmul.bf16.gmra.mxu0 %v2299
      %v2421 = vpop.f32.mrf.mxu0
      %v2422 = vadd.f32 0.0, %v2421
      %v2423 = vpop.f32.mrf.mxu0
      %v2424 = vadd.f32 0.0, %v2423
      %2425 = vmatmul.bf16.gmra.mxu0 %v2300
      %v2426 = vpop.f32.mrf.mxu0
      %v2427 = vadd.f32 0.0, %v2426
      %v2428 = vpop.f32.mrf.mxu0
      %v2429 = vadd.f32 0.0, %v2428
      %2430 = vmatmul.bf16.gmra.mxu0 %v2301
      %v2431 = vpop.f32.mrf.mxu0
      %v2432 = vadd.f32 0.0, %v2431
      %v2433 = vpop.f32.mrf.mxu0
      %v2434 = vadd.f32 0.0, %v2433
      %2435 = vmatmul.bf16.gmra.mxu0 %v2302
      %v2436 = vpop.f32.mrf.mxu0
      %v2437 = vadd.f32 0.0, %v2436
      %v2438 = vpop.f32.mrf.mxu0
      %v2439 = vadd.f32 0.0, %v2438
      %2440 = vmatmul.bf16.gmra.mxu0 %v2303
      %v2441 = vpop.f32.mrf.mxu0
      %v2442 = vadd.f32 0.0, %v2441
      %v2443 = vpop.f32.mrf.mxu0
      %v2444 = vadd.f32 0.0, %v2443
      %2445 = vmatmul.bf16.gmra.mxu0 %v2304
      %v2446 = vpop.f32.mrf.mxu0
      %v2447 = vadd.f32 0.0, %v2446
      %v2448 = vpop.f32.mrf.mxu0
      %v2449 = vadd.f32 0.0, %v2448
      %2450 = vmatmul.bf16.gmra.mxu0 %v2305
      %v2451 = vpop.f32.mrf.mxu0
      %v2452 = vadd.f32 0.0, %v2451
      %v2453 = vpop.f32.mrf.mxu0
      %v2454 = vadd.f32 0.0, %v2453
      %2455 = vmatmul.bf16.gmra.mxu0 %v2306
      %v2456 = vpop.f32.mrf.mxu0
      %v2457 = vadd.f32 0.0, %v2456
      %v2458 = vpop.f32.mrf.mxu0
      %v2459 = vadd.f32 0.0, %v2458
      %2460 = vdwg.mxu0
      %v2461 = vadd.f32 %v2227, %v2382
      %v2462 = vadd.f32 %v2228, %v2384
      %v2463 = vadd.f32 %v2229, %v2387
      %v2464 = vadd.f32 %v2230, %v2389
      %v2465 = vadd.f32 %v2231, %v2392
      %v2466 = vadd.f32 %v2232, %v2394
      %v2467 = vadd.f32 %v2233, %v2397
      %v2468 = vadd.f32 %v2234, %v2399
      %v2469 = vadd.f32 %v2235, %v2402
      %v2470 = vadd.f32 %v2236, %v2404
      %v2471 = vadd.f32 %v2237, %v2407
      %v2472 = vadd.f32 %v2238, %v2409
      %v2473 = vadd.f32 %v2239, %v2412
      %v2474 = vadd.f32 %v2240, %v2414
      %v2475 = vadd.f32 %v2241, %v2417
      %v2476 = vadd.f32 %v2242, %v2419
      %v2477 = vadd.f32 %v2243, %v2422
      %v2478 = vadd.f32 %v2244, %v2424
      %v2479 = vadd.f32 %v2245, %v2427
      %v2480 = vadd.f32 %v2246, %v2429
      %v2481 = vadd.f32 %v2247, %v2432
      %v2482 = vadd.f32 %v2248, %v2434
      %v2483 = vadd.f32 %v2249, %v2437
      %v2484 = vadd.f32 %v2250, %v2439
      %v2485 = vadd.f32 %v2251, %v2442
      %v2486 = vadd.f32 %v2252, %v2444
      %v2487 = vadd.f32 %v2253, %v2447
      %v2488 = vadd.f32 %v2254, %v2449
      %v2489 = vadd.f32 %v2255, %v2452
      %v2490 = vadd.f32 %v2256, %v2454
      %v2491 = vadd.f32 %v2257, %v2457
      %v2492 = vadd.f32 %v2258, %v2459
      %2493 = vst [vmem:[%s222] sm:$0xff] %v2461
      %2494 = vst [vmem:[%s222 + $0x8] sm:$0xff] %v2462
      %2495 = vst [vmem:[%s222 + $0x10] sm:$0xff] %v2463
      %2496 = vst [vmem:[%s222 + $0x18] sm:$0xff] %v2464
      %2497 = vst [vmem:[%s222 + $0x20] sm:$0xff] %v2465
      %2498 = vst [vmem:[%s222 + $0x28] sm:$0xff] %v2466
      %2499 = vst [vmem:[%s222 + $0x30] sm:$0xff] %v2467
      %2500 = vst [vmem:[%s222 + $0x38] sm:$0xff] %v2468
      %2501 = vst [vmem:[%s222 + $0x40] sm:$0xff] %v2469
      %2502 = vst [vmem:[%s222 + $0x48] sm:$0xff] %v2470
      %2503 = vst [vmem:[%s222 + $0x50] sm:$0xff] %v2471
      %2504 = vst [vmem:[%s222 + $0x58] sm:$0xff] %v2472
      %2505 = vst [vmem:[%s222 + $0x60] sm:$0xff] %v2473
      %2506 = vst [vmem:[%s222 + $0x68] sm:$0xff] %v2474
      %2507 = vst [vmem:[%s222 + $0x70] sm:$0xff] %v2475
      %2508 = vst [vmem:[%s222 + $0x78] sm:$0xff] %v2476
      %2509 = vst [vmem:[%s222 + $0x80] sm:$0xff] %v2477
      %2510 = vst [vmem:[%s222 + $0x88] sm:$0xff] %v2478
      %2511 = vst [vmem:[%s222 + $0x90] sm:$0xff] %v2479
      %2512 = vst [vmem:[%s222 + $0x98] sm:$0xff] %v2480
      %2513 = vst [vmem:[%s222 + $0xa0] sm:$0xff] %v2481
      %2514 = vst [vmem:[%s222 + $0xa8] sm:$0xff] %v2482
      %2515 = vst [vmem:[%s222 + $0xb0] sm:$0xff] %v2483
      %2516 = vst [vmem:[%s222 + $0xb8] sm:$0xff] %v2484
      %2517 = vst [vmem:[%s222 + $0xc0] sm:$0xff] %v2485
      %2518 = vst [vmem:[%s222 + $0xc8] sm:$0xff] %v2486
      %2519 = vst [vmem:[%s222 + $0xd0] sm:$0xff] %v2487
      %2520 = vst [vmem:[%s222 + $0xd8] sm:$0xff] %v2488
      %2521 = vst [vmem:[%s222 + $0xe0] sm:$0xff] %v2489
      %2522 = vst [vmem:[%s222 + $0xe8] sm:$0xff] %v2490
      %2523 = vst [vmem:[%s222 + $0xf0] sm:$0xff] %v2491
      %2524 = vst [vmem:[%s222 + $0xf8] sm:$0xff] %v2492
      %v2525 = vld [vmem:[%s5] sm:$0x1]
      %v2526 = vadd.f32 %v2461, %v2462
      %v2527 = vadd.f32 %v2526, %v2463
      %v2528 = vadd.f32 %v2527, %v2464
      %v2529 = vadd.f32 %v2528, %v2465
      %v2530 = vadd.f32 %v2529, %v2466
      %v2531 = vadd.f32 %v2530, %v2467
      %v2532 = vadd.f32 %v2531, %v2468
      %v2533 = vadd.f32 %v2532, %v2469
      %v2534 = vadd.f32 %v2533, %v2470
      %v2535 = vadd.f32 %v2534, %v2471
      %v2536 = vadd.f32 %v2535, %v2472
      %v2537 = vadd.f32 %v2536, %v2473
      %v2538 = vadd.f32 %v2537, %v2474
      %v2539 = vadd.f32 %v2538, %v2475
      %v2540 = vadd.f32 %v2539, %v2476
      %v2541 = vadd.f32 %v2540, %v2477
      %v2542 = vadd.f32 %v2541, %v2478
      %v2543 = vadd.f32 %v2542, %v2479
      %v2544 = vadd.f32 %v2543, %v2480
      %v2545 = vadd.f32 %v2544, %v2481
      %v2546 = vadd.f32 %v2545, %v2482
      %v2547 = vadd.f32 %v2546, %v2483
      %v2548 = vadd.f32 %v2547, %v2484
      %v2549 = vadd.f32 %v2548, %v2485
      %v2550 = vadd.f32 %v2549, %v2486
      %v2551 = vadd.f32 %v2550, %v2487
      %v2552 = vadd.f32 %v2551, %v2488
      %v2553 = vadd.f32 %v2552, %v2489
      %v2554 = vadd.f32 %v2553, %v2490
      %v2555 = vadd.f32 %v2554, %v2491
      %v2556 = vadd.f32 %v2555, %v2492
      %v2557 = vrot.slane %v2556, 4
      %v2558 = vadd.f32 %v2556, %v2557
      %v2559 = vrot.slane %v2558, 2
      %v2560 = vadd.f32 %v2558, %v2559
      %v2561 = vrot.slane %v2560, 1
      %v2562 = vadd.f32 %v2560, %v2561
      %v2563 = vadd.f32 %v2525, %v2562
      %2564 = vst [vmem:[%s5] sm:$0x1] %v2563
      %v2565 = vld [vmem:[%s5 + $0x1] sm:$0x1]
      %v2566 = vmul.f32 %v2461, %v2461
      %v2567 = vmul.f32 %v2462, %v2462
      %v2568 = vmul.f32 %v2463, %v2463
      %v2569 = vmul.f32 %v2464, %v2464
      %v2570 = vmul.f32 %v2465, %v2465
      %v2571 = vmul.f32 %v2466, %v2466
      %v2572 = vmul.f32 %v2467, %v2467
      %v2573 = vmul.f32 %v2468, %v2468
      %v2574 = vmul.f32 %v2469, %v2469
      %v2575 = vmul.f32 %v2470, %v2470
      %v2576 = vmul.f32 %v2471, %v2471
      %v2577 = vmul.f32 %v2472, %v2472
      %v2578 = vmul.f32 %v2473, %v2473
      %v2579 = vmul.f32 %v2474, %v2474
      %v2580 = vmul.f32 %v2475, %v2475
      %v2581 = vmul.f32 %v2476, %v2476
      %v2582 = vmul.f32 %v2477, %v2477
      %v2583 = vmul.f32 %v2478, %v2478
      %v2584 = vmul.f32 %v2479, %v2479
      %v2585 = vmul.f32 %v2480, %v2480
      %v2586 = vmul.f32 %v2481, %v2481
      %v2587 = vmul.f32 %v2482, %v2482
      %v2588 = vmul.f32 %v2483, %v2483
      %v2589 = vmul.f32 %v2484, %v2484
      %v2590 = vmul.f32 %v2485, %v2485
      %v2591 = vmul.f32 %v2486, %v2486
      %v2592 = vmul.f32 %v2487, %v2487
      %v2593 = vmul.f32 %v2488, %v2488
      %v2594 = vmul.f32 %v2489, %v2489
      %v2595 = vmul.f32 %v2490, %v2490
      %v2596 = vmul.f32 %v2491, %v2491
      %v2597 = vmul.f32 %v2492, %v2492
      %v2598 = vadd.f32 %v2566, %v2567
      %v2599 = vadd.f32 %v2598, %v2568
      %v2600 = vadd.f32 %v2599, %v2569
      %v2601 = vadd.f32 %v2600, %v2570
      %v2602 = vadd.f32 %v2601, %v2571
      %v2603 = vadd.f32 %v2602, %v2572
      %v2604 = vadd.f32 %v2603, %v2573
      %v2605 = vadd.f32 %v2604, %v2574
      %v2606 = vadd.f32 %v2605, %v2575
      %v2607 = vadd.f32 %v2606, %v2576
      %v2608 = vadd.f32 %v2607, %v2577
      %v2609 = vadd.f32 %v2608, %v2578
      %v2610 = vadd.f32 %v2609, %v2579
      %v2611 = vadd.f32 %v2610, %v2580
      %v2612 = vadd.f32 %v2611, %v2581
      %v2613 = vadd.f32 %v2612, %v2582
      %v2614 = vadd.f32 %v2613, %v2583
      %v2615 = vadd.f32 %v2614, %v2584
      %v2616 = vadd.f32 %v2615, %v2585
      %v2617 = vadd.f32 %v2616, %v2586
      %v2618 = vadd.f32 %v2617, %v2587
      %v2619 = vadd.f32 %v2618, %v2588
      %v2620 = vadd.f32 %v2619, %v2589
      %v2621 = vadd.f32 %v2620, %v2590
      %v2622 = vadd.f32 %v2621, %v2591
      %v2623 = vadd.f32 %v2622, %v2592
      %v2624 = vadd.f32 %v2623, %v2593
      %v2625 = vadd.f32 %v2624, %v2594
      %v2626 = vadd.f32 %v2625, %v2595
      %v2627 = vadd.f32 %v2626, %v2596
      %v2628 = vadd.f32 %v2627, %v2597
      %v2629 = vrot.slane %v2628, 4
      %v2630 = vadd.f32 %v2628, %v2629
      %v2631 = vrot.slane %v2630, 2
      %v2632 = vadd.f32 %v2630, %v2631
      %v2633 = vrot.slane %v2632, 1
      %v2634 = vadd.f32 %v2632, %v2633
      %v2635 = vadd.f32 %v2565, %v2634
      %2636 = vst [vmem:[%s5 + $0x1] sm:$0x1] %v2635
      %p2637 = scmp.lt.s32.totalorder %s17, 1
      %s2638 = scalar_select %p2637, %s17, 1
      %s2639 = smul.addr %s2638, 32
      %s2640 = smul.addr %s2639, 8
      %s2641 = scalar_lea.vmem %s4, %s2640
      // Predicated region
      $region41: #{vgg_block_forward.4} parent=35 // pred_check
        %p2642 = pneg %p124
      $region42: #{vgg_block_forward.4} parent=35 // pred_check_branch
        %2644 = sbr.rel (%p2642) target = $region44
      $region43: #{vgg_block_forward.4} parent=35 // pred_region
        _
      $region44: #{vgg_block_forward.4} parent=35 // pred_fallthru
        _
      // Predicated region
      $region45: #{vgg_block_forward.4} parent=35 // pred_check
        %p2645 = pneg %p145
      $region46: #{vgg_block_forward.4} parent=35 // pred_check_branch
        %2647 = sbr.rel (%p2645) target = $region48
      $region47: #{vgg_block_forward.4} parent=35 // pred_region
        _
      $region48: #{vgg_block_forward.4} parent=35 // pred_fallthru
        _
      // Predicated region
      $region49: #{vgg_block_forward.4} parent=35 // pred_check
        %p2648 = pneg %p145
      $region50: #{vgg_block_forward.4} parent=35 // pred_check_branch
        %2650 = sbr.rel (%p2648) target = $region52
      $region51: #{vgg_block_forward.4} parent=35 // pred_region
        _
      $region52: #{vgg_block_forward.4} parent=35 // pred_fallthru
        _
    $region36: #{vgg_block_forward.4} parent=5 // pred_fallthru
      _
    %p2651 = scmp.le.s32.totalorder 2, %s12
    // Predicated region
    $region53: #{vgg_block_forward.4} parent=5 // pred_check
      %p2652 = pneg %p2651
    $region54: #{vgg_block_forward.4} parent=5 // pred_check_branch
      %2654 = sbr.rel (%p2652) target = $region56
    $region55: #{vgg_block_forward.4} parent=5 // pred_region
      %s2655 = ssub.s32 %s12, 2
      // Predicated region
      $region57: #{vgg_block_forward.4} parent=55 // pred_check
        %p2656 = pneg %p130
      $region58: #{vgg_block_forward.4} parent=55 // pred_check_branch
        %2658 = sbr.rel (%p2656) target = $region60
      $region59: #{vgg_block_forward.4} parent=55 // pred_region
        %p2659 = scmp.lt.s32.totalorder %s18, 1
        %s2660 = scalar_select %p2659, %s18, 1
        %s2661 = smul.addr %s2660, 32
        %s2662 = smul.addr %s2661, 8
        %s2663 = scalar_lea.vmem %s4, %s2662
      $region60: #{vgg_block_forward.4} parent=55 // pred_fallthru
        _
    $region56: #{vgg_block_forward.4} parent=5 // pred_fallthru
      _
  $region6: #{vgg_block_forward.4} parent=0 // loop_footer
    %s16 = sadd.s32 1, %s12
  $region7: #{vgg_block_forward.4} parent=0 // loop_footer_branch
    %11 = sbr.rel target = $region3
  $region8: #{vgg_block_forward.4} parent=0 // loop_exit
    _

</llo_original>
